<compile_context>
chip_gen: v5e
topology: v5e:2x2
jax: 0.10.0
libtpu: 0.0.40
codegen_flags: <defaults>
</compile_context>

<pallas_src>
import functools

import jax
import jax.numpy as jnp
from jax import lax
from jax.experimental import pallas as pl
from jax.experimental.pallas import tpu as pltpu


# ----------------------------------------------------------------------------
# Fused Pallas kernel (one grid step == one batch element)
# ----------------------------------------------------------------------------
def _bottleneck_kernel(W, PAD, x_ref, w1_ref, w2_ref, w3_ref,
                       b1_ref, b2_ref, b3_ref, o_ref, slab_ref):
    HW = x_ref.shape[1]                      # x block: (1, HW, Cp) bf16
    Wp = slab_ref.shape[1]

    # Zero only the halo rows (conv "SAME" padding).  Cheap (2*PAD rows) and
    # done every step so correctness does not depend on scratch persistence /
    # which TensorCore executes which grid index.
    zeros_halo = jnp.zeros((PAD, Wp), slab_ref.dtype)
    slab_ref[pl.ds(0, PAD), :] = zeros_halo
    slab_ref[pl.ds(PAD + HW, PAD), :] = zeros_halo

    # ---- conv1 (1x1) + bn1 + relu -------------------------------------------
    x2d = x_ref[0]                                                   # (HW, Cp)
    y1 = jnp.dot(x2d, w1_ref[...], preferred_element_type=jnp.float32)
    y1 = jnp.maximum(y1 + b1_ref[...], 0.0)
    slab_ref[pl.ds(PAD, HW), :] = y1.astype(slab_ref.dtype)

    # Column masks cancel the left/right wrap-around of the flat row shifts.
    col = lax.broadcasted_iota(jnp.int32, (HW, 1), 0) % W
    mask_l = (col > 0).astype(jnp.float32)       # kills dw = -1 taps at j == 0
    mask_r = (col < W - 1).astype(jnp.float32)   # kills dw = +1 taps at j == W-1

    # ---- conv2 (3x3, stride 1, pad 1) + bn2 + relu ---------------------------
    def tap(dh, dw):
        # Each tap is a contiguous row-shifted slice of the haloed flat slab.
        patch = slab_ref[pl.ds(PAD + dh * W + dw, HW), :]
        return jnp.dot(patch, w2_ref[(dh + 1) * 3 + (dw + 1)],
                       preferred_element_type=jnp.float32)

    # Value-chain accumulation (no VMEM RMW accumulator); taps grouped by dw so
    # each wrap-around mask multiplies exactly once.
    acc_c = tap(-1, 0) + tap(0, 0) + tap(1, 0)
    acc_l = tap(-1, -1) + tap(0, -1) + tap(1, -1)
    acc_r = tap(-1, 1) + tap(0, 1) + tap(1, 1)
    acc = acc_c + acc_l * mask_l + acc_r * mask_r
    y2 = jnp.maximum(acc + b2_ref[...], 0.0)

    # ---- conv3 (1x1) + bn3 + residual add + relu -----------------------------
    y3 = jnp.dot(y2.astype(jnp.bfloat16), w3_ref[...],
                 preferred_element_type=jnp.float32)
    y3 = y3 + b3_ref[...] + x2d.astype(jnp.float32)
    o_ref[0] = jnp.maximum(y3, 0.0).astype(o_ref.dtype)


# ----------------------------------------------------------------------------
# Wrapper helpers
# ----------------------------------------------------------------------------
def _round_up(x, m):
    return (x + m - 1) // m * m


def _fold_bn(gamma, beta, mean, var, eps=1e-5):
    scale = gamma * lax.rsqrt(var + eps)
    bias = beta - mean * scale
    return scale, bias


def _pad_to(a, shape):
    return jnp.pad(a, [(0, s - d) for d, s in zip(a.shape, shape)])


def _fused_bottleneck(xp, w1p, w2p, w3p, b1p, b2p, b3p, *, H, W):
    """xp: (N, H*W, Cp) lane-padded flat-NHWC bf16 -> (N, H*W, Cp) bf16."""
    N, HW, Cp = xp.shape
    Wp = w1p.shape[1]
    PAD = _round_up(W + 1, 16)            # zero halo rows, 16-aligned (bf16 tiles)

    # VMEM budget: in/out double-buffers + weights + slab + f32 temporaries.
    est = (4 * HW * Cp * 2
           + 2 * (Cp * Wp + 9 * Wp * Wp + Wp * Cp) * 2
           + (2 * PAD + HW) * Wp * 2
           + 6 * HW * Wp * 4)
    vmem_limit = int(min(max(32 * 1024 * 1024, 2 * est), 100 * 1024 * 1024))

    grid_spec = pltpu.PrefetchScalarGridSpec(
        num_scalar_prefetch=0,
        grid=(N,),
        in_specs=[
            pl.BlockSpec((1, HW, Cp), lambda n: (n, 0, 0)),
            # Grid-invariant weights / biases (constant index_map).
            pl.BlockSpec((Cp, Wp), lambda n: (0, 0)),
            pl.BlockSpec((9, Wp, Wp), lambda n: (0, 0, 0)),
            pl.BlockSpec((Wp, Cp), lambda n: (0, 0)),
            pl.BlockSpec((1, Wp), lambda n: (0, 0)),
            pl.BlockSpec((1, Wp), lambda n: (0, 0)),
            pl.BlockSpec((1, Cp), lambda n: (0, 0)),
        ],
        out_specs=pl.BlockSpec((1, HW, Cp), lambda n: (n, 0, 0)),
        scratch_shapes=[
            pltpu.VMEM((2 * PAD + HW, Wp), jnp.bfloat16),   # haloed conv1 slab
        ],
    )
    return pl.pallas_call(
        functools.partial(_bottleneck_kernel, W, PAD),
        grid_spec=grid_spec,
        out_shape=jax.ShapeDtypeStruct((N, HW, Cp), jnp.bfloat16),
        compiler_params=pltpu.CompilerParams(
            dimension_semantics=("parallel",),
            vmem_limit_bytes=vmem_limit),
    )(xp, w1p, w2p, w3p, b1p, b2p, b3p)


@jax.jit
def bottleneck_forward(x_nchw, params):
    N, Cin, H, W = x_nchw.shape
    w1, w2, w3 = params["w1"], params["w2"], params["w3"]
    width = w1.shape[1]
    Cout = w3.shape[1]
    assert Cin == Cout, "identity residual requires in_channel == out_channel*4"

    s1, b1 = _fold_bn(*params["bn1"])
    s2, b2 = _fold_bn(*params["bn2"])
    s3, b3 = _fold_bn(*params["bn3"])

    LANE = 128
    Cp = _round_up(Cin, LANE)           # lane-dense in/out channels (Cin == Cout)
    Wp = _round_up(width, LANE)         # lane-dense bottleneck width

    # Fold BN scale into weights, zero-pad channels to lane width, cast bf16.
    w1p = _pad_to(w1 * s1[None, :], (Cp, Wp)).astype(jnp.bfloat16)
    w2p = _pad_to(w2 * s2[None, None, None, :], (3, 3, Wp, Wp))
    w2p = w2p.reshape(9, Wp, Wp).astype(jnp.bfloat16)
    w3p = _pad_to(w3 * s3[None, :], (Wp, Cp)).astype(jnp.bfloat16)
    b1p = _pad_to(b1, (Wp,))[None, :].astype(jnp.float32)
    b2p = _pad_to(b2, (Wp,))[None, :].astype(jnp.float32)
    b3p = _pad_to(b3, (Cp,))[None, :].astype(jnp.float32)

    # Network-boundary layout conversion: NCHW f32 -> lane-padded flat-NHWC bf16.
    # TODO(synk): in a full network keep activations in this (N, H*W, Cp) bf16
    #             layout between bottlenecks so this HBM pass only happens at
    #             the network boundaries.
    x = jnp.transpose(x_nchw, (0, 2, 3, 1)).reshape(N, H * W, Cin)
    xp = _pad_to(x, (N, H * W, Cp)).astype(jnp.bfloat16)

    out = _fused_bottleneck(xp, w1p, w2p, w3p, b1p, b2p, b3p, H=H, W=W)
    out = out[:, :, :Cout].reshape(N, H, W, Cout)          # drop lane padding
    return jnp.transpose(out, (0, 3, 1, 2)).astype(jnp.float32)   # back to NCHW


# ----------------------------------------------------------------------------
# Pure-JAX reference with matching bf16 matmul numerics (correctness check)
# ----------------------------------------------------------------------------
def reference_forward(x_nchw, params):
    x = jnp.transpose(x_nchw, (0, 2, 3, 1))
    N, H, W, Cin = x.shape
    width = params["w1"].shape[1]
    Cout = params["w3"].shape[1]
    s1, b1 = _fold_bn(*params["bn1"])
    s2, b2 = _fold_bn(*params["bn2"])
    s3, b3 = _fold_bn(*params["bn3"])

    xb = x.astype(jnp.bfloat16)
    w1b = (params["w1"] * s1[None, :]).astype(jnp.bfloat16)
    w2b = (params["w2"] * s2[None, None, None, :]).astype(jnp.bfloat16)
    w3b = (params["w3"] * s3[None, :]).astype(jnp.bfloat16)

    y1 = jnp.dot(xb.reshape(-1, Cin), w1b, preferred_element_type=jnp.float32)
    y1 = jnp.maximum(y1 + b1[None, :], 0.0)
    y1 = y1.reshape(N, H, W, width).astype(jnp.bfloat16)

    y2 = lax.conv_general_dilated(
        y1, w2b, (1, 1), "SAME",
        dimension_numbers=("NHWC", "HWIO", "NHWC"),
        preferred_element_type=jnp.float32)
    y2 = jnp.maximum(y2 + b2[None, None, None, :], 0.0)

    y3 = jnp.dot(y2.astype(jnp.bfloat16).reshape(-1, width), w3b,
                 preferred_element_type=jnp.float32)
    y3 = y3.reshape(N, H, W, Cout) + b3[None, None, None, :]
    out = jnp.maximum(y3 + xb.astype(jnp.float32), 0.0)
    # Kernel writes bf16 to HBM; round the reference the same way.
    out = out.astype(jnp.bfloat16).astype(jnp.float32)
    return jnp.transpose(out, (0, 3, 1, 2))


# ----------------------------------------------------------------------------
# Main
# ----------------------------------------------------------------------------
if __name__ == "__main__":
    # Small but valid config: stride=1, groups=1, downsample=None requires
    # in_channel == out_channel * expansion.
    N, in_channel, H, W = 2, 64, 16, 16
    out_channel = 16
    groups, width_per_group = 1, 64
    width = int(out_channel * (width_per_group / 64.0)) * groups   # 16
    expansion = 4
    Cout = out_channel * expansion                                  # 64

    key = jax.random.PRNGKey(0)
    k0, k1, k2, k3, k4, k5, k6, k7 = jax.random.split(key, 8)

    x = jax.random.normal(k0, (N, in_channel, H, W), jnp.float32)

    # PyTorch conv weight shapes (Co, Ci, kh, kw) -> kernel-friendly layouts.
    w1_t = 0.1 * jax.random.normal(k1, (width, in_channel, 1, 1), jnp.float32)
    w2_t = 0.1 * jax.random.normal(k2, (width, width, 3, 3), jnp.float32)
    w3_t = 0.1 * jax.random.normal(k3, (Cout, width, 1, 1), jnp.float32)

    params = {
        "w1": jnp.transpose(w1_t[:, :, 0, 0], (1, 0)),    # (Cin, width)
        "w2": jnp.transpose(w2_t, (2, 3, 1, 0)),          # (3,3,Ci,Co) HWIO
        "w3": jnp.transpose(w3_t[:, :, 0, 0], (1, 0)),    # (width, Cout)
        # BN params: (gamma, beta, running_mean, running_var)
        "bn1": (jnp.ones((width,)) + 0.1 * jax.random.normal(k4, (width,)),
                0.1 * jax.random.normal(k5, (width,)),
                jnp.zeros((width,)), jnp.ones((width,))),
        "bn2": (jnp.ones((width,)), jnp.zeros((width,)),
                0.05 * jax.random.normal(k6, (width,)),
                jnp.ones((width,)) + 0.1 * jnp.abs(jax.random.normal(k7, (width,)))),
        "bn3": (jnp.ones((Cout,)), jnp.zeros((Cout,)),
                jnp.zeros((Cout,)), jnp.ones((Cout,))),
    }

    out = jax.block_until_ready(bottleneck_forward(x, params))
    ref = reference_forward(x, params)

    assert out.shape == (N, Cout, H, W), out.shape
    max_err = float(jnp.max(jnp.abs(out - ref)))
    assert jnp.allclose(out, ref, rtol=1e-2, atol=1e-2), max_err
    print("KERNEL_OK")
</pallas_src>

<mosaic_0001>
module attributes {stable_mosaic.version = 11 : i64} {
  func.func @_bottleneck_kernel(%arg0: i32, %arg1: memref<1x256x128xbf16, #tpu.memory_space<vmem>>, %arg2: memref<128x128xbf16, #tpu.memory_space<vmem>>, %arg3: memref<9x128x128xbf16, #tpu.memory_space<vmem>>, %arg4: memref<128x128xbf16, #tpu.memory_space<vmem>>, %arg5: memref<1x128xf32, #tpu.memory_space<vmem>>, %arg6: memref<1x128xf32, #tpu.memory_space<vmem>>, %arg7: memref<1x128xf32, #tpu.memory_space<vmem>>, %arg8: memref<1x256x128xbf16, #tpu.memory_space<vmem>>, %arg9: memref<320x128xbf16, #tpu.memory_space<vmem>>) attributes {dimension_semantics = [#tpu.dimension_semantics<parallel>], iteration_bounds = array<i64: 2>, scalar_prefetch = 0 : i64, scratch_operands = 1 : i64, tpu.core_type = #tpu.core_type<tc>, window_params = [{transform_indices = @transform_0, window_bounds = array<i64: 1, 256, 128>}, {pipeline_mode = #tpu.pipeline_mode<synchronous>, transform_indices = @transform_1, window_bounds = array<i64: 128, 128>}, {pipeline_mode = #tpu.pipeline_mode<synchronous>, transform_indices = @transform_2, window_bounds = array<i64: 9, 128, 128>}, {pipeline_mode = #tpu.pipeline_mode<synchronous>, transform_indices = @transform_3, window_bounds = array<i64: 128, 128>}, {pipeline_mode = #tpu.pipeline_mode<synchronous>, transform_indices = @transform_4, window_bounds = array<i64: 1, 128>}, {pipeline_mode = #tpu.pipeline_mode<synchronous>, transform_indices = @transform_5, window_bounds = array<i64: 1, 128>}, {pipeline_mode = #tpu.pipeline_mode<synchronous>, transform_indices = @transform_6, window_bounds = array<i64: 1, 128>}, {transform_indices = @transform_7, window_bounds = array<i64: 1, 256, 128>}]} {
    %cst = arith.constant 0.000000e+00 : bf16
    %0 = vector.broadcast %cst : bf16 to vector<32x128xbf16>
    %c0 = arith.constant 0 : index
    %c0_0 = arith.constant 0 : index
    %1 = vector.load %arg9[%c0, %c0_0] : memref<320x128xbf16, #tpu.memory_space<vmem>>, vector<32x128xbf16>
    tpu.vector_store %arg9[%c0, %c0_0], %0 {strides = array<i32>} : memref<320x128xbf16, #tpu.memory_space<vmem>>, vector<32x128xbf16>,
    %c288 = arith.constant 288 : index
    %c0_1 = arith.constant 0 : index
    %2 = vector.load %arg9[%c288, %c0_1] : memref<320x128xbf16, #tpu.memory_space<vmem>>, vector<32x128xbf16>
    tpu.vector_store %arg9[%c288, %c0_1], %0 {strides = array<i32>} : memref<320x128xbf16, #tpu.memory_space<vmem>>, vector<32x128xbf16>,
    %c0_2 = arith.constant 0 : index
    %c0_3 = arith.constant 0 : index
    %c0_4 = arith.constant 0 : index
    %3 = vector.load %arg1[%c0_2, %c0_3, %c0_4] : memref<1x256x128xbf16, #tpu.memory_space<vmem>>, vector<1x256x128xbf16>
    %4 = vector.shape_cast %3 : vector<1x256x128xbf16> to vector<256x128xbf16>
    %c0_5 = arith.constant 0 : index
    %c0_6 = arith.constant 0 : index
    %5 = vector.load %arg2[%c0_5, %c0_6] : memref<128x128xbf16, #tpu.memory_space<vmem>>, vector<128x128xbf16>
    %cst_7 = arith.constant dense<0.000000e+00> : vector<256x128xf32>
    %6 = tpu.matmul %4, %5, %cst_7 {dimension_numbers = #tpu.dot_dimension_numbers<[1], [0], [0], [1], [0, 0, 1, 1], [], []>} : vector<256x128xbf16>, vector<128x128xbf16>, vector<256x128xf32> -> vector<256x128xf32>
    %c0_8 = arith.constant 0 : index
    %c0_9 = arith.constant 0 : index
    %7 = vector.load %arg5[%c0_8, %c0_9] : memref<1x128xf32, #tpu.memory_space<vmem>>, vector<1x128xf32>
    %8 = vector.broadcast %7 : vector<1x128xf32> to vector<256x128xf32>
    %9 = arith.addf %6, %8 : vector<256x128xf32>
    %cst_10 = arith.constant 0.000000e+00 : f32
    %10 = vector.broadcast %cst_10 : f32 to vector<256x128xf32>
    %11 = arith.maximumf %9, %10 : vector<256x128xf32>
    %12 = arith.truncf %11 : vector<256x128xf32> to vector<256x128xbf16>
    %c32 = arith.constant 32 : index
    %c0_11 = arith.constant 0 : index
    %13 = vector.load %arg9[%c32, %c0_11] : memref<320x128xbf16, #tpu.memory_space<vmem>>, vector<256x128xbf16>
    tpu.vector_store %arg9[%c32, %c0_11], %12 {strides = array<i32>} : memref<320x128xbf16, #tpu.memory_space<vmem>>, vector<256x128xbf16>,
    %14 = tpu.iota {dimensions = array<i32: 0>} : vector<256x1xi32>
    %c16_i32 = arith.constant 16 : i32
    %c0_i32 = arith.constant 0 : i32
    %15 = arith.cmpi eq, %c16_i32, %c0_i32 : i32
    %c1_i32 = arith.constant 1 : i32
    %16 = arith.select %15, %c1_i32, %c16_i32 : i32
    %17 = vector.broadcast %16 : i32 to vector<256x1xi32>
    %18 = arith.remsi %14, %17 : vector<256x1xi32>
    %c0_i32_12 = arith.constant 0 : i32
    %19 = vector.broadcast %c0_i32_12 : i32 to vector<256x1xi32>
    %20 = arith.cmpi ne, %18, %19 : vector<256x1xi32>
    %c0_i32_13 = arith.constant 0 : i32
    %21 = vector.broadcast %c0_i32_13 : i32 to vector<256x1xi32>
    %22 = arith.cmpi slt, %18, %21 : vector<256x1xi32>
    %c0_i32_14 = arith.constant 0 : i32
    %23 = arith.cmpi slt, %16, %c0_i32_14 : i32
    %24 = vector.broadcast %23 : i1 to vector<256x1xi1>
    %25 = vector.broadcast %24 : vector<256x1xi1> to vector<256x1xi1>
    %26 = arith.xori %22, %25 : vector<256x1xi1>
    %27 = arith.andi %26, %20 : vector<256x1xi1>
    %28 = vector.broadcast %16 : i32 to vector<256x1xi32>
    %29 = arith.addi %18, %28 : vector<256x1xi32>
    %30 = arith.select %27, %29, %18 : vector<256x1xi1>, vector<256x1xi32>
    %c0_i32_15 = arith.constant 0 : i32
    %31 = vector.broadcast %c0_i32_15 : i32 to vector<256x1xi32>
    %32 = arith.cmpi sgt, %30, %31 : vector<256x1xi32>
    %33 = arith.extui %32 : vector<256x1xi1> to vector<256x1xi32>
    %34 = arith.sitofp %33 : vector<256x1xi32> to vector<256x1xf32>
    %c15_i32 = arith.constant 15 : i32
    %35 = vector.broadcast %c15_i32 : i32 to vector<256x1xi32>
    %36 = arith.cmpi slt, %30, %35 : vector<256x1xi32>
    %37 = arith.extui %36 : vector<256x1xi1> to vector<256x1xi32>
    %38 = arith.sitofp %37 : vector<256x1xi32> to vector<256x1xf32>
    %c16 = arith.constant 16 : index
    %c0_16 = arith.constant 0 : index
    %39 = vector.load %arg9[%c16, %c0_16] : memref<320x128xbf16, #tpu.memory_space<vmem>>, vector<256x128xbf16>
    %c1 = arith.constant 1 : index
    %c0_17 = arith.constant 0 : index
    %c0_18 = arith.constant 0 : index
    %40 = vector.load %arg3[%c1, %c0_17, %c0_18] : memref<9x128x128xbf16, #tpu.memory_space<vmem>>, vector<1x128x128xbf16>
    %41 = vector.shape_cast %40 : vector<1x128x128xbf16> to vector<128x128xbf16>
    %cst_19 = arith.constant dense<0.000000e+00> : vector<256x128xf32>
    %42 = tpu.matmul %39, %41, %cst_19 {dimension_numbers = #tpu.dot_dimension_numbers<[1], [0], [0], [1], [0, 0, 1, 1], [], []>} : vector<256x128xbf16>, vector<128x128xbf16>, vector<256x128xf32> -> vector<256x128xf32>
    %c32_20 = arith.constant 32 : index
    %c0_21 = arith.constant 0 : index
    %43 = vector.load %arg9[%c32_20, %c0_21] : memref<320x128xbf16, #tpu.memory_space<vmem>>, vector<256x128xbf16>
    %c4 = arith.constant 4 : index
    %c0_22 = arith.constant 0 : index
    %c0_23 = arith.constant 0 : index
    %44 = vector.load %arg3[%c4, %c0_22, %c0_23] : memref<9x128x128xbf16, #tpu.memory_space<vmem>>, vector<1x128x128xbf16>
    %45 = vector.shape_cast %44 : vector<1x128x128xbf16> to vector<128x128xbf16>
    %cst_24 = arith.constant dense<0.000000e+00> : vector<256x128xf32>
    %46 = tpu.matmul %43, %45, %cst_24 {dimension_numbers = #tpu.dot_dimension_numbers<[1], [0], [0], [1], [0, 0, 1, 1], [], []>} : vector<256x128xbf16>, vector<128x128xbf16>, vector<256x128xf32> -> vector<256x128xf32>
    %47 = arith.addf %42, %46 : vector<256x128xf32>
    %c48 = arith.constant 48 : index
    %c0_25 = arith.constant 0 : index
    %48 = vector.load %arg9[%c48, %c0_25] : memref<320x128xbf16, #tpu.memory_space<vmem>>, vector<256x128xbf16>
    %c7 = arith.constant 7 : index
    %c0_26 = arith.constant 0 : index
    %c0_27 = arith.constant 0 : index
    %49 = vector.load %arg3[%c7, %c0_26, %c0_27] : memref<9x128x128xbf16, #tpu.memory_space<vmem>>, vector<1x128x128xbf16>
    %50 = vector.shape_cast %49 : vector<1x128x128xbf16> to vector<128x128xbf16>
    %cst_28 = arith.constant dense<0.000000e+00> : vector<256x128xf32>
    %51 = tpu.matmul %48, %50, %cst_28 {dimension_numbers = #tpu.dot_dimension_numbers<[1], [0], [0], [1], [0, 0, 1, 1], [], []>} : vector<256x128xbf16>, vector<128x128xbf16>, vector<256x128xf32> -> vector<256x128xf32>
    %52 = arith.addf %47, %51 : vector<256x128xf32>
    %c15 = arith.constant 15 : index
    %c0_29 = arith.constant 0 : index
    %53 = vector.load %arg9[%c15, %c0_29] : memref<320x128xbf16, #tpu.memory_space<vmem>>, vector<256x128xbf16>
    %c0_30 = arith.constant 0 : index
    %c0_31 = arith.constant 0 : index
    %c0_32 = arith.constant 0 : index
    %54 = vector.load %arg3[%c0_30, %c0_31, %c0_32] : memref<9x128x128xbf16, #tpu.memory_space<vmem>>, vector<1x128x128xbf16>
    %55 = vector.shape_cast %54 : vector<1x128x128xbf16> to vector<128x128xbf16>
    %cst_33 = arith.constant dense<0.000000e+00> : vector<256x128xf32>
    %56 = tpu.matmul %53, %55, %cst_33 {dimension_numbers = #tpu.dot_dimension_numbers<[1], [0], [0], [1], [0, 0, 1, 1], [], []>} : vector<256x128xbf16>, vector<128x128xbf16>, vector<256x128xf32> -> vector<256x128xf32>
    %c31 = arith.constant 31 : index
    %c0_34 = arith.constant 0 : index
    %57 = vector.load %arg9[%c31, %c0_34] : memref<320x128xbf16, #tpu.memory_space<vmem>>, vector<256x128xbf16>
    %c3 = arith.constant 3 : index
    %c0_35 = arith.constant 0 : index
    %c0_36 = arith.constant 0 : index
    %58 = vector.load %arg3[%c3, %c0_35, %c0_36] : memref<9x128x128xbf16, #tpu.memory_space<vmem>>, vector<1x128x128xbf16>
    %59 = vector.shape_cast %58 : vector<1x128x128xbf16> to vector<128x128xbf16>
    %cst_37 = arith.constant dense<0.000000e+00> : vector<256x128xf32>
    %60 = tpu.matmul %57, %59, %cst_37 {dimension_numbers = #tpu.dot_dimension_numbers<[1], [0], [0], [1], [0, 0, 1, 1], [], []>} : vector<256x128xbf16>, vector<128x128xbf16>, vector<256x128xf32> -> vector<256x128xf32>
    %61 = arith.addf %56, %60 : vector<256x128xf32>
    %c47 = arith.constant 47 : index
    %c0_38 = arith.constant 0 : index
    %62 = vector.load %arg9[%c47, %c0_38] : memref<320x128xbf16, #tpu.memory_space<vmem>>, vector<256x128xbf16>
    %c6 = arith.constant 6 : index
    %c0_39 = arith.constant 0 : index
    %c0_40 = arith.constant 0 : index
    %63 = vector.load %arg3[%c6, %c0_39, %c0_40] : memref<9x128x128xbf16, #tpu.memory_space<vmem>>, vector<1x128x128xbf16>
    %64 = vector.shape_cast %63 : vector<1x128x128xbf16> to vector<128x128xbf16>
    %cst_41 = arith.constant dense<0.000000e+00> : vector<256x128xf32>
    %65 = tpu.matmul %62, %64, %cst_41 {dimension_numbers = #tpu.dot_dimension_numbers<[1], [0], [0], [1], [0, 0, 1, 1], [], []>} : vector<256x128xbf16>, vector<128x128xbf16>, vector<256x128xf32> -> vector<256x128xf32>
    %66 = arith.addf %61, %65 : vector<256x128xf32>
    %c17 = arith.constant 17 : index
    %c0_42 = arith.constant 0 : index
    %67 = vector.load %arg9[%c17, %c0_42] : memref<320x128xbf16, #tpu.memory_space<vmem>>, vector<256x128xbf16>
    %c2 = arith.constant 2 : index
    %c0_43 = arith.constant 0 : index
    %c0_44 = arith.constant 0 : index
    %68 = vector.load %arg3[%c2, %c0_43, %c0_44] : memref<9x128x128xbf16, #tpu.memory_space<vmem>>, vector<1x128x128xbf16>
    %69 = vector.shape_cast %68 : vector<1x128x128xbf16> to vector<128x128xbf16>
    %cst_45 = arith.constant dense<0.000000e+00> : vector<256x128xf32>
    %70 = tpu.matmul %67, %69, %cst_45 {dimension_numbers = #tpu.dot_dimension_numbers<[1], [0], [0], [1], [0, 0, 1, 1], [], []>} : vector<256x128xbf16>, vector<128x128xbf16>, vector<256x128xf32> -> vector<256x128xf32>
    %c33 = arith.constant 33 : index
    %c0_46 = arith.constant 0 : index
    %71 = vector.load %arg9[%c33, %c0_46] : memref<320x128xbf16, #tpu.memory_space<vmem>>, vector<256x128xbf16>
    %c5 = arith.constant 5 : index
    %c0_47 = arith.constant 0 : index
    %c0_48 = arith.constant 0 : index
    %72 = vector.load %arg3[%c5, %c0_47, %c0_48] : memref<9x128x128xbf16, #tpu.memory_space<vmem>>, vector<1x128x128xbf16>
    %73 = vector.shape_cast %72 : vector<1x128x128xbf16> to vector<128x128xbf16>
    %cst_49 = arith.constant dense<0.000000e+00> : vector<256x128xf32>
    %74 = tpu.matmul %71, %73, %cst_49 {dimension_numbers = #tpu.dot_dimension_numbers<[1], [0], [0], [1], [0, 0, 1, 1], [], []>} : vector<256x128xbf16>, vector<128x128xbf16>, vector<256x128xf32> -> vector<256x128xf32>
    %75 = arith.addf %70, %74 : vector<256x128xf32>
    %c49 = arith.constant 49 : index
    %c0_50 = arith.constant 0 : index
    %76 = vector.load %arg9[%c49, %c0_50] : memref<320x128xbf16, #tpu.memory_space<vmem>>, vector<256x128xbf16>
    %c8 = arith.constant 8 : index
    %c0_51 = arith.constant 0 : index
    %c0_52 = arith.constant 0 : index
    %77 = vector.load %arg3[%c8, %c0_51, %c0_52] : memref<9x128x128xbf16, #tpu.memory_space<vmem>>, vector<1x128x128xbf16>
    %78 = vector.shape_cast %77 : vector<1x128x128xbf16> to vector<128x128xbf16>
    %cst_53 = arith.constant dense<0.000000e+00> : vector<256x128xf32>
    %79 = tpu.matmul %76, %78, %cst_53 {dimension_numbers = #tpu.dot_dimension_numbers<[1], [0], [0], [1], [0, 0, 1, 1], [], []>} : vector<256x128xbf16>, vector<128x128xbf16>, vector<256x128xf32> -> vector<256x128xf32>
    %80 = arith.addf %75, %79 : vector<256x128xf32>
    %81 = vector.broadcast %34 : vector<256x1xf32> to vector<256x128xf32>
    %82 = arith.mulf %66, %81 : vector<256x128xf32>
    %83 = arith.addf %52, %82 : vector<256x128xf32>
    %84 = vector.broadcast %38 : vector<256x1xf32> to vector<256x128xf32>
    %85 = arith.mulf %80, %84 : vector<256x128xf32>
    %86 = arith.addf %83, %85 : vector<256x128xf32>
    %c0_54 = arith.constant 0 : index
    %c0_55 = arith.constant 0 : index
    %87 = vector.load %arg6[%c0_54, %c0_55] : memref<1x128xf32, #tpu.memory_space<vmem>>, vector<1x128xf32>
    %88 = vector.broadcast %87 : vector<1x128xf32> to vector<256x128xf32>
    %89 = arith.addf %86, %88 : vector<256x128xf32>
    %cst_56 = arith.constant 0.000000e+00 : f32
    %90 = vector.broadcast %cst_56 : f32 to vector<256x128xf32>
    %91 = arith.maximumf %89, %90 : vector<256x128xf32>
    %92 = arith.truncf %91 : vector<256x128xf32> to vector<256x128xbf16>
    %c0_57 = arith.constant 0 : index
    %c0_58 = arith.constant 0 : index
    %93 = vector.load %arg4[%c0_57, %c0_58] : memref<128x128xbf16, #tpu.memory_space<vmem>>, vector<128x128xbf16>
    %cst_59 = arith.constant dense<0.000000e+00> : vector<256x128xf32>
    %94 = tpu.matmul %92, %93, %cst_59 {dimension_numbers = #tpu.dot_dimension_numbers<[1], [0], [0], [1], [0, 0, 1, 1], [], []>} : vector<256x128xbf16>, vector<128x128xbf16>, vector<256x128xf32> -> vector<256x128xf32>
    %c0_60 = arith.constant 0 : index
    %c0_61 = arith.constant 0 : index
    %95 = vector.load %arg7[%c0_60, %c0_61] : memref<1x128xf32, #tpu.memory_space<vmem>>, vector<1x128xf32>
    %96 = vector.broadcast %95 : vector<1x128xf32> to vector<256x128xf32>
    %97 = arith.addf %94, %96 : vector<256x128xf32>
    %98 = arith.extf %4 : vector<256x128xbf16> to vector<256x128xf32>
    %99 = arith.addf %97, %98 : vector<256x128xf32>
    %cst_62 = arith.constant 0.000000e+00 : f32
    %100 = vector.broadcast %cst_62 : f32 to vector<256x128xf32>
    %101 = arith.maximumf %99, %100 : vector<256x128xf32>
    %102 = arith.truncf %101 : vector<256x128xf32> to vector<256x128xbf16>
    %c0_63 = arith.constant 0 : index
    %c0_64 = arith.constant 0 : index
    %c0_65 = arith.constant 0 : index
    %103 = vector.load %arg8[%c0_63, %c0_64, %c0_65] : memref<1x256x128xbf16, #tpu.memory_space<vmem>>, vector<1x256x128xbf16>
    %104 = vector.shape_cast %103 : vector<1x256x128xbf16> to vector<256x128xbf16>
    %105 = vector.shape_cast %102 : vector<256x128xbf16> to vector<1x256x128xbf16>
    tpu.vector_store %arg8[%c0_63, %c0_64, %c0_65], %105 {strides = array<i32>} : memref<1x256x128xbf16, #tpu.memory_space<vmem>>, vector<1x256x128xbf16>,
    return
  }
  func.func @transform_0(%arg0: i32) -> (i32, i32, i32) {
    %c0_i32 = arith.constant 0 : i32
    %c0_i32_0 = arith.constant 0 : i32
    %c0_i32_1 = arith.constant 0 : i32
    return %arg0, %c0_i32, %c0_i32_0 : i32, i32, i32
  }
  func.func @transform_1(%arg0: i32) -> (i32, i32) {
    %c0_i32 = arith.constant 0 : i32
    %c0_i32_0 = arith.constant 0 : i32
    %c0_i32_1 = arith.constant 0 : i32
    return %c0_i32, %c0_i32_0 : i32, i32
  }
  func.func @transform_2(%arg0: i32) -> (i32, i32, i32) {
    %c0_i32 = arith.constant 0 : i32
    %c0_i32_0 = arith.constant 0 : i32
    %c0_i32_1 = arith.constant 0 : i32
    %c0_i32_2 = arith.constant 0 : i32
    return %c0_i32, %c0_i32_0, %c0_i32_1 : i32, i32, i32
  }
  func.func @transform_3(%arg0: i32) -> (i32, i32) {
    %c0_i32 = arith.constant 0 : i32
    %c0_i32_0 = arith.constant 0 : i32
    %c0_i32_1 = arith.constant 0 : i32
    return %c0_i32, %c0_i32_0 : i32, i32
  }
  func.func @transform_4(%arg0: i32) -> (i32, i32) {
    %c0_i32 = arith.constant 0 : i32
    %c0_i32_0 = arith.constant 0 : i32
    %c0_i32_1 = arith.constant 0 : i32
    return %c0_i32, %c0_i32_0 : i32, i32
  }
  func.func @transform_5(%arg0: i32) -> (i32, i32) {
    %c0_i32 = arith.constant 0 : i32
    %c0_i32_0 = arith.constant 0 : i32
    %c0_i32_1 = arith.constant 0 : i32
    return %c0_i32, %c0_i32_0 : i32, i32
  }
  func.func @transform_6(%arg0: i32) -> (i32, i32) {
    %c0_i32 = arith.constant 0 : i32
    %c0_i32_0 = arith.constant 0 : i32
    %c0_i32_1 = arith.constant 0 : i32
    return %c0_i32, %c0_i32_0 : i32, i32
  }
  func.func @transform_7(%arg0: i32) -> (i32, i32, i32) {
    %c0_i32 = arith.constant 0 : i32
    %c0_i32_0 = arith.constant 0 : i32
    %c0_i32_1 = arith.constant 0 : i32
    return %arg0, %c0_i32, %c0_i32_0 : i32, i32, i32
  }
}

</mosaic_0001>

<llo_original>
// kernel: bottleneck_forward.1
$region0: #{bottleneck_forward.1}
  #allocation0 [shape = 'u32[]', space=smem, size = 0x4, offset = 0x4, fixed_abs, tag = 'smem constant byte address 0x4 - core index']
  #allocation1 [shape = 'u32[72,128]{1,0:T(1,128)}', space=vmem, size = 0x9000, scoped, tag = 'internal scratch']
  #allocation2 [shape = 'bf16[320,128]{1,0:T(8,128)(2,1)}', space=vmem, size = 0x14000, scoped, tag = 'scratch operand']
  %s0 = inlined_call_operand.vmem [shape: bf16[2,256,128], index: 0, kind: input, shape index: {}]
  %s1 = inlined_call_operand.vmem [shape: bf16[128,128], index: 1, kind: input, shape index: {}]
  %s2 = inlined_call_operand.vmem [shape: bf16[9,128,128], index: 2, kind: input, shape index: {}]
  %s3 = inlined_call_operand.vmem [shape: bf16[128,128], index: 3, kind: input, shape index: {}]
  %s4 = inlined_call_operand.vmem [shape: f32[1,128], index: 4, kind: input, shape index: {}]
  %s5 = inlined_call_operand.vmem [shape: f32[1,128], index: 5, kind: input, shape index: {}]
  %s6 = inlined_call_operand.vmem [shape: f32[1,128], index: 6, kind: input, shape index: {}]
  %s7 = inlined_call_operand.vmem [shape: bf16[2,256,128], index: 7, kind: output, shape index: {}]
  %s8 = sld [smem:[#allocation0]]
  $region61: #{bottleneck_forward.1} parent=0
    _
  %s10 = ssub.s32 1, %s8
  %s11 = scalar_select 0, %s10, %s8
  loop: start=0, step=1, limit=4
  $region2: #{bottleneck_forward.1} parent=0 // loop_pre_header
    _
  $region3: #{bottleneck_forward.1} parent=0 // loop_header
    %s13 = sphi 0, %s17
    %p14 = scmp.ge.s32.totalorder %s13, 4
    %s23 = sphi 0, %s25
    %s26 = sphi 0, %s23
    %s27 = sphi 0, %s26
    %s43 = sphi 0, %s27
    %s47 = sphi 0, %s47
    %s49 = sphi 0, %s47
    %s50 = sphi 0, %s49
    %s64 = sphi 0, %s50
    %s68 = sphi 0, %s68
    %s70 = sphi 0, %s68
    %s71 = sphi 0, %s70
    %s85 = sphi 0, %s71
    %s89 = sphi 0, %s89
    %s91 = sphi 0, %s89
    %s92 = sphi 0, %s91
    %s106 = sphi 0, %s92
    %s110 = sphi 0, %s110
    %s112 = sphi 0, %s110
    %s113 = sphi 0, %s112
    %s127 = sphi 0, %s113
    %s131 = sphi 0, %s131
    %s133 = sphi 0, %s131
    %s134 = sphi 0, %s133
    %s148 = sphi 0, %s134
    %s152 = sphi 0, %s152
    %s154 = sphi 0, %s152
    %s155 = sphi 0, %s154
    %s169 = sphi 0, %s155
    %s175 = sphi 0, %s177
    %s178 = sphi 0, %s175
    %s179 = sphi 0, %s178
    %s195 = sphi 0, %s179
  $region4: #{bottleneck_forward.1} parent=0 // loop_header_branch
    %16 = sbr.rel (%p14) target = $region8
  $region5: #{bottleneck_forward.1} parent=0 // loop_body
    %s18 = ssub.s32 %s13, 1
    %s19 = ssub.s32 %s13, 2
    %s20 = sadd.s32 %s13, 1
    %s21 = ssub.s32 %s13, %s20
    %p22 = scmp.eq.s32.totalorder %s21, 0
    %s24 = sadd.s32 %s23, 1
    %s25 = scalar_select %p22, %s23, %s24
    %p28 = pneg %p22
    %p29 = scmp.eq.s32.totalorder %s13, 1
    %p30 = por %p28, %p29
    %p31 = scmp.ne.s32.totalorder %s23, %s26
    %p32 = scmp.eq.s32.totalorder %s13, 0
    %p33 = por %p31, %p32
    %p34 = scmp.ne.s32.totalorder %s23, %s26
    %p35 = scmp.eq.s32.totalorder %s18, 1
    %p36 = por %p34, %p35
    %p37 = scmp.ne.s32.totalorder %s26, %s27
    %p38 = scmp.eq.s32.totalorder %s18, 0
    %p39 = por %p37, %p38
    %p40 = scmp.ne.s32.totalorder %s26, %s27
    %p41 = scmp.eq.s32.totalorder %s19, 1
    %p42 = por %p40, %p41
    %p44 = scmp.ne.s32.totalorder %s27, %s43
    %p45 = scmp.eq.s32.totalorder %s19, 0
    %p46 = por %p44, %p45
    %s48 = sadd.s32 %s47, 1
    %p51 = scmp.eq.s32.totalorder %s13, 1
    %p52 = scmp.ne.s32.totalorder %s47, %s49
    %p53 = scmp.eq.s32.totalorder %s13, 0
    %p54 = por %p52, %p53
    %p55 = scmp.ne.s32.totalorder %s47, %s49
    %p56 = scmp.eq.s32.totalorder %s18, 1
    %p57 = por %p55, %p56
    %p58 = scmp.ne.s32.totalorder %s49, %s50
    %p59 = scmp.eq.s32.totalorder %s18, 0
    %p60 = por %p58, %p59
    %p61 = scmp.ne.s32.totalorder %s49, %s50
    %p62 = scmp.eq.s32.totalorder %s19, 1
    %p63 = por %p61, %p62
    %p65 = scmp.ne.s32.totalorder %s50, %s64
    %p66 = scmp.eq.s32.totalorder %s19, 0
    %p67 = por %p65, %p66
    %s69 = sadd.s32 %s68, 1
    %p72 = scmp.eq.s32.totalorder %s13, 1
    %p73 = scmp.ne.s32.totalorder %s68, %s70
    %p74 = scmp.eq.s32.totalorder %s13, 0
    %p75 = por %p73, %p74
    %p76 = scmp.ne.s32.totalorder %s68, %s70
    %p77 = scmp.eq.s32.totalorder %s18, 1
    %p78 = por %p76, %p77
    %p79 = scmp.ne.s32.totalorder %s70, %s71
    %p80 = scmp.eq.s32.totalorder %s18, 0
    %p81 = por %p79, %p80
    %p82 = scmp.ne.s32.totalorder %s70, %s71
    %p83 = scmp.eq.s32.totalorder %s19, 1
    %p84 = por %p82, %p83
    %p86 = scmp.ne.s32.totalorder %s71, %s85
    %p87 = scmp.eq.s32.totalorder %s19, 0
    %p88 = por %p86, %p87
    %s90 = sadd.s32 %s89, 1
    %p93 = scmp.eq.s32.totalorder %s13, 1
    %p94 = scmp.ne.s32.totalorder %s89, %s91
    %p95 = scmp.eq.s32.totalorder %s13, 0
    %p96 = por %p94, %p95
    %p97 = scmp.ne.s32.totalorder %s89, %s91
    %p98 = scmp.eq.s32.totalorder %s18, 1
    %p99 = por %p97, %p98
    %p100 = scmp.ne.s32.totalorder %s91, %s92
    %p101 = scmp.eq.s32.totalorder %s18, 0
    %p102 = por %p100, %p101
    %p103 = scmp.ne.s32.totalorder %s91, %s92
    %p104 = scmp.eq.s32.totalorder %s19, 1
    %p105 = por %p103, %p104
    %p107 = scmp.ne.s32.totalorder %s92, %s106
    %p108 = scmp.eq.s32.totalorder %s19, 0
    %p109 = por %p107, %p108
    %s111 = sadd.s32 %s110, 1
    %p114 = scmp.eq.s32.totalorder %s13, 1
    %p115 = scmp.ne.s32.totalorder %s110, %s112
    %p116 = scmp.eq.s32.totalorder %s13, 0
    %p117 = por %p115, %p116
    %p118 = scmp.ne.s32.totalorder %s110, %s112
    %p119 = scmp.eq.s32.totalorder %s18, 1
    %p120 = por %p118, %p119
    %p121 = scmp.ne.s32.totalorder %s112, %s113
    %p122 = scmp.eq.s32.totalorder %s18, 0
    %p123 = por %p121, %p122
    %p124 = scmp.ne.s32.totalorder %s112, %s113
    %p125 = scmp.eq.s32.totalorder %s19, 1
    %p126 = por %p124, %p125
    %p128 = scmp.ne.s32.totalorder %s113, %s127
    %p129 = scmp.eq.s32.totalorder %s19, 0
    %p130 = por %p128, %p129
    %s132 = sadd.s32 %s131, 1
    %p135 = scmp.eq.s32.totalorder %s13, 1
    %p136 = scmp.ne.s32.totalorder %s131, %s133
    %p137 = scmp.eq.s32.totalorder %s13, 0
    %p138 = por %p136, %p137
    %p139 = scmp.ne.s32.totalorder %s131, %s133
    %p140 = scmp.eq.s32.totalorder %s18, 1
    %p141 = por %p139, %p140
    %p142 = scmp.ne.s32.totalorder %s133, %s134
    %p143 = scmp.eq.s32.totalorder %s18, 0
    %p144 = por %p142, %p143
    %p145 = scmp.ne.s32.totalorder %s133, %s134
    %p146 = scmp.eq.s32.totalorder %s19, 1
    %p147 = por %p145, %p146
    %p149 = scmp.ne.s32.totalorder %s134, %s148
    %p150 = scmp.eq.s32.totalorder %s19, 0
    %p151 = por %p149, %p150
    %s153 = sadd.s32 %s152, 1
    %p156 = scmp.eq.s32.totalorder %s13, 1
    %p157 = scmp.ne.s32.totalorder %s152, %s154
    %p158 = scmp.eq.s32.totalorder %s13, 0
    %p159 = por %p157, %p158
    %p160 = scmp.ne.s32.totalorder %s152, %s154
    %p161 = scmp.eq.s32.totalorder %s18, 1
    %p162 = por %p160, %p161
    %p163 = scmp.ne.s32.totalorder %s154, %s155
    %p164 = scmp.eq.s32.totalorder %s18, 0
    %p165 = por %p163, %p164
    %p166 = scmp.ne.s32.totalorder %s154, %s155
    %p167 = scmp.eq.s32.totalorder %s19, 1
    %p168 = por %p166, %p167
    %p170 = scmp.ne.s32.totalorder %s155, %s169
    %p171 = scmp.eq.s32.totalorder %s19, 0
    %p172 = por %p170, %p171
    %s173 = ssub.s32 %s13, %s20
    %p174 = scmp.eq.s32.totalorder %s173, 0
    %s176 = sadd.s32 %s175, 1
    %s177 = scalar_select %p174, %s175, %s176
    %p180 = pneg %p174
    %p181 = scmp.eq.s32.totalorder %s13, 1
    %p182 = por %p180, %p181
    %p183 = scmp.ne.s32.totalorder %s175, %s178
    %p184 = scmp.eq.s32.totalorder %s13, 0
    %p185 = por %p183, %p184
    %p186 = scmp.ne.s32.totalorder %s175, %s178
    %p187 = scmp.eq.s32.totalorder %s18, 1
    %p188 = por %p186, %p187
    %p189 = scmp.ne.s32.totalorder %s178, %s179
    %p190 = scmp.eq.s32.totalorder %s18, 0
    %p191 = por %p189, %p190
    %p192 = scmp.ne.s32.totalorder %s178, %s179
    %p193 = scmp.eq.s32.totalorder %s19, 1
    %p194 = por %p192, %p193
    %p196 = scmp.ne.s32.totalorder %s179, %s195
    %p197 = scmp.eq.s32.totalorder %s19, 0
    %p198 = por %p196, %p197
    %p199 = scmp.le.s32.totalorder 1, %s13
    %p200 = scmp.lt.s32.totalorder %s13, 3
    %p201 = pnand %p199, %p200
    %p202 = pneg %p201
    // Predicated region
    $region9: #{bottleneck_forward.1} parent=5 // pred_check
      _
    $region10: #{bottleneck_forward.1} parent=5 // pred_check_branch
      %204 = sbr.rel (%p201) target = $region12
    $region11: #{bottleneck_forward.1} parent=5 // pred_region
      %s205 = ssub.s32 %s13, 1
      // Predicated region
      $region13: #{bottleneck_forward.1} parent=11 // pred_check
        %p206 = pneg %p60
      $region14: #{bottleneck_forward.1} parent=11 // pred_check_branch
        %208 = sbr.rel (%p206) target = $region16
      $region15: #{bottleneck_forward.1} parent=11 // pred_region
        _
      $region16: #{bottleneck_forward.1} parent=11 // pred_fallthru
        _
      // Predicated region
      $region17: #{bottleneck_forward.1} parent=11 // pred_check
        %p209 = pneg %p81
      $region18: #{bottleneck_forward.1} parent=11 // pred_check_branch
        %211 = sbr.rel (%p209) target = $region20
      $region19: #{bottleneck_forward.1} parent=11 // pred_region
        _
      $region20: #{bottleneck_forward.1} parent=11 // pred_fallthru
        _
      // Predicated region
      $region21: #{bottleneck_forward.1} parent=11 // pred_check
        %p212 = pneg %p102
      $region22: #{bottleneck_forward.1} parent=11 // pred_check_branch
        %214 = sbr.rel (%p212) target = $region24
      $region23: #{bottleneck_forward.1} parent=11 // pred_region
        _
      $region24: #{bottleneck_forward.1} parent=11 // pred_fallthru
        _
      // Predicated region
      $region25: #{bottleneck_forward.1} parent=11 // pred_check
        %p215 = pneg %p123
      $region26: #{bottleneck_forward.1} parent=11 // pred_check_branch
        %217 = sbr.rel (%p215) target = $region28
      $region27: #{bottleneck_forward.1} parent=11 // pred_region
        _
      $region28: #{bottleneck_forward.1} parent=11 // pred_fallthru
        _
      // Predicated region
      $region29: #{bottleneck_forward.1} parent=11 // pred_check
        %p218 = pneg %p144
      $region30: #{bottleneck_forward.1} parent=11 // pred_check_branch
        %220 = sbr.rel (%p218) target = $region32
      $region31: #{bottleneck_forward.1} parent=11 // pred_region
        _
      $region32: #{bottleneck_forward.1} parent=11 // pred_fallthru
        _
      // Predicated region
      $region33: #{bottleneck_forward.1} parent=11 // pred_check
        %p221 = pneg %p165
      $region34: #{bottleneck_forward.1} parent=11 // pred_check_branch
        %223 = sbr.rel (%p221) target = $region36
      $region35: #{bottleneck_forward.1} parent=11 // pred_region
        _
      $region36: #{bottleneck_forward.1} parent=11 // pred_fallthru
        _
    $region12: #{bottleneck_forward.1} parent=5 // pred_fallthru
      _
    %p224 = scmp.lt.s32.totalorder %s13, 2
    // Predicated region
    $region37: #{bottleneck_forward.1} parent=5 // pred_check
      %p225 = pneg %p224
    $region38: #{bottleneck_forward.1} parent=5 // pred_check_branch
      %227 = sbr.rel (%p225) target = $region40
    $region39: #{bottleneck_forward.1} parent=5 // pred_region
      // Predicated region
      $region41: #{bottleneck_forward.1} parent=39 // pred_check
        %p228 = pneg %p33
      $region42: #{bottleneck_forward.1} parent=39 // pred_check_branch
        %230 = sbr.rel (%p228) target = $region44
      $region43: #{bottleneck_forward.1} parent=39 // pred_region
        %p231 = scmp.lt.s32.totalorder %s13, 1
        %s232 = scalar_select %p231, %s13, 1
        %s233 = smul.addr %s232, 32
        %s234 = smul.addr %s233, 4
        %s235 = scalar_lea.vmem %s0, %s234
      $region44: #{bottleneck_forward.1} parent=39 // pred_fallthru
        _
    $region40: #{bottleneck_forward.1} parent=5 // pred_fallthru
      _
    %p236 = scmp.le.s32.totalorder 1, %s13
    %p237 = scmp.lt.s32.totalorder %s13, 3
    %p238 = pnand %p236, %p237
    %p239 = pneg %p238
    // Predicated region
    $region45: #{bottleneck_forward.1} parent=5 // pred_check
      _
    $region46: #{bottleneck_forward.1} parent=5 // pred_check_branch
      %241 = sbr.rel (%p238) target = $region48
    $region47: #{bottleneck_forward.1} parent=5 // pred_region
      %s242 = ssub.s32 %s13, 1
      %p243 = scmp.lt.s32.totalorder %s18, 1
      %s244 = scalar_select %p243, %s18, 1
      %s245 = smul.addr %s244, 32
      %s246 = smul.addr %s245, 4
      %s247 = scalar_lea.vmem %s0, %s246
      %p248 = pneg %p39
      %p249 = pneg %p36
      %p250 = pneg %p60
      %p251 = pneg %p57
      %p252 = pneg %p81
      %p253 = pneg %p78
      %p254 = pneg %p102
      %p255 = pneg %p99
      %p256 = pneg %p123
      %p257 = pneg %p120
      %p258 = pneg %p144
      %p259 = pneg %p141
      %p260 = pneg %p165
      %p261 = pneg %p162
      %p262 = pneg %p191
      %p263 = pneg %p188
      %p264 = scmp.lt.s32.totalorder %s18, 1
      %s265 = scalar_select %p264, %s18, 1
      %s266 = smul.addr %s265, 32
      %s267 = smul.addr %s266, 4
      %s268 = scalar_lea.vmem %s7, %s267
      %p269 = scmp.lt.s32.totalorder %s18, 1
      %s270 = scalar_select %p269, %s18, 1
      %s271 = smul.addr %s270, 32
      %s272 = smul.addr %s271, 4
      %s273 = scalar_lea.vmem %s0, %s272
      %p274 = scmp.lt.s32.totalorder %s18, 1
      %s275 = scalar_select %p274, %s18, 1
      %s276 = smul.addr %s275, 32
      %s277 = smul.addr %s276, 4
      %s278 = scalar_lea.vmem %s7, %s277
      %280 = vst [vmem:[#allocation2] sm:$0xf] 0
      %281 = vst [vmem:[#allocation2 + $0x4] sm:$0xf] 0
      %282 = vst [vmem:[#allocation2 + $0x8] sm:$0xf] 0
      %283 = vst [vmem:[#allocation2 + $0xc] sm:$0xf] 0
      %284 = vst [vmem:[#allocation2 + $0x90] sm:$0xf] 0
      %285 = vst [vmem:[#allocation2 + $0x94] sm:$0xf] 0
      %286 = vst [vmem:[#allocation2 + $0x98] sm:$0xf] 0
      %287 = vst [vmem:[#allocation2 + $0x9c] sm:$0xf] 0
      %v288 = vld [vmem:[%s273] sm:$0xf]
      %v289 = vld [vmem:[%s273 + $0x4] sm:$0xf]
      %v290 = vld [vmem:[%s273 + $0x8] sm:$0xf]
      %v291 = vld [vmem:[%s273 + $0xc] sm:$0xf]
      %v292 = vld [vmem:[%s273 + $0x10] sm:$0xf]
      %v293 = vld [vmem:[%s273 + $0x14] sm:$0xf]
      %v294 = vld [vmem:[%s273 + $0x18] sm:$0xf]
      %v295 = vld [vmem:[%s273 + $0x1c] sm:$0xf]
      %v296 = vld [vmem:[%s273 + $0x20] sm:$0xf]
      %v297 = vld [vmem:[%s273 + $0x24] sm:$0xf]
      %v298 = vld [vmem:[%s273 + $0x28] sm:$0xf]
      %v299 = vld [vmem:[%s273 + $0x2c] sm:$0xf]
      %v300 = vld [vmem:[%s273 + $0x30] sm:$0xf]
      %v301 = vld [vmem:[%s273 + $0x34] sm:$0xf]
      %v302 = vld [vmem:[%s273 + $0x38] sm:$0xf]
      %v303 = vld [vmem:[%s273 + $0x3c] sm:$0xf]
      %v304 = vld [vmem:[%s273 + $0x40] sm:$0xf]
      %v305 = vld [vmem:[%s273 + $0x44] sm:$0xf]
      %v306 = vld [vmem:[%s273 + $0x48] sm:$0xf]
      %v307 = vld [vmem:[%s273 + $0x4c] sm:$0xf]
      %v308 = vld [vmem:[%s273 + $0x50] sm:$0xf]
      %v309 = vld [vmem:[%s273 + $0x54] sm:$0xf]
      %v310 = vld [vmem:[%s273 + $0x58] sm:$0xf]
      %v311 = vld [vmem:[%s273 + $0x5c] sm:$0xf]
      %v312 = vld [vmem:[%s273 + $0x60] sm:$0xf]
      %v313 = vld [vmem:[%s273 + $0x64] sm:$0xf]
      %v314 = vld [vmem:[%s273 + $0x68] sm:$0xf]
      %v315 = vld [vmem:[%s273 + $0x6c] sm:$0xf]
      %v316 = vld [vmem:[%s273 + $0x70] sm:$0xf]
      %v317 = vld [vmem:[%s273 + $0x74] sm:$0xf]
      %v318 = vld [vmem:[%s273 + $0x78] sm:$0xf]
      %v319 = vld [vmem:[%s273 + $0x7c] sm:$0xf]
      %v320 = vld [vmem:[%s1] sm:$0xf]
      %v321 = vld [vmem:[%s1 + $0x4] sm:$0xf]
      %v322 = vld [vmem:[%s1 + $0x8] sm:$0xf]
      %v323 = vld [vmem:[%s1 + $0xc] sm:$0xf]
      %v324 = vld [vmem:[%s1 + $0x10] sm:$0xf]
      %v325 = vld [vmem:[%s1 + $0x14] sm:$0xf]
      %v326 = vld [vmem:[%s1 + $0x18] sm:$0xf]
      %v327 = vld [vmem:[%s1 + $0x1c] sm:$0xf]
      %v328 = vld [vmem:[%s1 + $0x20] sm:$0xf]
      %v329 = vld [vmem:[%s1 + $0x24] sm:$0xf]
      %v330 = vld [vmem:[%s1 + $0x28] sm:$0xf]
      %v331 = vld [vmem:[%s1 + $0x2c] sm:$0xf]
      %v332 = vld [vmem:[%s1 + $0x30] sm:$0xf]
      %v333 = vld [vmem:[%s1 + $0x34] sm:$0xf]
      %v334 = vld [vmem:[%s1 + $0x38] sm:$0xf]
      %v335 = vld [vmem:[%s1 + $0x3c] sm:$0xf]
      %v336 = vld [vmem:[%s4] sm:$0x1]
      %v338 = vperm.slane %v336, 0
      %v372 = vunpack.c.l.b16 %v288
      %v373 = vunpack.c.l.b16 %v289
      %v374 = vunpack.c.l.b16 %v290
      %v375 = vunpack.c.l.b16 %v291
      %v376 = vunpack.c.l.b16 %v292
      %v377 = vunpack.c.l.b16 %v293
      %v378 = vunpack.c.l.b16 %v294
      %v379 = vunpack.c.l.b16 %v295
      %v380 = vunpack.c.l.b16 %v296
      %v381 = vunpack.c.l.b16 %v297
      %v382 = vunpack.c.l.b16 %v298
      %v383 = vunpack.c.l.b16 %v299
      %v384 = vunpack.c.l.b16 %v300
      %v385 = vunpack.c.l.b16 %v301
      %v386 = vunpack.c.l.b16 %v302
      %v387 = vunpack.c.l.b16 %v303
      %v388 = vunpack.c.l.b16 %v304
      %v389 = vunpack.c.l.b16 %v305
      %v390 = vunpack.c.l.b16 %v306
      %v391 = vunpack.c.l.b16 %v307
      %v392 = vunpack.c.l.b16 %v308
      %v393 = vunpack.c.l.b16 %v309
      %v394 = vunpack.c.l.b16 %v310
      %v395 = vunpack.c.l.b16 %v311
      %v396 = vunpack.c.l.b16 %v312
      %v397 = vunpack.c.l.b16 %v313
      %v398 = vunpack.c.l.b16 %v314
      %v399 = vunpack.c.l.b16 %v315
      %v400 = vunpack.c.l.b16 %v316
      %v401 = vunpack.c.l.b16 %v317
      %v402 = vunpack.c.l.b16 %v318
      %v403 = vunpack.c.l.b16 %v319
      %v404 = vpack.c.b16 %v373, %v372
      %v405 = vpack.c.b16 %v375, %v374
      %v406 = vpack.c.b16 %v377, %v376
      %v407 = vpack.c.b16 %v379, %v378
      %v408 = vpack.c.b16 %v381, %v380
      %v409 = vpack.c.b16 %v383, %v382
      %v410 = vpack.c.b16 %v385, %v384
      %v411 = vpack.c.b16 %v387, %v386
      %v412 = vpack.c.b16 %v389, %v388
      %v413 = vpack.c.b16 %v391, %v390
      %v414 = vpack.c.b16 %v393, %v392
      %v415 = vpack.c.b16 %v395, %v394
      %v416 = vpack.c.b16 %v397, %v396
      %v417 = vpack.c.b16 %v399, %v398
      %v418 = vpack.c.b16 %v401, %v400
      %v419 = vpack.c.b16 %v403, %v402
      %v452 = vunpack.c.l.b16 %v320
      %v453 = vunpack.c.l.b16 %v321
      %v454 = vunpack.c.l.b16 %v322
      %v455 = vunpack.c.l.b16 %v323
      %v456 = vunpack.c.l.b16 %v324
      %v457 = vunpack.c.l.b16 %v325
      %v458 = vunpack.c.l.b16 %v326
      %v459 = vunpack.c.l.b16 %v327
      %v460 = vunpack.c.l.b16 %v328
      %v461 = vunpack.c.l.b16 %v329
      %v462 = vunpack.c.l.b16 %v330
      %v463 = vunpack.c.l.b16 %v331
      %v464 = vunpack.c.l.b16 %v332
      %v465 = vunpack.c.l.b16 %v333
      %v466 = vunpack.c.l.b16 %v334
      %v467 = vunpack.c.l.b16 %v335
      %v468 = vpack.c.b16 %v453, %v452
      %v469 = vpack.c.b16 %v455, %v454
      %v470 = vpack.c.b16 %v457, %v456
      %v471 = vpack.c.b16 %v459, %v458
      %v472 = vpack.c.b16 %v461, %v460
      %v473 = vpack.c.b16 %v463, %v462
      %v474 = vpack.c.b16 %v465, %v464
      %v475 = vpack.c.b16 %v467, %v466
      %484 = vmatpush.bf16.msra.mxu0 %v475
      %485 = vmatpush.bf16.msra.mxu0 %v474
      %486 = vmatpush.bf16.msra.mxu0 %v473
      %487 = vmatpush.bf16.msra.mxu0 %v472
      %488 = vmatpush.bf16.msra.mxu0 %v471
      %489 = vmatpush.bf16.msra.mxu0 %v470
      %490 = vmatpush.bf16.msra.mxu0 %v469
      %491 = vmatpush.bf16.msra.mxu0 %v468
      %492 = vmatmul.bf16.gmra.mxu0 %v404
      %v493 = vpop.f32.mrf.mxu0
      %v494 = vadd.f32 %v338, %v493
      %v495 = vpop.f32.mrf.mxu0
      %v496 = vadd.f32 %v338, %v495
      %497 = vmatmul.bf16.gmra.mxu0 %v405
      %v498 = vpop.f32.mrf.mxu0
      %v499 = vadd.f32 %v338, %v498
      %v500 = vpop.f32.mrf.mxu0
      %v501 = vadd.f32 %v338, %v500
      %502 = vmatmul.bf16.gmra.mxu0 %v406
      %v503 = vpop.f32.mrf.mxu0
      %v504 = vadd.f32 %v338, %v503
      %v505 = vpop.f32.mrf.mxu0
      %v506 = vadd.f32 %v338, %v505
      %507 = vmatmul.bf16.gmra.mxu0 %v407
      %v508 = vpop.f32.mrf.mxu0
      %v509 = vadd.f32 %v338, %v508
      %v510 = vpop.f32.mrf.mxu0
      %v511 = vadd.f32 %v338, %v510
      %512 = vmatmul.bf16.gmra.mxu0 %v408
      %v513 = vpop.f32.mrf.mxu0
      %v514 = vadd.f32 %v338, %v513
      %v515 = vpop.f32.mrf.mxu0
      %v516 = vadd.f32 %v338, %v515
      %517 = vmatmul.bf16.gmra.mxu0 %v409
      %v518 = vpop.f32.mrf.mxu0
      %v519 = vadd.f32 %v338, %v518
      %v520 = vpop.f32.mrf.mxu0
      %v521 = vadd.f32 %v338, %v520
      %522 = vmatmul.bf16.gmra.mxu0 %v410
      %v523 = vpop.f32.mrf.mxu0
      %v524 = vadd.f32 %v338, %v523
      %v525 = vpop.f32.mrf.mxu0
      %v526 = vadd.f32 %v338, %v525
      %527 = vmatmul.bf16.gmra.mxu0 %v411
      %v528 = vpop.f32.mrf.mxu0
      %v529 = vadd.f32 %v338, %v528
      %v530 = vpop.f32.mrf.mxu0
      %v531 = vadd.f32 %v338, %v530
      %532 = vmatmul.bf16.gmra.mxu0 %v412
      %v533 = vpop.f32.mrf.mxu0
      %v534 = vadd.f32 %v338, %v533
      %v535 = vpop.f32.mrf.mxu0
      %v536 = vadd.f32 %v338, %v535
      %537 = vmatmul.bf16.gmra.mxu0 %v413
      %v538 = vpop.f32.mrf.mxu0
      %v539 = vadd.f32 %v338, %v538
      %v540 = vpop.f32.mrf.mxu0
      %v541 = vadd.f32 %v338, %v540
      %542 = vmatmul.bf16.gmra.mxu0 %v414
      %v543 = vpop.f32.mrf.mxu0
      %v544 = vadd.f32 %v338, %v543
      %v545 = vpop.f32.mrf.mxu0
      %v546 = vadd.f32 %v338, %v545
      %547 = vmatmul.bf16.gmra.mxu0 %v415
      %v548 = vpop.f32.mrf.mxu0
      %v549 = vadd.f32 %v338, %v548
      %v550 = vpop.f32.mrf.mxu0
      %v551 = vadd.f32 %v338, %v550
      %552 = vmatmul.bf16.gmra.mxu0 %v416
      %v553 = vpop.f32.mrf.mxu0
      %v554 = vadd.f32 %v338, %v553
      %v555 = vpop.f32.mrf.mxu0
      %v556 = vadd.f32 %v338, %v555
      %557 = vmatmul.bf16.gmra.mxu0 %v417
      %v558 = vpop.f32.mrf.mxu0
      %v559 = vadd.f32 %v338, %v558
      %v560 = vpop.f32.mrf.mxu0
      %v561 = vadd.f32 %v338, %v560
      %562 = vmatmul.bf16.gmra.mxu0 %v418
      %v563 = vpop.f32.mrf.mxu0
      %v564 = vadd.f32 %v338, %v563
      %v565 = vpop.f32.mrf.mxu0
      %v566 = vadd.f32 %v338, %v565
      %567 = vmatmul.bf16.gmra.mxu0 %v419
      %v568 = vpop.f32.mrf.mxu0
      %v569 = vadd.f32 %v338, %v568
      %v570 = vpop.f32.mrf.mxu0
      %v571 = vadd.f32 %v338, %v570
      %572 = vdwg.mxu0
      %v573 = vmax.f32 %v494, 0.0
      %v574 = vmax.f32 %v496, 0.0
      %v575 = vmax.f32 %v499, 0.0
      %v576 = vmax.f32 %v501, 0.0
      %v577 = vmax.f32 %v504, 0.0
      %v578 = vmax.f32 %v506, 0.0
      %v579 = vmax.f32 %v509, 0.0
      %v580 = vmax.f32 %v511, 0.0
      %v581 = vmax.f32 %v514, 0.0
      %v582 = vmax.f32 %v516, 0.0
      %v583 = vmax.f32 %v519, 0.0
      %v584 = vmax.f32 %v521, 0.0
      %v585 = vmax.f32 %v524, 0.0
      %v586 = vmax.f32 %v526, 0.0
      %v587 = vmax.f32 %v529, 0.0
      %v588 = vmax.f32 %v531, 0.0
      %v589 = vmax.f32 %v534, 0.0
      %v590 = vmax.f32 %v536, 0.0
      %v591 = vmax.f32 %v539, 0.0
      %v592 = vmax.f32 %v541, 0.0
      %v593 = vmax.f32 %v544, 0.0
      %v594 = vmax.f32 %v546, 0.0
      %v595 = vmax.f32 %v549, 0.0
      %v596 = vmax.f32 %v551, 0.0
      %v597 = vmax.f32 %v554, 0.0
      %v598 = vmax.f32 %v556, 0.0
      %v599 = vmax.f32 %v559, 0.0
      %v600 = vmax.f32 %v561, 0.0
      %v601 = vmax.f32 %v564, 0.0
      %v602 = vmax.f32 %v566, 0.0
      %v603 = vmax.f32 %v569, 0.0
      %v604 = vmax.f32 %v571, 0.0
      %v605 = vpack.c.bf16 %v573, %v573
      %v606 = vpack.c.bf16 %v574, %v574
      %v607 = vpack.c.bf16 %v575, %v575
      %v608 = vpack.c.bf16 %v576, %v576
      %v609 = vpack.c.bf16 %v577, %v577
      %v610 = vpack.c.bf16 %v578, %v578
      %v611 = vpack.c.bf16 %v579, %v579
      %v612 = vpack.c.bf16 %v580, %v580
      %v613 = vpack.c.bf16 %v581, %v581
      %v614 = vpack.c.bf16 %v582, %v582
      %v615 = vpack.c.bf16 %v583, %v583
      %v616 = vpack.c.bf16 %v584, %v584
      %v617 = vpack.c.bf16 %v585, %v585
      %v618 = vpack.c.bf16 %v586, %v586
      %v619 = vpack.c.bf16 %v587, %v587
      %v620 = vpack.c.bf16 %v588, %v588
      %v621 = vpack.c.bf16 %v589, %v589
      %v622 = vpack.c.bf16 %v590, %v590
      %v623 = vpack.c.bf16 %v591, %v591
      %v624 = vpack.c.bf16 %v592, %v592
      %v625 = vpack.c.bf16 %v593, %v593
      %v626 = vpack.c.bf16 %v594, %v594
      %v627 = vpack.c.bf16 %v595, %v595
      %v628 = vpack.c.bf16 %v596, %v596
      %v629 = vpack.c.bf16 %v597, %v597
      %v630 = vpack.c.bf16 %v598, %v598
      %v631 = vpack.c.bf16 %v599, %v599
      %v632 = vpack.c.bf16 %v600, %v600
      %v633 = vpack.c.bf16 %v601, %v601
      %v634 = vpack.c.bf16 %v602, %v602
      %v635 = vpack.c.bf16 %v603, %v603
      %v636 = vpack.c.bf16 %v604, %v604
      %637 = vst [vmem:[#allocation2 + $0x10] sm:$0xf] %v605
      %638 = vst [vmem:[#allocation2 + $0x14] sm:$0xf] %v606
      %639 = vst [vmem:[#allocation2 + $0x18] sm:$0xf] %v607
      %640 = vst [vmem:[#allocation2 + $0x1c] sm:$0xf] %v608
      %641 = vst [vmem:[#allocation2 + $0x20] sm:$0xf] %v609
      %642 = vst [vmem:[#allocation2 + $0x24] sm:$0xf] %v610
      %643 = vst [vmem:[#allocation2 + $0x28] sm:$0xf] %v611
      %644 = vst [vmem:[#allocation2 + $0x2c] sm:$0xf] %v612
      %645 = vst [vmem:[#allocation2 + $0x30] sm:$0xf] %v613
      %646 = vst [vmem:[#allocation2 + $0x34] sm:$0xf] %v614
      %647 = vst [vmem:[#allocation2 + $0x38] sm:$0xf] %v615
      %648 = vst [vmem:[#allocation2 + $0x3c] sm:$0xf] %v616
      %649 = vst [vmem:[#allocation2 + $0x40] sm:$0xf] %v617
      %650 = vst [vmem:[#allocation2 + $0x44] sm:$0xf] %v618
      %651 = vst [vmem:[#allocation2 + $0x48] sm:$0xf] %v619
      %652 = vst [vmem:[#allocation2 + $0x4c] sm:$0xf] %v620
      %653 = vst [vmem:[#allocation2 + $0x50] sm:$0xf] %v621
      %654 = vst [vmem:[#allocation2 + $0x54] sm:$0xf] %v622
      %655 = vst [vmem:[#allocation2 + $0x58] sm:$0xf] %v623
      %656 = vst [vmem:[#allocation2 + $0x5c] sm:$0xf] %v624
      %657 = vst [vmem:[#allocation2 + $0x60] sm:$0xf] %v625
      %658 = vst [vmem:[#allocation2 + $0x64] sm:$0xf] %v626
      %659 = vst [vmem:[#allocation2 + $0x68] sm:$0xf] %v627
      %660 = vst [vmem:[#allocation2 + $0x6c] sm:$0xf] %v628
      %661 = vst [vmem:[#allocation2 + $0x70] sm:$0xf] %v629
      %662 = vst [vmem:[#allocation2 + $0x74] sm:$0xf] %v630
      %663 = vst [vmem:[#allocation2 + $0x78] sm:$0xf] %v631
      %664 = vst [vmem:[#allocation2 + $0x7c] sm:$0xf] %v632
      %665 = vst [vmem:[#allocation2 + $0x80] sm:$0xf] %v633
      %666 = vst [vmem:[#allocation2 + $0x84] sm:$0xf] %v634
      %667 = vst [vmem:[#allocation2 + $0x88] sm:$0xf] %v635
      %668 = vst [vmem:[#allocation2 + $0x8c] sm:$0xf] %v636
      %v669 = vlaneseq
      %v670 = vshrl.u32 %v669, 7
      %v671 = vadd.s32 %v670, 8
      %v672 = vadd.s32 %v670, 16
      %v673 = vadd.s32 %v670, 24
      %v674 = vadd.s32 %v670, 32
      %v675 = vadd.s32 %v670, 40
      %v676 = vadd.s32 %v670, 48
      %v677 = vadd.s32 %v670, 56
      %v678 = vadd.s32 %v670, 64
      %v679 = vadd.s32 %v670, 72
      %v680 = vadd.s32 %v670, 80
      %v681 = vadd.s32 %v670, 88
      %v682 = vadd.s32 %v670, 96
      %v683 = vadd.s32 %v670, 104
      %v684 = vadd.s32 %v670, 112
      %v685 = vadd.s32 %v670, 120
      %v686 = vadd.s32 %v670, 128
      %v687 = vadd.s32 %v670, 136
      %v688 = vadd.s32 %v670, 144
      %v689 = vadd.s32 %v670, 152
      %v690 = vadd.s32 %v670, 160
      %v691 = vadd.s32 %v670, 168
      %v692 = vadd.s32 %v670, 176
      %v693 = vadd.s32 %v670, 184
      %v694 = vadd.s32 %v670, 192
      %v695 = vadd.s32 %v670, 200
      %v696 = vadd.s32 %v670, 208
      %v697 = vadd.s32 %v670, 216
      %v698 = vadd.s32 %v670, 224
      %v699 = vadd.s32 %v670, 232
      %v700 = vadd.s32 %v670, 240
      %v701 = vadd.s32 %v670, 248
      %vm702 = vcmp.lt.s32.totalorder %v670, 0
      %v703 = vsub.s32 0, %v670
      %v704 = vsel %vm702, %v703, %v670
      %v705 = vshrl.u32 %v704, 4
      %v706 = vand.u32 %v704, 15
      %v707 = vsub.s32 0, %v706
      %v708 = vsel %vm702, %v707, %v706
      %vm709 = vcmp.lt.s32.totalorder %v671, 0
      %v710 = vsub.s32 0, %v671
      %v711 = vsel %vm709, %v710, %v671
      %v712 = vshrl.u32 %v711, 4
      %v713 = vand.u32 %v711, 15
      %v714 = vsub.s32 0, %v713
      %v715 = vsel %vm709, %v714, %v713
      %vm716 = vcmp.lt.s32.totalorder %v672, 0
      %v717 = vsub.s32 0, %v672
      %v718 = vsel %vm716, %v717, %v672
      %v719 = vshrl.u32 %v718, 4
      %v720 = vand.u32 %v718, 15
      %v721 = vsub.s32 0, %v720
      %v722 = vsel %vm716, %v721, %v720
      %vm723 = vcmp.lt.s32.totalorder %v673, 0
      %v724 = vsub.s32 0, %v673
      %v725 = vsel %vm723, %v724, %v673
      %v726 = vshrl.u32 %v725, 4
      %v727 = vand.u32 %v725, 15
      %v728 = vsub.s32 0, %v727
      %v729 = vsel %vm723, %v728, %v727
      %vm730 = vcmp.lt.s32.totalorder %v674, 0
      %v731 = vsub.s32 0, %v674
      %v732 = vsel %vm730, %v731, %v674
      %v733 = vshrl.u32 %v732, 4
      %v734 = vand.u32 %v732, 15
      %v735 = vsub.s32 0, %v734
      %v736 = vsel %vm730, %v735, %v734
      %vm737 = vcmp.lt.s32.totalorder %v675, 0
      %v738 = vsub.s32 0, %v675
      %v739 = vsel %vm737, %v738, %v675
      %v740 = vshrl.u32 %v739, 4
      %v741 = vand.u32 %v739, 15
      %v742 = vsub.s32 0, %v741
      %v743 = vsel %vm737, %v742, %v741
      %vm744 = vcmp.lt.s32.totalorder %v676, 0
      %v745 = vsub.s32 0, %v676
      %v746 = vsel %vm744, %v745, %v676
      %v747 = vshrl.u32 %v746, 4
      %v748 = vand.u32 %v746, 15
      %v749 = vsub.s32 0, %v748
      %v750 = vsel %vm744, %v749, %v748
      %vm751 = vcmp.lt.s32.totalorder %v677, 0
      %v752 = vsub.s32 0, %v677
      %v753 = vsel %vm751, %v752, %v677
      %v754 = vshrl.u32 %v753, 4
      %v755 = vand.u32 %v753, 15
      %v756 = vsub.s32 0, %v755
      %v757 = vsel %vm751, %v756, %v755
      %vm758 = vcmp.lt.s32.totalorder %v678, 0
      %v759 = vsub.s32 0, %v678
      %v760 = vsel %vm758, %v759, %v678
      %v761 = vshrl.u32 %v760, 4
      %v762 = vand.u32 %v760, 15
      %v763 = vsub.s32 0, %v762
      %v764 = vsel %vm758, %v763, %v762
      %vm765 = vcmp.lt.s32.totalorder %v679, 0
      %v766 = vsub.s32 0, %v679
      %v767 = vsel %vm765, %v766, %v679
      %v768 = vshrl.u32 %v767, 4
      %v769 = vand.u32 %v767, 15
      %v770 = vsub.s32 0, %v769
      %v771 = vsel %vm765, %v770, %v769
      %vm772 = vcmp.lt.s32.totalorder %v680, 0
      %v773 = vsub.s32 0, %v680
      %v774 = vsel %vm772, %v773, %v680
      %v775 = vshrl.u32 %v774, 4
      %v776 = vand.u32 %v774, 15
      %v777 = vsub.s32 0, %v776
      %v778 = vsel %vm772, %v777, %v776
      %vm779 = vcmp.lt.s32.totalorder %v681, 0
      %v780 = vsub.s32 0, %v681
      %v781 = vsel %vm779, %v780, %v681
      %v782 = vshrl.u32 %v781, 4
      %v783 = vand.u32 %v781, 15
      %v784 = vsub.s32 0, %v783
      %v785 = vsel %vm779, %v784, %v783
      %vm786 = vcmp.lt.s32.totalorder %v682, 0
      %v787 = vsub.s32 0, %v682
      %v788 = vsel %vm786, %v787, %v682
      %v789 = vshrl.u32 %v788, 4
      %v790 = vand.u32 %v788, 15
      %v791 = vsub.s32 0, %v790
      %v792 = vsel %vm786, %v791, %v790
      %vm793 = vcmp.lt.s32.totalorder %v683, 0
      %v794 = vsub.s32 0, %v683
      %v795 = vsel %vm793, %v794, %v683
      %v796 = vshrl.u32 %v795, 4
      %v797 = vand.u32 %v795, 15
      %v798 = vsub.s32 0, %v797
      %v799 = vsel %vm793, %v798, %v797
      %vm800 = vcmp.lt.s32.totalorder %v684, 0
      %v801 = vsub.s32 0, %v684
      %v802 = vsel %vm800, %v801, %v684
      %v803 = vshrl.u32 %v802, 4
      %v804 = vand.u32 %v802, 15
      %v805 = vsub.s32 0, %v804
      %v806 = vsel %vm800, %v805, %v804
      %vm807 = vcmp.lt.s32.totalorder %v685, 0
      %v808 = vsub.s32 0, %v685
      %v809 = vsel %vm807, %v808, %v685
      %v810 = vshrl.u32 %v809, 4
      %v811 = vand.u32 %v809, 15
      %v812 = vsub.s32 0, %v811
      %v813 = vsel %vm807, %v812, %v811
      %vm814 = vcmp.lt.s32.totalorder %v686, 0
      %v815 = vsub.s32 0, %v686
      %v816 = vsel %vm814, %v815, %v686
      %v817 = vshrl.u32 %v816, 4
      %v818 = vand.u32 %v816, 15
      %v819 = vsub.s32 0, %v818
      %v820 = vsel %vm814, %v819, %v818
      %vm821 = vcmp.lt.s32.totalorder %v687, 0
      %v822 = vsub.s32 0, %v687
      %v823 = vsel %vm821, %v822, %v687
      %v824 = vshrl.u32 %v823, 4
      %v825 = vand.u32 %v823, 15
      %v826 = vsub.s32 0, %v825
      %v827 = vsel %vm821, %v826, %v825
      %vm828 = vcmp.lt.s32.totalorder %v688, 0
      %v829 = vsub.s32 0, %v688
      %v830 = vsel %vm828, %v829, %v688
      %v831 = vshrl.u32 %v830, 4
      %v832 = vand.u32 %v830, 15
      %v833 = vsub.s32 0, %v832
      %v834 = vsel %vm828, %v833, %v832
      %vm835 = vcmp.lt.s32.totalorder %v689, 0
      %v836 = vsub.s32 0, %v689
      %v837 = vsel %vm835, %v836, %v689
      %v838 = vshrl.u32 %v837, 4
      %v839 = vand.u32 %v837, 15
      %v840 = vsub.s32 0, %v839
      %v841 = vsel %vm835, %v840, %v839
      %vm842 = vcmp.lt.s32.totalorder %v690, 0
      %v843 = vsub.s32 0, %v690
      %v844 = vsel %vm842, %v843, %v690
      %v845 = vshrl.u32 %v844, 4
      %v846 = vand.u32 %v844, 15
      %v847 = vsub.s32 0, %v846
      %v848 = vsel %vm842, %v847, %v846
      %vm849 = vcmp.lt.s32.totalorder %v691, 0
      %v850 = vsub.s32 0, %v691
      %v851 = vsel %vm849, %v850, %v691
      %v852 = vshrl.u32 %v851, 4
      %v853 = vand.u32 %v851, 15
      %v854 = vsub.s32 0, %v853
      %v855 = vsel %vm849, %v854, %v853
      %vm856 = vcmp.lt.s32.totalorder %v692, 0
      %v857 = vsub.s32 0, %v692
      %v858 = vsel %vm856, %v857, %v692
      %v859 = vshrl.u32 %v858, 4
      %v860 = vand.u32 %v858, 15
      %v861 = vsub.s32 0, %v860
      %v862 = vsel %vm856, %v861, %v860
      %vm863 = vcmp.lt.s32.totalorder %v693, 0
      %v864 = vsub.s32 0, %v693
      %v865 = vsel %vm863, %v864, %v693
      %v866 = vshrl.u32 %v865, 4
      %v867 = vand.u32 %v865, 15
      %v868 = vsub.s32 0, %v867
      %v869 = vsel %vm863, %v868, %v867
      %vm870 = vcmp.lt.s32.totalorder %v694, 0
      %v871 = vsub.s32 0, %v694
      %v872 = vsel %vm870, %v871, %v694
      %v873 = vshrl.u32 %v872, 4
      %v874 = vand.u32 %v872, 15
      %v875 = vsub.s32 0, %v874
      %v876 = vsel %vm870, %v875, %v874
      %vm877 = vcmp.lt.s32.totalorder %v695, 0
      %v878 = vsub.s32 0, %v695
      %v879 = vsel %vm877, %v878, %v695
      %v880 = vshrl.u32 %v879, 4
      %v881 = vand.u32 %v879, 15
      %v882 = vsub.s32 0, %v881
      %v883 = vsel %vm877, %v882, %v881
      %vm884 = vcmp.lt.s32.totalorder %v696, 0
      %v885 = vsub.s32 0, %v696
      %v886 = vsel %vm884, %v885, %v696
      %v887 = vshrl.u32 %v886, 4
      %v888 = vand.u32 %v886, 15
      %v889 = vsub.s32 0, %v888
      %v890 = vsel %vm884, %v889, %v888
      %vm891 = vcmp.lt.s32.totalorder %v697, 0
      %v892 = vsub.s32 0, %v697
      %v893 = vsel %vm891, %v892, %v697
      %v894 = vshrl.u32 %v893, 4
      %v895 = vand.u32 %v893, 15
      %v896 = vsub.s32 0, %v895
      %v897 = vsel %vm891, %v896, %v895
      %vm898 = vcmp.lt.s32.totalorder %v698, 0
      %v899 = vsub.s32 0, %v698
      %v900 = vsel %vm898, %v899, %v698
      %v901 = vshrl.u32 %v900, 4
      %v902 = vand.u32 %v900, 15
      %v903 = vsub.s32 0, %v902
      %v904 = vsel %vm898, %v903, %v902
      %vm905 = vcmp.lt.s32.totalorder %v699, 0
      %v906 = vsub.s32 0, %v699
      %v907 = vsel %vm905, %v906, %v699
      %v908 = vshrl.u32 %v907, 4
      %v909 = vand.u32 %v907, 15
      %v910 = vsub.s32 0, %v909
      %v911 = vsel %vm905, %v910, %v909
      %vm912 = vcmp.lt.s32.totalorder %v700, 0
      %v913 = vsub.s32 0, %v700
      %v914 = vsel %vm912, %v913, %v700
      %v915 = vshrl.u32 %v914, 4
      %v916 = vand.u32 %v914, 15
      %v917 = vsub.s32 0, %v916
      %v918 = vsel %vm912, %v917, %v916
      %vm919 = vcmp.lt.s32.totalorder %v701, 0
      %v920 = vsub.s32 0, %v701
      %v921 = vsel %vm919, %v920, %v701
      %v922 = vshrl.u32 %v921, 4
      %v923 = vand.u32 %v921, 15
      %v924 = vsub.s32 0, %v923
      %v925 = vsel %vm919, %v924, %v923
      %vm926 = vcmp.ne.s32.totalorder %v708, 0
      %vm927 = vcmp.ne.s32.totalorder %v715, 0
      %vm928 = vcmp.ne.s32.totalorder %v722, 0
      %vm929 = vcmp.ne.s32.totalorder %v729, 0
      %vm930 = vcmp.ne.s32.totalorder %v736, 0
      %vm931 = vcmp.ne.s32.totalorder %v743, 0
      %vm932 = vcmp.ne.s32.totalorder %v750, 0
      %vm933 = vcmp.ne.s32.totalorder %v757, 0
      %vm934 = vcmp.ne.s32.totalorder %v764, 0
      %vm935 = vcmp.ne.s32.totalorder %v771, 0
      %vm936 = vcmp.ne.s32.totalorder %v778, 0
      %vm937 = vcmp.ne.s32.totalorder %v785, 0
      %vm938 = vcmp.ne.s32.totalorder %v792, 0
      %vm939 = vcmp.ne.s32.totalorder %v799, 0
      %vm940 = vcmp.ne.s32.totalorder %v806, 0
      %vm941 = vcmp.ne.s32.totalorder %v813, 0
      %vm942 = vcmp.ne.s32.totalorder %v820, 0
      %vm943 = vcmp.ne.s32.totalorder %v827, 0
      %vm944 = vcmp.ne.s32.totalorder %v834, 0
      %vm945 = vcmp.ne.s32.totalorder %v841, 0
      %vm946 = vcmp.ne.s32.totalorder %v848, 0
      %vm947 = vcmp.ne.s32.totalorder %v855, 0
      %vm948 = vcmp.ne.s32.totalorder %v862, 0
      %vm949 = vcmp.ne.s32.totalorder %v869, 0
      %vm950 = vcmp.ne.s32.totalorder %v876, 0
      %vm951 = vcmp.ne.s32.totalorder %v883, 0
      %vm952 = vcmp.ne.s32.totalorder %v890, 0
      %vm953 = vcmp.ne.s32.totalorder %v897, 0
      %vm954 = vcmp.ne.s32.totalorder %v904, 0
      %vm955 = vcmp.ne.s32.totalorder %v911, 0
      %vm956 = vcmp.ne.s32.totalorder %v918, 0
      %vm957 = vcmp.ne.s32.totalorder %v925, 0
      %vm958 = vcmp.lt.s32.totalorder %v708, 0
      %vm959 = vcmp.lt.s32.totalorder %v715, 0
      %vm960 = vcmp.lt.s32.totalorder %v722, 0
      %vm961 = vcmp.lt.s32.totalorder %v729, 0
      %vm962 = vcmp.lt.s32.totalorder %v736, 0
      %vm963 = vcmp.lt.s32.totalorder %v743, 0
      %vm964 = vcmp.lt.s32.totalorder %v750, 0
      %vm965 = vcmp.lt.s32.totalorder %v757, 0
      %vm966 = vcmp.lt.s32.totalorder %v764, 0
      %vm967 = vcmp.lt.s32.totalorder %v771, 0
      %vm968 = vcmp.lt.s32.totalorder %v778, 0
      %vm969 = vcmp.lt.s32.totalorder %v785, 0
      %vm970 = vcmp.lt.s32.totalorder %v792, 0
      %vm971 = vcmp.lt.s32.totalorder %v799, 0
      %vm972 = vcmp.lt.s32.totalorder %v806, 0
      %vm973 = vcmp.lt.s32.totalorder %v813, 0
      %vm974 = vcmp.lt.s32.totalorder %v820, 0
      %vm975 = vcmp.lt.s32.totalorder %v827, 0
      %vm976 = vcmp.lt.s32.totalorder %v834, 0
      %vm977 = vcmp.lt.s32.totalorder %v841, 0
      %vm978 = vcmp.lt.s32.totalorder %v848, 0
      %vm979 = vcmp.lt.s32.totalorder %v855, 0
      %vm980 = vcmp.lt.s32.totalorder %v862, 0
      %vm981 = vcmp.lt.s32.totalorder %v869, 0
      %vm982 = vcmp.lt.s32.totalorder %v876, 0
      %vm983 = vcmp.lt.s32.totalorder %v883, 0
      %vm984 = vcmp.lt.s32.totalorder %v890, 0
      %vm985 = vcmp.lt.s32.totalorder %v897, 0
      %vm986 = vcmp.lt.s32.totalorder %v904, 0
      %vm987 = vcmp.lt.s32.totalorder %v911, 0
      %vm988 = vcmp.lt.s32.totalorder %v918, 0
      %vm989 = vcmp.lt.s32.totalorder %v925, 0
      %vm990 = vmand %vm958, %vm926
      %vm991 = vmand %vm959, %vm927
      %vm992 = vmand %vm960, %vm928
      %vm993 = vmand %vm961, %vm929
      %vm994 = vmand %vm962, %vm930
      %vm995 = vmand %vm963, %vm931
      %vm996 = vmand %vm964, %vm932
      %vm997 = vmand %vm965, %vm933
      %vm998 = vmand %vm966, %vm934
      %vm999 = vmand %vm967, %vm935
      %vm1000 = vmand %vm968, %vm936
      %vm1001 = vmand %vm969, %vm937
      %vm1002 = vmand %vm970, %vm938
      %vm1003 = vmand %vm971, %vm939
      %vm1004 = vmand %vm972, %vm940
      %vm1005 = vmand %vm973, %vm941
      %vm1006 = vmand %vm974, %vm942
      %vm1007 = vmand %vm975, %vm943
      %vm1008 = vmand %vm976, %vm944
      %vm1009 = vmand %vm977, %vm945
      %vm1010 = vmand %vm978, %vm946
      %vm1011 = vmand %vm979, %vm947
      %vm1012 = vmand %vm980, %vm948
      %vm1013 = vmand %vm981, %vm949
      %vm1014 = vmand %vm982, %vm950
      %vm1015 = vmand %vm983, %vm951
      %vm1016 = vmand %vm984, %vm952
      %vm1017 = vmand %vm985, %vm953
      %vm1018 = vmand %vm986, %vm954
      %vm1019 = vmand %vm987, %vm955
      %vm1020 = vmand %vm988, %vm956
      %vm1021 = vmand %vm989, %vm957
      %v1022 = vadd.s32 %v708, 16
      %v1023 = vadd.s32 %v715, 16
      %v1024 = vadd.s32 %v722, 16
      %v1025 = vadd.s32 %v729, 16
      %v1026 = vadd.s32 %v736, 16
      %v1027 = vadd.s32 %v743, 16
      %v1028 = vadd.s32 %v750, 16
      %v1029 = vadd.s32 %v757, 16
      %v1030 = vadd.s32 %v764, 16
      %v1031 = vadd.s32 %v771, 16
      %v1032 = vadd.s32 %v778, 16
      %v1033 = vadd.s32 %v785, 16
      %v1034 = vadd.s32 %v792, 16
      %v1035 = vadd.s32 %v799, 16
      %v1036 = vadd.s32 %v806, 16
      %v1037 = vadd.s32 %v813, 16
      %v1038 = vadd.s32 %v820, 16
      %v1039 = vadd.s32 %v827, 16
      %v1040 = vadd.s32 %v834, 16
      %v1041 = vadd.s32 %v841, 16
      %v1042 = vadd.s32 %v848, 16
      %v1043 = vadd.s32 %v855, 16
      %v1044 = vadd.s32 %v862, 16
      %v1045 = vadd.s32 %v869, 16
      %v1046 = vadd.s32 %v876, 16
      %v1047 = vadd.s32 %v883, 16
      %v1048 = vadd.s32 %v890, 16
      %v1049 = vadd.s32 %v897, 16
      %v1050 = vadd.s32 %v904, 16
      %v1051 = vadd.s32 %v911, 16
      %v1052 = vadd.s32 %v918, 16
      %v1053 = vadd.s32 %v925, 16
      %v1054 = vsel %vm990, %v1022, %v708
      %v1055 = vsel %vm991, %v1023, %v715
      %v1056 = vsel %vm992, %v1024, %v722
      %v1057 = vsel %vm993, %v1025, %v729
      %v1058 = vsel %vm994, %v1026, %v736
      %v1059 = vsel %vm995, %v1027, %v743
      %v1060 = vsel %vm996, %v1028, %v750
      %v1061 = vsel %vm997, %v1029, %v757
      %v1062 = vsel %vm998, %v1030, %v764
      %v1063 = vsel %vm999, %v1031, %v771
      %v1064 = vsel %vm1000, %v1032, %v778
      %v1065 = vsel %vm1001, %v1033, %v785
      %v1066 = vsel %vm1002, %v1034, %v792
      %v1067 = vsel %vm1003, %v1035, %v799
      %v1068 = vsel %vm1004, %v1036, %v806
      %v1069 = vsel %vm1005, %v1037, %v813
      %v1070 = vsel %vm1006, %v1038, %v820
      %v1071 = vsel %vm1007, %v1039, %v827
      %v1072 = vsel %vm1008, %v1040, %v834
      %v1073 = vsel %vm1009, %v1041, %v841
      %v1074 = vsel %vm1010, %v1042, %v848
      %v1075 = vsel %vm1011, %v1043, %v855
      %v1076 = vsel %vm1012, %v1044, %v862
      %v1077 = vsel %vm1013, %v1045, %v869
      %v1078 = vsel %vm1014, %v1046, %v876
      %v1079 = vsel %vm1015, %v1047, %v883
      %v1080 = vsel %vm1016, %v1048, %v890
      %v1081 = vsel %vm1017, %v1049, %v897
      %v1082 = vsel %vm1018, %v1050, %v904
      %v1083 = vsel %vm1019, %v1051, %v911
      %v1084 = vsel %vm1020, %v1052, %v918
      %v1085 = vsel %vm1021, %v1053, %v925
      %vm1086 = vcmp.gt.s32.totalorder %v1054, 0
      %vm1087 = vcmp.gt.s32.totalorder %v1055, 0
      %vm1088 = vcmp.gt.s32.totalorder %v1056, 0
      %vm1089 = vcmp.gt.s32.totalorder %v1057, 0
      %vm1090 = vcmp.gt.s32.totalorder %v1058, 0
      %vm1091 = vcmp.gt.s32.totalorder %v1059, 0
      %vm1092 = vcmp.gt.s32.totalorder %v1060, 0
      %vm1093 = vcmp.gt.s32.totalorder %v1061, 0
      %vm1094 = vcmp.gt.s32.totalorder %v1062, 0
      %vm1095 = vcmp.gt.s32.totalorder %v1063, 0
      %vm1096 = vcmp.gt.s32.totalorder %v1064, 0
      %vm1097 = vcmp.gt.s32.totalorder %v1065, 0
      %vm1098 = vcmp.gt.s32.totalorder %v1066, 0
      %vm1099 = vcmp.gt.s32.totalorder %v1067, 0
      %vm1100 = vcmp.gt.s32.totalorder %v1068, 0
      %vm1101 = vcmp.gt.s32.totalorder %v1069, 0
      %vm1102 = vcmp.gt.s32.totalorder %v1070, 0
      %vm1103 = vcmp.gt.s32.totalorder %v1071, 0
      %vm1104 = vcmp.gt.s32.totalorder %v1072, 0
      %vm1105 = vcmp.gt.s32.totalorder %v1073, 0
      %vm1106 = vcmp.gt.s32.totalorder %v1074, 0
      %vm1107 = vcmp.gt.s32.totalorder %v1075, 0
      %vm1108 = vcmp.gt.s32.totalorder %v1076, 0
      %vm1109 = vcmp.gt.s32.totalorder %v1077, 0
      %vm1110 = vcmp.gt.s32.totalorder %v1078, 0
      %vm1111 = vcmp.gt.s32.totalorder %v1079, 0
      %vm1112 = vcmp.gt.s32.totalorder %v1080, 0
      %vm1113 = vcmp.gt.s32.totalorder %v1081, 0
      %vm1114 = vcmp.gt.s32.totalorder %v1082, 0
      %vm1115 = vcmp.gt.s32.totalorder %v1083, 0
      %vm1116 = vcmp.gt.s32.totalorder %v1084, 0
      %vm1117 = vcmp.gt.s32.totalorder %v1085, 0
      %v1118 = vsel %vm1086, 1, 0
      %v1119 = vsel %vm1087, 1, 0
      %v1120 = vsel %vm1088, 1, 0
      %v1121 = vsel %vm1089, 1, 0
      %v1122 = vsel %vm1090, 1, 0
      %v1123 = vsel %vm1091, 1, 0
      %v1124 = vsel %vm1092, 1, 0
      %v1125 = vsel %vm1093, 1, 0
      %v1126 = vsel %vm1094, 1, 0
      %v1127 = vsel %vm1095, 1, 0
      %v1128 = vsel %vm1096, 1, 0
      %v1129 = vsel %vm1097, 1, 0
      %v1130 = vsel %vm1098, 1, 0
      %v1131 = vsel %vm1099, 1, 0
      %v1132 = vsel %vm1100, 1, 0
      %v1133 = vsel %vm1101, 1, 0
      %v1134 = vsel %vm1102, 1, 0
      %v1135 = vsel %vm1103, 1, 0
      %v1136 = vsel %vm1104, 1, 0
      %v1137 = vsel %vm1105, 1, 0
      %v1138 = vsel %vm1106, 1, 0
      %v1139 = vsel %vm1107, 1, 0
      %v1140 = vsel %vm1108, 1, 0
      %v1141 = vsel %vm1109, 1, 0
      %v1142 = vsel %vm1110, 1, 0
      %v1143 = vsel %vm1111, 1, 0
      %v1144 = vsel %vm1112, 1, 0
      %v1145 = vsel %vm1113, 1, 0
      %v1146 = vsel %vm1114, 1, 0
      %v1147 = vsel %vm1115, 1, 0
      %v1148 = vsel %vm1116, 1, 0
      %v1149 = vsel %vm1117, 1, 0
      %v1150 = vcvt.s32.f32 %v1118
      %v1151 = vcvt.s32.f32 %v1119
      %v1152 = vcvt.s32.f32 %v1120
      %v1153 = vcvt.s32.f32 %v1121
      %v1154 = vcvt.s32.f32 %v1122
      %v1155 = vcvt.s32.f32 %v1123
      %v1156 = vcvt.s32.f32 %v1124
      %v1157 = vcvt.s32.f32 %v1125
      %v1158 = vcvt.s32.f32 %v1126
      %v1159 = vcvt.s32.f32 %v1127
      %v1160 = vcvt.s32.f32 %v1128
      %v1161 = vcvt.s32.f32 %v1129
      %v1162 = vcvt.s32.f32 %v1130
      %v1163 = vcvt.s32.f32 %v1131
      %v1164 = vcvt.s32.f32 %v1132
      %v1165 = vcvt.s32.f32 %v1133
      %v1166 = vcvt.s32.f32 %v1134
      %v1167 = vcvt.s32.f32 %v1135
      %v1168 = vcvt.s32.f32 %v1136
      %v1169 = vcvt.s32.f32 %v1137
      %v1170 = vcvt.s32.f32 %v1138
      %v1171 = vcvt.s32.f32 %v1139
      %v1172 = vcvt.s32.f32 %v1140
      %v1173 = vcvt.s32.f32 %v1141
      %v1174 = vcvt.s32.f32 %v1142
      %v1175 = vcvt.s32.f32 %v1143
      %v1176 = vcvt.s32.f32 %v1144
      %v1177 = vcvt.s32.f32 %v1145
      %v1178 = vcvt.s32.f32 %v1146
      %v1179 = vcvt.s32.f32 %v1147
      %v1180 = vcvt.s32.f32 %v1148
      %v1181 = vcvt.s32.f32 %v1149
      %vm1182 = vcmp.lt.s32.totalorder %v1054, 15
      %vm1183 = vcmp.lt.s32.totalorder %v1055, 15
      %vm1184 = vcmp.lt.s32.totalorder %v1056, 15
      %vm1185 = vcmp.lt.s32.totalorder %v1057, 15
      %vm1186 = vcmp.lt.s32.totalorder %v1058, 15
      %vm1187 = vcmp.lt.s32.totalorder %v1059, 15
      %vm1188 = vcmp.lt.s32.totalorder %v1060, 15
      %vm1189 = vcmp.lt.s32.totalorder %v1061, 15
      %vm1190 = vcmp.lt.s32.totalorder %v1062, 15
      %vm1191 = vcmp.lt.s32.totalorder %v1063, 15
      %vm1192 = vcmp.lt.s32.totalorder %v1064, 15
      %vm1193 = vcmp.lt.s32.totalorder %v1065, 15
      %vm1194 = vcmp.lt.s32.totalorder %v1066, 15
      %vm1195 = vcmp.lt.s32.totalorder %v1067, 15
      %vm1196 = vcmp.lt.s32.totalorder %v1068, 15
      %vm1197 = vcmp.lt.s32.totalorder %v1069, 15
      %vm1198 = vcmp.lt.s32.totalorder %v1070, 15
      %vm1199 = vcmp.lt.s32.totalorder %v1071, 15
      %vm1200 = vcmp.lt.s32.totalorder %v1072, 15
      %vm1201 = vcmp.lt.s32.totalorder %v1073, 15
      %vm1202 = vcmp.lt.s32.totalorder %v1074, 15
      %vm1203 = vcmp.lt.s32.totalorder %v1075, 15
      %vm1204 = vcmp.lt.s32.totalorder %v1076, 15
      %vm1205 = vcmp.lt.s32.totalorder %v1077, 15
      %vm1206 = vcmp.lt.s32.totalorder %v1078, 15
      %vm1207 = vcmp.lt.s32.totalorder %v1079, 15
      %vm1208 = vcmp.lt.s32.totalorder %v1080, 15
      %vm1209 = vcmp.lt.s32.totalorder %v1081, 15
      %vm1210 = vcmp.lt.s32.totalorder %v1082, 15
      %vm1211 = vcmp.lt.s32.totalorder %v1083, 15
      %vm1212 = vcmp.lt.s32.totalorder %v1084, 15
      %vm1213 = vcmp.lt.s32.totalorder %v1085, 15
      %v1214 = vsel %vm1182, 1, 0
      %v1215 = vsel %vm1183, 1, 0
      %v1216 = vsel %vm1184, 1, 0
      %v1217 = vsel %vm1185, 1, 0
      %v1218 = vsel %vm1186, 1, 0
      %v1219 = vsel %vm1187, 1, 0
      %v1220 = vsel %vm1188, 1, 0
      %v1221 = vsel %vm1189, 1, 0
      %v1222 = vsel %vm1190, 1, 0
      %v1223 = vsel %vm1191, 1, 0
      %v1224 = vsel %vm1192, 1, 0
      %v1225 = vsel %vm1193, 1, 0
      %v1226 = vsel %vm1194, 1, 0
      %v1227 = vsel %vm1195, 1, 0
      %v1228 = vsel %vm1196, 1, 0
      %v1229 = vsel %vm1197, 1, 0
      %v1230 = vsel %vm1198, 1, 0
      %v1231 = vsel %vm1199, 1, 0
      %v1232 = vsel %vm1200, 1, 0
      %v1233 = vsel %vm1201, 1, 0
      %v1234 = vsel %vm1202, 1, 0
      %v1235 = vsel %vm1203, 1, 0
      %v1236 = vsel %vm1204, 1, 0
      %v1237 = vsel %vm1205, 1, 0
      %v1238 = vsel %vm1206, 1, 0
      %v1239 = vsel %vm1207, 1, 0
      %v1240 = vsel %vm1208, 1, 0
      %v1241 = vsel %vm1209, 1, 0
      %v1242 = vsel %vm1210, 1, 0
      %v1243 = vsel %vm1211, 1, 0
      %v1244 = vsel %vm1212, 1, 0
      %v1245 = vsel %vm1213, 1, 0
      %v1246 = vcvt.s32.f32 %v1214
      %v1247 = vcvt.s32.f32 %v1215
      %v1248 = vcvt.s32.f32 %v1216
      %v1249 = vcvt.s32.f32 %v1217
      %v1250 = vcvt.s32.f32 %v1218
      %v1251 = vcvt.s32.f32 %v1219
      %v1252 = vcvt.s32.f32 %v1220
      %v1253 = vcvt.s32.f32 %v1221
      %v1254 = vcvt.s32.f32 %v1222
      %v1255 = vcvt.s32.f32 %v1223
      %v1256 = vcvt.s32.f32 %v1224
      %v1257 = vcvt.s32.f32 %v1225
      %v1258 = vcvt.s32.f32 %v1226
      %v1259 = vcvt.s32.f32 %v1227
      %v1260 = vcvt.s32.f32 %v1228
      %v1261 = vcvt.s32.f32 %v1229
      %v1262 = vcvt.s32.f32 %v1230
      %v1263 = vcvt.s32.f32 %v1231
      %v1264 = vcvt.s32.f32 %v1232
      %v1265 = vcvt.s32.f32 %v1233
      %v1266 = vcvt.s32.f32 %v1234
      %v1267 = vcvt.s32.f32 %v1235
      %v1268 = vcvt.s32.f32 %v1236
      %v1269 = vcvt.s32.f32 %v1237
      %v1270 = vcvt.s32.f32 %v1238
      %v1271 = vcvt.s32.f32 %v1239
      %v1272 = vcvt.s32.f32 %v1240
      %v1273 = vcvt.s32.f32 %v1241
      %v1274 = vcvt.s32.f32 %v1242
      %v1275 = vcvt.s32.f32 %v1243
      %v1276 = vcvt.s32.f32 %v1244
      %v1277 = vcvt.s32.f32 %v1245
      %v1278 = vld [vmem:[#allocation2 + $0x8] sm:$0xf]
      %v1279 = vld [vmem:[#allocation2 + $0xc] sm:$0xf]
      %v1280 = vld [vmem:[#allocation2 + $0x10] sm:$0xf]
      %v1281 = vld [vmem:[#allocation2 + $0x14] sm:$0xf]
      %v1282 = vld [vmem:[#allocation2 + $0x18] sm:$0xf]
      %v1283 = vld [vmem:[#allocation2 + $0x1c] sm:$0xf]
      %v1284 = vld [vmem:[#allocation2 + $0x20] sm:$0xf]
      %v1285 = vld [vmem:[#allocation2 + $0x24] sm:$0xf]
      %v1286 = vld [vmem:[#allocation2 + $0x28] sm:$0xf]
      %v1287 = vld [vmem:[#allocation2 + $0x2c] sm:$0xf]
      %v1288 = vld [vmem:[#allocation2 + $0x30] sm:$0xf]
      %v1289 = vld [vmem:[#allocation2 + $0x34] sm:$0xf]
      %v1290 = vld [vmem:[#allocation2 + $0x38] sm:$0xf]
      %v1291 = vld [vmem:[#allocation2 + $0x3c] sm:$0xf]
      %v1292 = vld [vmem:[#allocation2 + $0x40] sm:$0xf]
      %v1293 = vld [vmem:[#allocation2 + $0x44] sm:$0xf]
      %v1294 = vld [vmem:[#allocation2 + $0x48] sm:$0xf]
      %v1295 = vld [vmem:[#allocation2 + $0x4c] sm:$0xf]
      %v1296 = vld [vmem:[#allocation2 + $0x50] sm:$0xf]
      %v1297 = vld [vmem:[#allocation2 + $0x54] sm:$0xf]
      %v1298 = vld [vmem:[#allocation2 + $0x58] sm:$0xf]
      %v1299 = vld [vmem:[#allocation2 + $0x5c] sm:$0xf]
      %v1300 = vld [vmem:[#allocation2 + $0x60] sm:$0xf]
      %v1301 = vld [vmem:[#allocation2 + $0x64] sm:$0xf]
      %v1302 = vld [vmem:[#allocation2 + $0x68] sm:$0xf]
      %v1303 = vld [vmem:[#allocation2 + $0x6c] sm:$0xf]
      %v1304 = vld [vmem:[#allocation2 + $0x70] sm:$0xf]
      %v1305 = vld [vmem:[#allocation2 + $0x74] sm:$0xf]
      %v1306 = vld [vmem:[#allocation2 + $0x78] sm:$0xf]
      %v1307 = vld [vmem:[#allocation2 + $0x7c] sm:$0xf]
      %v1308 = vld [vmem:[#allocation2 + $0x80] sm:$0xf]
      %v1309 = vld [vmem:[#allocation2 + $0x84] sm:$0xf]
      %s1310 = scalar_lea.vmem %s2, 64
      %v1311 = vld [vmem:[%s1310] sm:$0xf]
      %v1312 = vld [vmem:[%s1310 + $0x4] sm:$0xf]
      %v1313 = vld [vmem:[%s1310 + $0x8] sm:$0xf]
      %v1314 = vld [vmem:[%s1310 + $0xc] sm:$0xf]
      %v1315 = vld [vmem:[%s1310 + $0x10] sm:$0xf]
      %v1316 = vld [vmem:[%s1310 + $0x14] sm:$0xf]
      %v1317 = vld [vmem:[%s1310 + $0x18] sm:$0xf]
      %v1318 = vld [vmem:[%s1310 + $0x1c] sm:$0xf]
      %v1319 = vld [vmem:[%s1310 + $0x20] sm:$0xf]
      %v1320 = vld [vmem:[%s1310 + $0x24] sm:$0xf]
      %v1321 = vld [vmem:[%s1310 + $0x28] sm:$0xf]
      %v1322 = vld [vmem:[%s1310 + $0x2c] sm:$0xf]
      %v1323 = vld [vmem:[%s1310 + $0x30] sm:$0xf]
      %v1324 = vld [vmem:[%s1310 + $0x34] sm:$0xf]
      %v1325 = vld [vmem:[%s1310 + $0x38] sm:$0xf]
      %v1326 = vld [vmem:[%s1310 + $0x3c] sm:$0xf]
      %v1327 = vld [vmem:[#allocation2 + $0x88] sm:$0xf]
      %v1328 = vld [vmem:[#allocation2 + $0x8c] sm:$0xf]
      %s1329 = scalar_lea.vmem %s2, 256
      %v1330 = vld [vmem:[%s1329] sm:$0xf]
      %v1331 = vld [vmem:[%s1329 + $0x4] sm:$0xf]
      %v1332 = vld [vmem:[%s1329 + $0x8] sm:$0xf]
      %v1333 = vld [vmem:[%s1329 + $0xc] sm:$0xf]
      %v1334 = vld [vmem:[%s1329 + $0x10] sm:$0xf]
      %v1335 = vld [vmem:[%s1329 + $0x14] sm:$0xf]
      %v1336 = vld [vmem:[%s1329 + $0x18] sm:$0xf]
      %v1337 = vld [vmem:[%s1329 + $0x1c] sm:$0xf]
      %v1338 = vld [vmem:[%s1329 + $0x20] sm:$0xf]
      %v1339 = vld [vmem:[%s1329 + $0x24] sm:$0xf]
      %v1340 = vld [vmem:[%s1329 + $0x28] sm:$0xf]
      %v1341 = vld [vmem:[%s1329 + $0x2c] sm:$0xf]
      %v1342 = vld [vmem:[%s1329 + $0x30] sm:$0xf]
      %v1343 = vld [vmem:[%s1329 + $0x34] sm:$0xf]
      %v1344 = vld [vmem:[%s1329 + $0x38] sm:$0xf]
      %v1345 = vld [vmem:[%s1329 + $0x3c] sm:$0xf]
      %v1378 = vunpack.c.l.b16 %v1280
      %v1379 = vunpack.c.l.b16 %v1281
      %v1380 = vunpack.c.l.b16 %v1282
      %v1381 = vunpack.c.l.b16 %v1283
      %v1382 = vunpack.c.l.b16 %v1284
      %v1383 = vunpack.c.l.b16 %v1285
      %v1384 = vunpack.c.l.b16 %v1286
      %v1385 = vunpack.c.l.b16 %v1287
      %v1386 = vunpack.c.l.b16 %v1288
      %v1387 = vunpack.c.l.b16 %v1289
      %v1388 = vunpack.c.l.b16 %v1290
      %v1389 = vunpack.c.l.b16 %v1291
      %v1390 = vunpack.c.l.b16 %v1292
      %v1391 = vunpack.c.l.b16 %v1293
      %v1392 = vunpack.c.l.b16 %v1294
      %v1393 = vunpack.c.l.b16 %v1295
      %v1394 = vunpack.c.l.b16 %v1296
      %v1395 = vunpack.c.l.b16 %v1297
      %v1396 = vunpack.c.l.b16 %v1298
      %v1397 = vunpack.c.l.b16 %v1299
      %v1398 = vunpack.c.l.b16 %v1300
      %v1399 = vunpack.c.l.b16 %v1301
      %v1400 = vunpack.c.l.b16 %v1302
      %v1401 = vunpack.c.l.b16 %v1303
      %v1402 = vunpack.c.l.b16 %v1304
      %v1403 = vunpack.c.l.b16 %v1305
      %v1404 = vunpack.c.l.b16 %v1306
      %v1405 = vunpack.c.l.b16 %v1307
      %v1406 = vunpack.c.l.b16 %v1308
      %v1407 = vunpack.c.l.b16 %v1309
      %v1408 = vunpack.c.l.b16 %v1327
      %v1409 = vunpack.c.l.b16 %v1328
      %v1410 = vpack.c.b16 %v1379, %v1378
      %v1411 = vpack.c.b16 %v1381, %v1380
      %v1412 = vpack.c.b16 %v1383, %v1382
      %v1413 = vpack.c.b16 %v1385, %v1384
      %v1414 = vpack.c.b16 %v1387, %v1386
      %v1415 = vpack.c.b16 %v1389, %v1388
      %v1416 = vpack.c.b16 %v1391, %v1390
      %v1417 = vpack.c.b16 %v1393, %v1392
      %v1418 = vpack.c.b16 %v1395, %v1394
      %v1419 = vpack.c.b16 %v1397, %v1396
      %v1420 = vpack.c.b16 %v1399, %v1398
      %v1421 = vpack.c.b16 %v1401, %v1400
      %v1422 = vpack.c.b16 %v1403, %v1402
      %v1423 = vpack.c.b16 %v1405, %v1404
      %v1424 = vpack.c.b16 %v1407, %v1406
      %v1425 = vpack.c.b16 %v1409, %v1408
      %v1458 = vunpack.c.l.b16 %v1330
      %v1459 = vunpack.c.l.b16 %v1331
      %v1460 = vunpack.c.l.b16 %v1332
      %v1461 = vunpack.c.l.b16 %v1333
      %v1462 = vunpack.c.l.b16 %v1334
      %v1463 = vunpack.c.l.b16 %v1335
      %v1464 = vunpack.c.l.b16 %v1336
      %v1465 = vunpack.c.l.b16 %v1337
      %v1466 = vunpack.c.l.b16 %v1338
      %v1467 = vunpack.c.l.b16 %v1339
      %v1468 = vunpack.c.l.b16 %v1340
      %v1469 = vunpack.c.l.b16 %v1341
      %v1470 = vunpack.c.l.b16 %v1342
      %v1471 = vunpack.c.l.b16 %v1343
      %v1472 = vunpack.c.l.b16 %v1344
      %v1473 = vunpack.c.l.b16 %v1345
      %v1474 = vpack.c.b16 %v1459, %v1458
      %v1475 = vpack.c.b16 %v1461, %v1460
      %v1476 = vpack.c.b16 %v1463, %v1462
      %v1477 = vpack.c.b16 %v1465, %v1464
      %v1478 = vpack.c.b16 %v1467, %v1466
      %v1479 = vpack.c.b16 %v1469, %v1468
      %v1480 = vpack.c.b16 %v1471, %v1470
      %v1481 = vpack.c.b16 %v1473, %v1472
      %1490 = vmatpush.bf16.msra.mxu0 %v1481
      %1491 = vmatpush.bf16.msra.mxu0 %v1480
      %1492 = vmatpush.bf16.msra.mxu0 %v1479
      %1493 = vmatpush.bf16.msra.mxu0 %v1478
      %1494 = vmatpush.bf16.msra.mxu0 %v1477
      %1495 = vmatpush.bf16.msra.mxu0 %v1476
      %1496 = vmatpush.bf16.msra.mxu0 %v1475
      %1497 = vmatpush.bf16.msra.mxu0 %v1474
      %1498 = vmatmul.bf16.gmra.mxu0 %v1410
      %v1499 = vpop.f32.mrf.mxu0
      %v1500 = vadd.f32 0.0, %v1499
      %v1501 = vpop.f32.mrf.mxu0
      %v1502 = vadd.f32 0.0, %v1501
      %1503 = vmatmul.bf16.gmra.mxu0 %v1411
      %v1504 = vpop.f32.mrf.mxu0
      %v1505 = vadd.f32 0.0, %v1504
      %v1506 = vpop.f32.mrf.mxu0
      %v1507 = vadd.f32 0.0, %v1506
      %1508 = vmatmul.bf16.gmra.mxu0 %v1412
      %v1509 = vpop.f32.mrf.mxu0
      %v1510 = vadd.f32 0.0, %v1509
      %v1511 = vpop.f32.mrf.mxu0
      %v1512 = vadd.f32 0.0, %v1511
      %1513 = vmatmul.bf16.gmra.mxu0 %v1413
      %v1514 = vpop.f32.mrf.mxu0
      %v1515 = vadd.f32 0.0, %v1514
      %v1516 = vpop.f32.mrf.mxu0
      %v1517 = vadd.f32 0.0, %v1516
      %1518 = vmatmul.bf16.gmra.mxu0 %v1414
      %v1519 = vpop.f32.mrf.mxu0
      %v1520 = vadd.f32 0.0, %v1519
      %v1521 = vpop.f32.mrf.mxu0
      %v1522 = vadd.f32 0.0, %v1521
      %1523 = vmatmul.bf16.gmra.mxu0 %v1415
      %v1524 = vpop.f32.mrf.mxu0
      %v1525 = vadd.f32 0.0, %v1524
      %v1526 = vpop.f32.mrf.mxu0
      %v1527 = vadd.f32 0.0, %v1526
      %1528 = vmatmul.bf16.gmra.mxu0 %v1416
      %v1529 = vpop.f32.mrf.mxu0
      %v1530 = vadd.f32 0.0, %v1529
      %v1531 = vpop.f32.mrf.mxu0
      %v1532 = vadd.f32 0.0, %v1531
      %1533 = vmatmul.bf16.gmra.mxu0 %v1417
      %v1534 = vpop.f32.mrf.mxu0
      %v1535 = vadd.f32 0.0, %v1534
      %v1536 = vpop.f32.mrf.mxu0
      %v1537 = vadd.f32 0.0, %v1536
      %1538 = vmatmul.bf16.gmra.mxu0 %v1418
      %v1539 = vpop.f32.mrf.mxu0
      %v1540 = vadd.f32 0.0, %v1539
      %v1541 = vpop.f32.mrf.mxu0
      %v1542 = vadd.f32 0.0, %v1541
      %1543 = vmatmul.bf16.gmra.mxu0 %v1419
      %v1544 = vpop.f32.mrf.mxu0
      %v1545 = vadd.f32 0.0, %v1544
      %v1546 = vpop.f32.mrf.mxu0
      %v1547 = vadd.f32 0.0, %v1546
      %1548 = vmatmul.bf16.gmra.mxu0 %v1420
      %v1549 = vpop.f32.mrf.mxu0
      %v1550 = vadd.f32 0.0, %v1549
      %v1551 = vpop.f32.mrf.mxu0
      %v1552 = vadd.f32 0.0, %v1551
      %1553 = vmatmul.bf16.gmra.mxu0 %v1421
      %v1554 = vpop.f32.mrf.mxu0
      %v1555 = vadd.f32 0.0, %v1554
      %v1556 = vpop.f32.mrf.mxu0
      %v1557 = vadd.f32 0.0, %v1556
      %1558 = vmatmul.bf16.gmra.mxu0 %v1422
      %v1559 = vpop.f32.mrf.mxu0
      %v1560 = vadd.f32 0.0, %v1559
      %v1561 = vpop.f32.mrf.mxu0
      %v1562 = vadd.f32 0.0, %v1561
      %1563 = vmatmul.bf16.gmra.mxu0 %v1423
      %v1564 = vpop.f32.mrf.mxu0
      %v1565 = vadd.f32 0.0, %v1564
      %v1566 = vpop.f32.mrf.mxu0
      %v1567 = vadd.f32 0.0, %v1566
      %1568 = vmatmul.bf16.gmra.mxu0 %v1424
      %v1569 = vpop.f32.mrf.mxu0
      %v1570 = vadd.f32 0.0, %v1569
      %v1571 = vpop.f32.mrf.mxu0
      %v1572 = vadd.f32 0.0, %v1571
      %1573 = vmatmul.bf16.gmra.mxu0 %v1425
      %v1574 = vpop.f32.mrf.mxu0
      %v1575 = vadd.f32 0.0, %v1574
      %v1576 = vpop.f32.mrf.mxu0
      %v1577 = vadd.f32 0.0, %v1576
      %1578 = vdwg.mxu0
      %v1581 = vunpack.c.l.b16 %v1278
      %v1582 = vunpack.c.l.b16 %v1279
      %v1583 = vpack.c.b16 %v1582, %v1581
      %v1601 = vunpack.c.l.b16 %v1311
      %v1602 = vunpack.c.l.b16 %v1312
      %v1603 = vunpack.c.l.b16 %v1313
      %v1604 = vunpack.c.l.b16 %v1314
      %v1605 = vunpack.c.l.b16 %v1315
      %v1606 = vunpack.c.l.b16 %v1316
      %v1607 = vunpack.c.l.b16 %v1317
      %v1608 = vunpack.c.l.b16 %v1318
      %v1609 = vunpack.c.l.b16 %v1319
      %v1610 = vunpack.c.l.b16 %v1320
      %v1611 = vunpack.c.l.b16 %v1321
      %v1612 = vunpack.c.l.b16 %v1322
      %v1613 = vunpack.c.l.b16 %v1323
      %v1614 = vunpack.c.l.b16 %v1324
      %v1615 = vunpack.c.l.b16 %v1325
      %v1616 = vunpack.c.l.b16 %v1326
      %v1617 = vpack.c.b16 %v1602, %v1601
      %v1618 = vpack.c.b16 %v1604, %v1603
      %v1619 = vpack.c.b16 %v1606, %v1605
      %v1620 = vpack.c.b16 %v1608, %v1607
      %v1621 = vpack.c.b16 %v1610, %v1609
      %v1622 = vpack.c.b16 %v1612, %v1611
      %v1623 = vpack.c.b16 %v1614, %v1613
      %v1624 = vpack.c.b16 %v1616, %v1615
      %1633 = vmatpush.bf16.msra.mxu0 %v1624
      %1634 = vmatpush.bf16.msra.mxu0 %v1623
      %1635 = vmatpush.bf16.msra.mxu0 %v1622
      %1636 = vmatpush.bf16.msra.mxu0 %v1621
      %1637 = vmatpush.bf16.msra.mxu0 %v1620
      %1638 = vmatpush.bf16.msra.mxu0 %v1619
      %1639 = vmatpush.bf16.msra.mxu0 %v1618
      %1640 = vmatpush.bf16.msra.mxu0 %v1617
      %1641 = vmatmul.bf16.gmra.mxu0 %v1583
      %v1642 = vpop.f32.mrf.mxu0
      %v1643 = vadd.f32 %v1500, %v1642
      %v1644 = vpop.f32.mrf.mxu0
      %v1645 = vadd.f32 %v1502, %v1644
      %1646 = vmatmul.bf16.gmra.mxu0 %v1410
      %v1647 = vpop.f32.mrf.mxu0
      %v1648 = vadd.f32 %v1505, %v1647
      %v1649 = vpop.f32.mrf.mxu0
      %v1650 = vadd.f32 %v1507, %v1649
      %1651 = vmatmul.bf16.gmra.mxu0 %v1411
      %v1652 = vpop.f32.mrf.mxu0
      %v1653 = vadd.f32 %v1510, %v1652
      %v1654 = vpop.f32.mrf.mxu0
      %v1655 = vadd.f32 %v1512, %v1654
      %1656 = vmatmul.bf16.gmra.mxu0 %v1412
      %v1657 = vpop.f32.mrf.mxu0
      %v1658 = vadd.f32 %v1515, %v1657
      %v1659 = vpop.f32.mrf.mxu0
      %v1660 = vadd.f32 %v1517, %v1659
      %1661 = vmatmul.bf16.gmra.mxu0 %v1413
      %v1662 = vpop.f32.mrf.mxu0
      %v1663 = vadd.f32 %v1520, %v1662
      %v1664 = vpop.f32.mrf.mxu0
      %v1665 = vadd.f32 %v1522, %v1664
      %1666 = vmatmul.bf16.gmra.mxu0 %v1414
      %v1667 = vpop.f32.mrf.mxu0
      %v1668 = vadd.f32 %v1525, %v1667
      %v1669 = vpop.f32.mrf.mxu0
      %v1670 = vadd.f32 %v1527, %v1669
      %1671 = vmatmul.bf16.gmra.mxu0 %v1415
      %v1672 = vpop.f32.mrf.mxu0
      %v1673 = vadd.f32 %v1530, %v1672
      %v1674 = vpop.f32.mrf.mxu0
      %v1675 = vadd.f32 %v1532, %v1674
      %1676 = vmatmul.bf16.gmra.mxu0 %v1416
      %v1677 = vpop.f32.mrf.mxu0
      %v1678 = vadd.f32 %v1535, %v1677
      %v1679 = vpop.f32.mrf.mxu0
      %v1680 = vadd.f32 %v1537, %v1679
      %1681 = vmatmul.bf16.gmra.mxu0 %v1417
      %v1682 = vpop.f32.mrf.mxu0
      %v1683 = vadd.f32 %v1540, %v1682
      %v1684 = vpop.f32.mrf.mxu0
      %v1685 = vadd.f32 %v1542, %v1684
      %1686 = vmatmul.bf16.gmra.mxu0 %v1418
      %v1687 = vpop.f32.mrf.mxu0
      %v1688 = vadd.f32 %v1545, %v1687
      %v1689 = vpop.f32.mrf.mxu0
      %v1690 = vadd.f32 %v1547, %v1689
      %1691 = vmatmul.bf16.gmra.mxu0 %v1419
      %v1692 = vpop.f32.mrf.mxu0
      %v1693 = vadd.f32 %v1550, %v1692
      %v1694 = vpop.f32.mrf.mxu0
      %v1695 = vadd.f32 %v1552, %v1694
      %1696 = vmatmul.bf16.gmra.mxu0 %v1420
      %v1697 = vpop.f32.mrf.mxu0
      %v1698 = vadd.f32 %v1555, %v1697
      %v1699 = vpop.f32.mrf.mxu0
      %v1700 = vadd.f32 %v1557, %v1699
      %1701 = vmatmul.bf16.gmra.mxu0 %v1421
      %v1702 = vpop.f32.mrf.mxu0
      %v1703 = vadd.f32 %v1560, %v1702
      %v1704 = vpop.f32.mrf.mxu0
      %v1705 = vadd.f32 %v1562, %v1704
      %1706 = vmatmul.bf16.gmra.mxu0 %v1422
      %v1707 = vpop.f32.mrf.mxu0
      %v1708 = vadd.f32 %v1565, %v1707
      %v1709 = vpop.f32.mrf.mxu0
      %v1710 = vadd.f32 %v1567, %v1709
      %1711 = vmatmul.bf16.gmra.mxu0 %v1423
      %v1712 = vpop.f32.mrf.mxu0
      %v1713 = vadd.f32 %v1570, %v1712
      %v1714 = vpop.f32.mrf.mxu0
      %v1715 = vadd.f32 %v1572, %v1714
      %1716 = vmatmul.bf16.gmra.mxu0 %v1424
      %v1717 = vpop.f32.mrf.mxu0
      %v1718 = vadd.f32 %v1575, %v1717
      %v1719 = vpop.f32.mrf.mxu0
      %v1720 = vadd.f32 %v1577, %v1719
      %1721 = vdwg.mxu0
      %v1722 = vld [vmem:[#allocation2 + $0x18] sm:$0xf]
      %v1723 = vld [vmem:[#allocation2 + $0x1c] sm:$0xf]
      %v1724 = vld [vmem:[#allocation2 + $0x20] sm:$0xf]
      %v1725 = vld [vmem:[#allocation2 + $0x24] sm:$0xf]
      %v1726 = vld [vmem:[#allocation2 + $0x28] sm:$0xf]
      %v1727 = vld [vmem:[#allocation2 + $0x2c] sm:$0xf]
      %v1728 = vld [vmem:[#allocation2 + $0x30] sm:$0xf]
      %v1729 = vld [vmem:[#allocation2 + $0x34] sm:$0xf]
      %v1730 = vld [vmem:[#allocation2 + $0x38] sm:$0xf]
      %v1731 = vld [vmem:[#allocation2 + $0x3c] sm:$0xf]
      %v1732 = vld [vmem:[#allocation2 + $0x40] sm:$0xf]
      %v1733 = vld [vmem:[#allocation2 + $0x44] sm:$0xf]
      %v1734 = vld [vmem:[#allocation2 + $0x48] sm:$0xf]
      %v1735 = vld [vmem:[#allocation2 + $0x4c] sm:$0xf]
      %v1736 = vld [vmem:[#allocation2 + $0x50] sm:$0xf]
      %v1737 = vld [vmem:[#allocation2 + $0x54] sm:$0xf]
      %v1738 = vld [vmem:[#allocation2 + $0x58] sm:$0xf]
      %v1739 = vld [vmem:[#allocation2 + $0x5c] sm:$0xf]
      %v1740 = vld [vmem:[#allocation2 + $0x60] sm:$0xf]
      %v1741 = vld [vmem:[#allocation2 + $0x64] sm:$0xf]
      %v1742 = vld [vmem:[#allocation2 + $0x68] sm:$0xf]
      %v1743 = vld [vmem:[#allocation2 + $0x6c] sm:$0xf]
      %v1744 = vld [vmem:[#allocation2 + $0x70] sm:$0xf]
      %v1745 = vld [vmem:[#allocation2 + $0x74] sm:$0xf]
      %v1746 = vld [vmem:[#allocation2 + $0x78] sm:$0xf]
      %v1747 = vld [vmem:[#allocation2 + $0x7c] sm:$0xf]
      %v1748 = vld [vmem:[#allocation2 + $0x80] sm:$0xf]
      %v1749 = vld [vmem:[#allocation2 + $0x84] sm:$0xf]
      %v1750 = vld [vmem:[#allocation2 + $0x88] sm:$0xf]
      %v1751 = vld [vmem:[#allocation2 + $0x8c] sm:$0xf]
      %v1752 = vld [vmem:[#allocation2 + $0x90] sm:$0xf]
      %v1753 = vld [vmem:[#allocation2 + $0x94] sm:$0xf]
      %s1754 = scalar_lea.vmem %s2, 448
      %v1755 = vld [vmem:[%s1754] sm:$0xf]
      %v1756 = vld [vmem:[%s1754 + $0x4] sm:$0xf]
      %v1757 = vld [vmem:[%s1754 + $0x8] sm:$0xf]
      %v1758 = vld [vmem:[%s1754 + $0xc] sm:$0xf]
      %v1759 = vld [vmem:[%s1754 + $0x10] sm:$0xf]
      %v1760 = vld [vmem:[%s1754 + $0x14] sm:$0xf]
      %v1761 = vld [vmem:[%s1754 + $0x18] sm:$0xf]
      %v1762 = vld [vmem:[%s1754 + $0x1c] sm:$0xf]
      %v1763 = vld [vmem:[%s1754 + $0x20] sm:$0xf]
      %v1764 = vld [vmem:[%s1754 + $0x24] sm:$0xf]
      %v1765 = vld [vmem:[%s1754 + $0x28] sm:$0xf]
      %v1766 = vld [vmem:[%s1754 + $0x2c] sm:$0xf]
      %v1767 = vld [vmem:[%s1754 + $0x30] sm:$0xf]
      %v1768 = vld [vmem:[%s1754 + $0x34] sm:$0xf]
      %v1769 = vld [vmem:[%s1754 + $0x38] sm:$0xf]
      %v1770 = vld [vmem:[%s1754 + $0x3c] sm:$0xf]
      %v1803 = vunpack.c.l.b16 %v1722
      %v1804 = vunpack.c.l.b16 %v1723
      %v1805 = vunpack.c.l.b16 %v1724
      %v1806 = vunpack.c.l.b16 %v1725
      %v1807 = vunpack.c.l.b16 %v1726
      %v1808 = vunpack.c.l.b16 %v1727
      %v1809 = vunpack.c.l.b16 %v1728
      %v1810 = vunpack.c.l.b16 %v1729
      %v1811 = vunpack.c.l.b16 %v1730
      %v1812 = vunpack.c.l.b16 %v1731
      %v1813 = vunpack.c.l.b16 %v1732
      %v1814 = vunpack.c.l.b16 %v1733
      %v1815 = vunpack.c.l.b16 %v1734
      %v1816 = vunpack.c.l.b16 %v1735
      %v1817 = vunpack.c.l.b16 %v1736
      %v1818 = vunpack.c.l.b16 %v1737
      %v1819 = vunpack.c.l.b16 %v1738
      %v1820 = vunpack.c.l.b16 %v1739
      %v1821 = vunpack.c.l.b16 %v1740
      %v1822 = vunpack.c.l.b16 %v1741
      %v1823 = vunpack.c.l.b16 %v1742
      %v1824 = vunpack.c.l.b16 %v1743
      %v1825 = vunpack.c.l.b16 %v1744
      %v1826 = vunpack.c.l.b16 %v1745
      %v1827 = vunpack.c.l.b16 %v1746
      %v1828 = vunpack.c.l.b16 %v1747
      %v1829 = vunpack.c.l.b16 %v1748
      %v1830 = vunpack.c.l.b16 %v1749
      %v1831 = vunpack.c.l.b16 %v1750
      %v1832 = vunpack.c.l.b16 %v1751
      %v1833 = vunpack.c.l.b16 %v1752
      %v1834 = vunpack.c.l.b16 %v1753
      %v1835 = vpack.c.b16 %v1804, %v1803
      %v1836 = vpack.c.b16 %v1806, %v1805
      %v1837 = vpack.c.b16 %v1808, %v1807
      %v1838 = vpack.c.b16 %v1810, %v1809
      %v1839 = vpack.c.b16 %v1812, %v1811
      %v1840 = vpack.c.b16 %v1814, %v1813
      %v1841 = vpack.c.b16 %v1816, %v1815
      %v1842 = vpack.c.b16 %v1818, %v1817
      %v1843 = vpack.c.b16 %v1820, %v1819
      %v1844 = vpack.c.b16 %v1822, %v1821
      %v1845 = vpack.c.b16 %v1824, %v1823
      %v1846 = vpack.c.b16 %v1826, %v1825
      %v1847 = vpack.c.b16 %v1828, %v1827
      %v1848 = vpack.c.b16 %v1830, %v1829
      %v1849 = vpack.c.b16 %v1832, %v1831
      %v1850 = vpack.c.b16 %v1834, %v1833
      %v1883 = vunpack.c.l.b16 %v1755
      %v1884 = vunpack.c.l.b16 %v1756
      %v1885 = vunpack.c.l.b16 %v1757
      %v1886 = vunpack.c.l.b16 %v1758
      %v1887 = vunpack.c.l.b16 %v1759
      %v1888 = vunpack.c.l.b16 %v1760
      %v1889 = vunpack.c.l.b16 %v1761
      %v1890 = vunpack.c.l.b16 %v1762
      %v1891 = vunpack.c.l.b16 %v1763
      %v1892 = vunpack.c.l.b16 %v1764
      %v1893 = vunpack.c.l.b16 %v1765
      %v1894 = vunpack.c.l.b16 %v1766
      %v1895 = vunpack.c.l.b16 %v1767
      %v1896 = vunpack.c.l.b16 %v1768
      %v1897 = vunpack.c.l.b16 %v1769
      %v1898 = vunpack.c.l.b16 %v1770
      %v1899 = vpack.c.b16 %v1884, %v1883
      %v1900 = vpack.c.b16 %v1886, %v1885
      %v1901 = vpack.c.b16 %v1888, %v1887
      %v1902 = vpack.c.b16 %v1890, %v1889
      %v1903 = vpack.c.b16 %v1892, %v1891
      %v1904 = vpack.c.b16 %v1894, %v1893
      %v1905 = vpack.c.b16 %v1896, %v1895
      %v1906 = vpack.c.b16 %v1898, %v1897
      %1915 = vmatpush.bf16.msra.mxu0 %v1906
      %1916 = vmatpush.bf16.msra.mxu0 %v1905
      %1917 = vmatpush.bf16.msra.mxu0 %v1904
      %1918 = vmatpush.bf16.msra.mxu0 %v1903
      %1919 = vmatpush.bf16.msra.mxu0 %v1902
      %1920 = vmatpush.bf16.msra.mxu0 %v1901
      %1921 = vmatpush.bf16.msra.mxu0 %v1900
      %1922 = vmatpush.bf16.msra.mxu0 %v1899
      %1923 = vmatmul.bf16.gmra.mxu0 %v1835
      %v1924 = vpop.f32.mrf.mxu0
      %v1925 = vadd.f32 0.0, %v1924
      %v1926 = vpop.f32.mrf.mxu0
      %v1927 = vadd.f32 0.0, %v1926
      %1928 = vmatmul.bf16.gmra.mxu0 %v1836
      %v1929 = vpop.f32.mrf.mxu0
      %v1930 = vadd.f32 0.0, %v1929
      %v1931 = vpop.f32.mrf.mxu0
      %v1932 = vadd.f32 0.0, %v1931
      %1933 = vmatmul.bf16.gmra.mxu0 %v1837
      %v1934 = vpop.f32.mrf.mxu0
      %v1935 = vadd.f32 0.0, %v1934
      %v1936 = vpop.f32.mrf.mxu0
      %v1937 = vadd.f32 0.0, %v1936
      %1938 = vmatmul.bf16.gmra.mxu0 %v1838
      %v1939 = vpop.f32.mrf.mxu0
      %v1940 = vadd.f32 0.0, %v1939
      %v1941 = vpop.f32.mrf.mxu0
      %v1942 = vadd.f32 0.0, %v1941
      %1943 = vmatmul.bf16.gmra.mxu0 %v1839
      %v1944 = vpop.f32.mrf.mxu0
      %v1945 = vadd.f32 0.0, %v1944
      %v1946 = vpop.f32.mrf.mxu0
      %v1947 = vadd.f32 0.0, %v1946
      %1948 = vmatmul.bf16.gmra.mxu0 %v1840
      %v1949 = vpop.f32.mrf.mxu0
      %v1950 = vadd.f32 0.0, %v1949
      %v1951 = vpop.f32.mrf.mxu0
      %v1952 = vadd.f32 0.0, %v1951
      %1953 = vmatmul.bf16.gmra.mxu0 %v1841
      %v1954 = vpop.f32.mrf.mxu0
      %v1955 = vadd.f32 0.0, %v1954
      %v1956 = vpop.f32.mrf.mxu0
      %v1957 = vadd.f32 0.0, %v1956
      %1958 = vmatmul.bf16.gmra.mxu0 %v1842
      %v1959 = vpop.f32.mrf.mxu0
      %v1960 = vadd.f32 0.0, %v1959
      %v1961 = vpop.f32.mrf.mxu0
      %v1962 = vadd.f32 0.0, %v1961
      %1963 = vmatmul.bf16.gmra.mxu0 %v1843
      %v1964 = vpop.f32.mrf.mxu0
      %v1965 = vadd.f32 0.0, %v1964
      %v1966 = vpop.f32.mrf.mxu0
      %v1967 = vadd.f32 0.0, %v1966
      %1968 = vmatmul.bf16.gmra.mxu0 %v1844
      %v1969 = vpop.f32.mrf.mxu0
      %v1970 = vadd.f32 0.0, %v1969
      %v1971 = vpop.f32.mrf.mxu0
      %v1972 = vadd.f32 0.0, %v1971
      %1973 = vmatmul.bf16.gmra.mxu0 %v1845
      %v1974 = vpop.f32.mrf.mxu0
      %v1975 = vadd.f32 0.0, %v1974
      %v1976 = vpop.f32.mrf.mxu0
      %v1977 = vadd.f32 0.0, %v1976
      %1978 = vmatmul.bf16.gmra.mxu0 %v1846
      %v1979 = vpop.f32.mrf.mxu0
      %v1980 = vadd.f32 0.0, %v1979
      %v1981 = vpop.f32.mrf.mxu0
      %v1982 = vadd.f32 0.0, %v1981
      %1983 = vmatmul.bf16.gmra.mxu0 %v1847
      %v1984 = vpop.f32.mrf.mxu0
      %v1985 = vadd.f32 0.0, %v1984
      %v1986 = vpop.f32.mrf.mxu0
      %v1987 = vadd.f32 0.0, %v1986
      %1988 = vmatmul.bf16.gmra.mxu0 %v1848
      %v1989 = vpop.f32.mrf.mxu0
      %v1990 = vadd.f32 0.0, %v1989
      %v1991 = vpop.f32.mrf.mxu0
      %v1992 = vadd.f32 0.0, %v1991
      %1993 = vmatmul.bf16.gmra.mxu0 %v1849
      %v1994 = vpop.f32.mrf.mxu0
      %v1995 = vadd.f32 0.0, %v1994
      %v1996 = vpop.f32.mrf.mxu0
      %v1997 = vadd.f32 0.0, %v1996
      %1998 = vmatmul.bf16.gmra.mxu0 %v1850
      %v1999 = vpop.f32.mrf.mxu0
      %v2000 = vadd.f32 0.0, %v1999
      %v2001 = vpop.f32.mrf.mxu0
      %v2002 = vadd.f32 0.0, %v2001
      %2003 = vdwg.mxu0
      %v2004 = vadd.f32 %v1643, %v1925
      %v2005 = vadd.f32 %v1645, %v1927
      %v2006 = vadd.f32 %v1648, %v1930
      %v2007 = vadd.f32 %v1650, %v1932
      %v2008 = vadd.f32 %v1653, %v1935
      %v2009 = vadd.f32 %v1655, %v1937
      %v2010 = vadd.f32 %v1658, %v1940
      %v2011 = vadd.f32 %v1660, %v1942
      %v2012 = vadd.f32 %v1663, %v1945
      %v2013 = vadd.f32 %v1665, %v1947
      %v2014 = vadd.f32 %v1668, %v1950
      %v2015 = vadd.f32 %v1670, %v1952
      %v2016 = vadd.f32 %v1673, %v1955
      %v2017 = vadd.f32 %v1675, %v1957
      %v2018 = vadd.f32 %v1678, %v1960
      %v2019 = vadd.f32 %v1680, %v1962
      %v2020 = vadd.f32 %v1683, %v1965
      %v2021 = vadd.f32 %v1685, %v1967
      %v2022 = vadd.f32 %v1688, %v1970
      %v2023 = vadd.f32 %v1690, %v1972
      %v2024 = vadd.f32 %v1693, %v1975
      %v2025 = vadd.f32 %v1695, %v1977
      %v2026 = vadd.f32 %v1698, %v1980
      %v2027 = vadd.f32 %v1700, %v1982
      %v2028 = vadd.f32 %v1703, %v1985
      %v2029 = vadd.f32 %v1705, %v1987
      %v2030 = vadd.f32 %v1708, %v1990
      %v2031 = vadd.f32 %v1710, %v1992
      %v2032 = vadd.f32 %v1713, %v1995
      %v2033 = vadd.f32 %v1715, %v1997
      %v2034 = vadd.f32 %v1718, %v2000
      %v2035 = vadd.f32 %v1720, %v2002
      %v2036 = vld [vmem:[#allocation2 + $0x4] sm:$0x8]
      %v2037 = vld [vmem:[%s2] sm:$0xf]
      %v2038 = vld [vmem:[%s2 + $0x4] sm:$0xf]
      %v2039 = vld [vmem:[%s2 + $0x8] sm:$0xf]
      %v2040 = vld [vmem:[%s2 + $0xc] sm:$0xf]
      %v2041 = vld [vmem:[%s2 + $0x10] sm:$0xf]
      %v2042 = vld [vmem:[%s2 + $0x14] sm:$0xf]
      %v2043 = vld [vmem:[%s2 + $0x18] sm:$0xf]
      %v2044 = vld [vmem:[%s2 + $0x1c] sm:$0xf]
      %v2045 = vld [vmem:[%s2 + $0x20] sm:$0xf]
      %v2046 = vld [vmem:[%s2 + $0x24] sm:$0xf]
      %v2047 = vld [vmem:[%s2 + $0x28] sm:$0xf]
      %v2048 = vld [vmem:[%s2 + $0x2c] sm:$0xf]
      %v2049 = vld [vmem:[%s2 + $0x30] sm:$0xf]
      %v2050 = vld [vmem:[%s2 + $0x34] sm:$0xf]
      %v2051 = vld [vmem:[%s2 + $0x38] sm:$0xf]
      %v2052 = vld [vmem:[%s2 + $0x3c] sm:$0xf]
      %v2053 = vld [vmem:[#allocation2 + $0xc] sm:$0x8]
      %s2054 = scalar_lea.vmem %s2, 192
      %v2055 = vld [vmem:[%s2054] sm:$0xf]
      %v2056 = vld [vmem:[%s2054 + $0x4] sm:$0xf]
      %v2057 = vld [vmem:[%s2054 + $0x8] sm:$0xf]
      %v2058 = vld [vmem:[%s2054 + $0xc] sm:$0xf]
      %v2059 = vld [vmem:[%s2054 + $0x10] sm:$0xf]
      %v2060 = vld [vmem:[%s2054 + $0x14] sm:$0xf]
      %v2061 = vld [vmem:[%s2054 + $0x18] sm:$0xf]
      %v2062 = vld [vmem:[%s2054 + $0x1c] sm:$0xf]
      %v2063 = vld [vmem:[%s2054 + $0x20] sm:$0xf]
      %v2064 = vld [vmem:[%s2054 + $0x24] sm:$0xf]
      %v2065 = vld [vmem:[%s2054 + $0x28] sm:$0xf]
      %v2066 = vld [vmem:[%s2054 + $0x2c] sm:$0xf]
      %v2067 = vld [vmem:[%s2054 + $0x30] sm:$0xf]
      %v2068 = vld [vmem:[%s2054 + $0x34] sm:$0xf]
      %v2069 = vld [vmem:[%s2054 + $0x38] sm:$0xf]
      %v2070 = vld [vmem:[%s2054 + $0x3c] sm:$0xf]
      %v2072 = vunpack.c.l.b16 %v2053
      %v2073 = vpack.c.b16 %v1378, %v2072
      %v2074 = vpack.c.b16 %v1380, %v1379
      %v2075 = vpack.c.b16 %v1382, %v1381
      %v2076 = vpack.c.b16 %v1384, %v1383
      %v2077 = vpack.c.b16 %v1386, %v1385
      %v2078 = vpack.c.b16 %v1388, %v1387
      %v2079 = vpack.c.b16 %v1390, %v1389
      %v2080 = vpack.c.b16 %v1392, %v1391
      %v2081 = vpack.c.b16 %v1394, %v1393
      %v2082 = vpack.c.b16 %v1396, %v1395
      %v2083 = vpack.c.b16 %v1398, %v1397
      %v2084 = vpack.c.b16 %v1400, %v1399
      %v2085 = vpack.c.b16 %v1402, %v1401
      %v2086 = vpack.c.b16 %v1404, %v1403
      %v2087 = vpack.c.b16 %v1406, %v1405
      %v2088 = vpack.c.b16 %v1408, %v1407
      %v2089 = vpack.c.b16 %v1409, %v1409
      %vm2090 = vsmask.f32 4352
      %v2092 = vshrl.u32 %v2073, 16
      %v2094 = vrot.slane %v2092, 3
      %v2095 = vshll.u32 %v2073, 16
      %v2097 = vrot.slane %v2095, 4
      %v2098 = vor.u32 %v2094, %v2097
      %v2100 = vshrl.u32 %v2074, 16
      %v2102 = vrot.slane %v2100, 3
      %v2103 = vshll.u32 %v2074, 16
      %v2105 = vrot.slane %v2103, 4
      %v2106 = vor.u32 %v2102, %v2105
      %v2107 = vsel %vm2090, %v2098, %v2106
      %v2109 = vshrl.u32 %v2075, 16
      %v2111 = vrot.slane %v2109, 3
      %v2112 = vshll.u32 %v2075, 16
      %v2114 = vrot.slane %v2112, 4
      %v2115 = vor.u32 %v2111, %v2114
      %v2116 = vsel %vm2090, %v2106, %v2115
      %v2118 = vshrl.u32 %v2076, 16
      %v2120 = vrot.slane %v2118, 3
      %v2121 = vshll.u32 %v2076, 16
      %v2123 = vrot.slane %v2121, 4
      %v2124 = vor.u32 %v2120, %v2123
      %v2125 = vsel %vm2090, %v2115, %v2124
      %v2127 = vshrl.u32 %v2077, 16
      %v2129 = vrot.slane %v2127, 3
      %v2130 = vshll.u32 %v2077, 16
      %v2132 = vrot.slane %v2130, 4
      %v2133 = vor.u32 %v2129, %v2132
      %v2134 = vsel %vm2090, %v2124, %v2133
      %v2136 = vshrl.u32 %v2078, 16
      %v2138 = vrot.slane %v2136, 3
      %v2139 = vshll.u32 %v2078, 16
      %v2141 = vrot.slane %v2139, 4
      %v2142 = vor.u32 %v2138, %v2141
      %v2143 = vsel %vm2090, %v2133, %v2142
      %v2145 = vshrl.u32 %v2079, 16
      %v2147 = vrot.slane %v2145, 3
      %v2148 = vshll.u32 %v2079, 16
      %v2150 = vrot.slane %v2148, 4
      %v2151 = vor.u32 %v2147, %v2150
      %v2152 = vsel %vm2090, %v2142, %v2151
      %v2154 = vshrl.u32 %v2080, 16
      %v2156 = vrot.slane %v2154, 3
      %v2157 = vshll.u32 %v2080, 16
      %v2159 = vrot.slane %v2157, 4
      %v2160 = vor.u32 %v2156, %v2159
      %v2161 = vsel %vm2090, %v2151, %v2160
      %v2163 = vshrl.u32 %v2081, 16
      %v2165 = vrot.slane %v2163, 3
      %v2166 = vshll.u32 %v2081, 16
      %v2168 = vrot.slane %v2166, 4
      %v2169 = vor.u32 %v2165, %v2168
      %v2170 = vsel %vm2090, %v2160, %v2169
      %v2172 = vshrl.u32 %v2082, 16
      %v2174 = vrot.slane %v2172, 3
      %v2175 = vshll.u32 %v2082, 16
      %v2177 = vrot.slane %v2175, 4
      %v2178 = vor.u32 %v2174, %v2177
      %v2179 = vsel %vm2090, %v2169, %v2178
      %v2181 = vshrl.u32 %v2083, 16
      %v2183 = vrot.slane %v2181, 3
      %v2184 = vshll.u32 %v2083, 16
      %v2186 = vrot.slane %v2184, 4
      %v2187 = vor.u32 %v2183, %v2186
      %v2188 = vsel %vm2090, %v2178, %v2187
      %v2190 = vshrl.u32 %v2084, 16
      %v2192 = vrot.slane %v2190, 3
      %v2193 = vshll.u32 %v2084, 16
      %v2195 = vrot.slane %v2193, 4
      %v2196 = vor.u32 %v2192, %v2195
      %v2197 = vsel %vm2090, %v2187, %v2196
      %v2199 = vshrl.u32 %v2085, 16
      %v2201 = vrot.slane %v2199, 3
      %v2202 = vshll.u32 %v2085, 16
      %v2204 = vrot.slane %v2202, 4
      %v2205 = vor.u32 %v2201, %v2204
      %v2206 = vsel %vm2090, %v2196, %v2205
      %v2208 = vshrl.u32 %v2086, 16
      %v2210 = vrot.slane %v2208, 3
      %v2211 = vshll.u32 %v2086, 16
      %v2213 = vrot.slane %v2211, 4
      %v2214 = vor.u32 %v2210, %v2213
      %v2215 = vsel %vm2090, %v2205, %v2214
      %v2217 = vshrl.u32 %v2087, 16
      %v2219 = vrot.slane %v2217, 3
      %v2220 = vshll.u32 %v2087, 16
      %v2222 = vrot.slane %v2220, 4
      %v2223 = vor.u32 %v2219, %v2222
      %v2224 = vsel %vm2090, %v2214, %v2223
      %v2226 = vshrl.u32 %v2088, 16
      %v2228 = vrot.slane %v2226, 3
      %v2229 = vshll.u32 %v2088, 16
      %v2231 = vrot.slane %v2229, 4
      %v2232 = vor.u32 %v2228, %v2231
      %v2233 = vsel %vm2090, %v2223, %v2232
      %v2235 = vshrl.u32 %v2089, 16
      %v2237 = vrot.slane %v2235, 3
      %v2238 = vshll.u32 %v2089, 16
      %v2240 = vrot.slane %v2238, 4
      %v2241 = vor.u32 %v2237, %v2240
      %v2242 = vsel %vm2090, %v2232, %v2241
      %v2275 = vunpack.c.l.b16 %v2055
      %v2276 = vunpack.c.l.b16 %v2056
      %v2277 = vunpack.c.l.b16 %v2057
      %v2278 = vunpack.c.l.b16 %v2058
      %v2279 = vunpack.c.l.b16 %v2059
      %v2280 = vunpack.c.l.b16 %v2060
      %v2281 = vunpack.c.l.b16 %v2061
      %v2282 = vunpack.c.l.b16 %v2062
      %v2283 = vunpack.c.l.b16 %v2063
      %v2284 = vunpack.c.l.b16 %v2064
      %v2285 = vunpack.c.l.b16 %v2065
      %v2286 = vunpack.c.l.b16 %v2066
      %v2287 = vunpack.c.l.b16 %v2067
      %v2288 = vunpack.c.l.b16 %v2068
      %v2289 = vunpack.c.l.b16 %v2069
      %v2290 = vunpack.c.l.b16 %v2070
      %v2291 = vpack.c.b16 %v2276, %v2275
      %v2292 = vpack.c.b16 %v2278, %v2277
      %v2293 = vpack.c.b16 %v2280, %v2279
      %v2294 = vpack.c.b16 %v2282, %v2281
      %v2295 = vpack.c.b16 %v2284, %v2283
      %v2296 = vpack.c.b16 %v2286, %v2285
      %v2297 = vpack.c.b16 %v2288, %v2287
      %v2298 = vpack.c.b16 %v2290, %v2289
      %2307 = vmatpush.bf16.msra.mxu0 %v2298
      %2308 = vmatpush.bf16.msra.mxu0 %v2297
      %2309 = vmatpush.bf16.msra.mxu0 %v2296
      %2310 = vmatpush.bf16.msra.mxu0 %v2295
      %2311 = vmatpush.bf16.msra.mxu0 %v2294
      %2312 = vmatpush.bf16.msra.mxu0 %v2293
      %2313 = vmatpush.bf16.msra.mxu0 %v2292
      %2314 = vmatpush.bf16.msra.mxu0 %v2291
      %2315 = vmatmul.bf16.gmra.mxu0 %v2107
      %v2316 = vpop.f32.mrf.mxu0
      %v2317 = vadd.f32 0.0, %v2316
      %v2318 = vpop.f32.mrf.mxu0
      %v2319 = vadd.f32 0.0, %v2318
      %2320 = vmatmul.bf16.gmra.mxu0 %v2116
      %v2321 = vpop.f32.mrf.mxu0
      %v2322 = vadd.f32 0.0, %v2321
      %v2323 = vpop.f32.mrf.mxu0
      %v2324 = vadd.f32 0.0, %v2323
      %2325 = vmatmul.bf16.gmra.mxu0 %v2125
      %v2326 = vpop.f32.mrf.mxu0
      %v2327 = vadd.f32 0.0, %v2326
      %v2328 = vpop.f32.mrf.mxu0
      %v2329 = vadd.f32 0.0, %v2328
      %2330 = vmatmul.bf16.gmra.mxu0 %v2134
      %v2331 = vpop.f32.mrf.mxu0
      %v2332 = vadd.f32 0.0, %v2331
      %v2333 = vpop.f32.mrf.mxu0
      %v2334 = vadd.f32 0.0, %v2333
      %2335 = vmatmul.bf16.gmra.mxu0 %v2143
      %v2336 = vpop.f32.mrf.mxu0
      %v2337 = vadd.f32 0.0, %v2336
      %v2338 = vpop.f32.mrf.mxu0
      %v2339 = vadd.f32 0.0, %v2338
      %2340 = vmatmul.bf16.gmra.mxu0 %v2152
      %v2341 = vpop.f32.mrf.mxu0
      %v2342 = vadd.f32 0.0, %v2341
      %v2343 = vpop.f32.mrf.mxu0
      %v2344 = vadd.f32 0.0, %v2343
      %2345 = vmatmul.bf16.gmra.mxu0 %v2161
      %v2346 = vpop.f32.mrf.mxu0
      %v2347 = vadd.f32 0.0, %v2346
      %v2348 = vpop.f32.mrf.mxu0
      %v2349 = vadd.f32 0.0, %v2348
      %2350 = vmatmul.bf16.gmra.mxu0 %v2170
      %v2351 = vpop.f32.mrf.mxu0
      %v2352 = vadd.f32 0.0, %v2351
      %v2353 = vpop.f32.mrf.mxu0
      %v2354 = vadd.f32 0.0, %v2353
      %2355 = vmatmul.bf16.gmra.mxu0 %v2179
      %v2356 = vpop.f32.mrf.mxu0
      %v2357 = vadd.f32 0.0, %v2356
      %v2358 = vpop.f32.mrf.mxu0
      %v2359 = vadd.f32 0.0, %v2358
      %2360 = vmatmul.bf16.gmra.mxu0 %v2188
      %v2361 = vpop.f32.mrf.mxu0
      %v2362 = vadd.f32 0.0, %v2361
      %v2363 = vpop.f32.mrf.mxu0
      %v2364 = vadd.f32 0.0, %v2363
      %2365 = vmatmul.bf16.gmra.mxu0 %v2197
      %v2366 = vpop.f32.mrf.mxu0
      %v2367 = vadd.f32 0.0, %v2366
      %v2368 = vpop.f32.mrf.mxu0
      %v2369 = vadd.f32 0.0, %v2368
      %2370 = vmatmul.bf16.gmra.mxu0 %v2206
      %v2371 = vpop.f32.mrf.mxu0
      %v2372 = vadd.f32 0.0, %v2371
      %v2373 = vpop.f32.mrf.mxu0
      %v2374 = vadd.f32 0.0, %v2373
      %2375 = vmatmul.bf16.gmra.mxu0 %v2215
      %v2376 = vpop.f32.mrf.mxu0
      %v2377 = vadd.f32 0.0, %v2376
      %v2378 = vpop.f32.mrf.mxu0
      %v2379 = vadd.f32 0.0, %v2378
      %2380 = vmatmul.bf16.gmra.mxu0 %v2224
      %v2381 = vpop.f32.mrf.mxu0
      %v2382 = vadd.f32 0.0, %v2381
      %v2383 = vpop.f32.mrf.mxu0
      %v2384 = vadd.f32 0.0, %v2383
      %2385 = vmatmul.bf16.gmra.mxu0 %v2233
      %v2386 = vpop.f32.mrf.mxu0
      %v2387 = vadd.f32 0.0, %v2386
      %v2388 = vpop.f32.mrf.mxu0
      %v2389 = vadd.f32 0.0, %v2388
      %2390 = vmatmul.bf16.gmra.mxu0 %v2242
      %v2391 = vpop.f32.mrf.mxu0
      %v2392 = vadd.f32 0.0, %v2391
      %v2393 = vpop.f32.mrf.mxu0
      %v2394 = vadd.f32 0.0, %v2393
      %2395 = vdwg.mxu0
      %v2397 = vunpack.c.l.b16 %v2036
      %v2398 = vpack.c.b16 %v1581, %v2397
      %v2399 = vpack.c.b16 %v1378, %v1582
      %v2400 = vpack.c.b16 %v1407, %v1407
      %v2402 = vshrl.u32 %v2398, 16
      %v2404 = vrot.slane %v2402, 3
      %v2405 = vshll.u32 %v2398, 16
      %v2407 = vrot.slane %v2405, 4
      %v2408 = vor.u32 %v2404, %v2407
      %v2410 = vshrl.u32 %v2399, 16
      %v2412 = vrot.slane %v2410, 3
      %v2413 = vshll.u32 %v2399, 16
      %v2415 = vrot.slane %v2413, 4
      %v2416 = vor.u32 %v2412, %v2415
      %v2417 = vsel %vm2090, %v2408, %v2416
      %v2418 = vsel %vm2090, %v2416, %v2106
      %v2420 = vshrl.u32 %v2400, 16
      %v2422 = vrot.slane %v2420, 3
      %v2423 = vshll.u32 %v2400, 16
      %v2425 = vrot.slane %v2423, 4
      %v2426 = vor.u32 %v2422, %v2425
      %v2427 = vsel %vm2090, %v2223, %v2426
      %v2447 = vunpack.c.l.b16 %v2037
      %v2448 = vunpack.c.l.b16 %v2038
      %v2449 = vunpack.c.l.b16 %v2039
      %v2450 = vunpack.c.l.b16 %v2040
      %v2451 = vunpack.c.l.b16 %v2041
      %v2452 = vunpack.c.l.b16 %v2042
      %v2453 = vunpack.c.l.b16 %v2043
      %v2454 = vunpack.c.l.b16 %v2044
      %v2455 = vunpack.c.l.b16 %v2045
      %v2456 = vunpack.c.l.b16 %v2046
      %v2457 = vunpack.c.l.b16 %v2047
      %v2458 = vunpack.c.l.b16 %v2048
      %v2459 = vunpack.c.l.b16 %v2049
      %v2460 = vunpack.c.l.b16 %v2050
      %v2461 = vunpack.c.l.b16 %v2051
      %v2462 = vunpack.c.l.b16 %v2052
      %v2463 = vpack.c.b16 %v2448, %v2447
      %v2464 = vpack.c.b16 %v2450, %v2449
      %v2465 = vpack.c.b16 %v2452, %v2451
      %v2466 = vpack.c.b16 %v2454, %v2453
      %v2467 = vpack.c.b16 %v2456, %v2455
      %v2468 = vpack.c.b16 %v2458, %v2457
      %v2469 = vpack.c.b16 %v2460, %v2459
      %v2470 = vpack.c.b16 %v2462, %v2461
      %2479 = vmatpush.bf16.msra.mxu0 %v2470
      %2480 = vmatpush.bf16.msra.mxu0 %v2469
      %2481 = vmatpush.bf16.msra.mxu0 %v2468
      %2482 = vmatpush.bf16.msra.mxu0 %v2467
      %2483 = vmatpush.bf16.msra.mxu0 %v2466
      %2484 = vmatpush.bf16.msra.mxu0 %v2465
      %2485 = vmatpush.bf16.msra.mxu0 %v2464
      %2486 = vmatpush.bf16.msra.mxu0 %v2463
      %2487 = vmatmul.bf16.gmra.mxu0 %v2417
      %v2488 = vpop.f32.mrf.mxu0
      %v2489 = vadd.f32 %v2317, %v2488
      %v2490 = vpop.f32.mrf.mxu0
      %v2491 = vadd.f32 %v2319, %v2490
      %2492 = vmatmul.bf16.gmra.mxu0 %v2418
      %v2493 = vpop.f32.mrf.mxu0
      %v2494 = vadd.f32 %v2322, %v2493
      %v2495 = vpop.f32.mrf.mxu0
      %v2496 = vadd.f32 %v2324, %v2495
      %2497 = vmatmul.bf16.gmra.mxu0 %v2116
      %v2498 = vpop.f32.mrf.mxu0
      %v2499 = vadd.f32 %v2327, %v2498
      %v2500 = vpop.f32.mrf.mxu0
      %v2501 = vadd.f32 %v2329, %v2500
      %2502 = vmatmul.bf16.gmra.mxu0 %v2125
      %v2503 = vpop.f32.mrf.mxu0
      %v2504 = vadd.f32 %v2332, %v2503
      %v2505 = vpop.f32.mrf.mxu0
      %v2506 = vadd.f32 %v2334, %v2505
      %2507 = vmatmul.bf16.gmra.mxu0 %v2134
      %v2508 = vpop.f32.mrf.mxu0
      %v2509 = vadd.f32 %v2337, %v2508
      %v2510 = vpop.f32.mrf.mxu0
      %v2511 = vadd.f32 %v2339, %v2510
      %2512 = vmatmul.bf16.gmra.mxu0 %v2143
      %v2513 = vpop.f32.mrf.mxu0
      %v2514 = vadd.f32 %v2342, %v2513
      %v2515 = vpop.f32.mrf.mxu0
      %v2516 = vadd.f32 %v2344, %v2515
      %2517 = vmatmul.bf16.gmra.mxu0 %v2152
      %v2518 = vpop.f32.mrf.mxu0
      %v2519 = vadd.f32 %v2347, %v2518
      %v2520 = vpop.f32.mrf.mxu0
      %v2521 = vadd.f32 %v2349, %v2520
      %2522 = vmatmul.bf16.gmra.mxu0 %v2161
      %v2523 = vpop.f32.mrf.mxu0
      %v2524 = vadd.f32 %v2352, %v2523
      %v2525 = vpop.f32.mrf.mxu0
      %v2526 = vadd.f32 %v2354, %v2525
      %2527 = vmatmul.bf16.gmra.mxu0 %v2170
      %v2528 = vpop.f32.mrf.mxu0
      %v2529 = vadd.f32 %v2357, %v2528
      %v2530 = vpop.f32.mrf.mxu0
      %v2531 = vadd.f32 %v2359, %v2530
      %2532 = vmatmul.bf16.gmra.mxu0 %v2179
      %v2533 = vpop.f32.mrf.mxu0
      %v2534 = vadd.f32 %v2362, %v2533
      %v2535 = vpop.f32.mrf.mxu0
      %v2536 = vadd.f32 %v2364, %v2535
      %2537 = vmatmul.bf16.gmra.mxu0 %v2188
      %v2538 = vpop.f32.mrf.mxu0
      %v2539 = vadd.f32 %v2367, %v2538
      %v2540 = vpop.f32.mrf.mxu0
      %v2541 = vadd.f32 %v2369, %v2540
      %2542 = vmatmul.bf16.gmra.mxu0 %v2197
      %v2543 = vpop.f32.mrf.mxu0
      %v2544 = vadd.f32 %v2372, %v2543
      %v2545 = vpop.f32.mrf.mxu0
      %v2546 = vadd.f32 %v2374, %v2545
      %2547 = vmatmul.bf16.gmra.mxu0 %v2206
      %v2548 = vpop.f32.mrf.mxu0
      %v2549 = vadd.f32 %v2377, %v2548
      %v2550 = vpop.f32.mrf.mxu0
      %v2551 = vadd.f32 %v2379, %v2550
      %2552 = vmatmul.bf16.gmra.mxu0 %v2215
      %v2553 = vpop.f32.mrf.mxu0
      %v2554 = vadd.f32 %v2382, %v2553
      %v2555 = vpop.f32.mrf.mxu0
      %v2556 = vadd.f32 %v2384, %v2555
      %2557 = vmatmul.bf16.gmra.mxu0 %v2224
      %v2558 = vpop.f32.mrf.mxu0
      %v2559 = vadd.f32 %v2387, %v2558
      %v2560 = vpop.f32.mrf.mxu0
      %v2561 = vadd.f32 %v2389, %v2560
      %2562 = vmatmul.bf16.gmra.mxu0 %v2427
      %v2563 = vpop.f32.mrf.mxu0
      %v2564 = vadd.f32 %v2392, %v2563
      %v2565 = vpop.f32.mrf.mxu0
      %v2566 = vadd.f32 %v2394, %v2565
      %2567 = vdwg.mxu0
      %v2568 = vld [vmem:[#allocation2 + $0x14] sm:$0x8]
      %s2569 = scalar_lea.vmem %s2, 384
      %v2570 = vld [vmem:[%s2569] sm:$0xf]
      %v2571 = vld [vmem:[%s2569 + $0x4] sm:$0xf]
      %v2572 = vld [vmem:[%s2569 + $0x8] sm:$0xf]
      %v2573 = vld [vmem:[%s2569 + $0xc] sm:$0xf]
      %v2574 = vld [vmem:[%s2569 + $0x10] sm:$0xf]
      %v2575 = vld [vmem:[%s2569 + $0x14] sm:$0xf]
      %v2576 = vld [vmem:[%s2569 + $0x18] sm:$0xf]
      %v2577 = vld [vmem:[%s2569 + $0x1c] sm:$0xf]
      %v2578 = vld [vmem:[%s2569 + $0x20] sm:$0xf]
      %v2579 = vld [vmem:[%s2569 + $0x24] sm:$0xf]
      %v2580 = vld [vmem:[%s2569 + $0x28] sm:$0xf]
      %v2581 = vld [vmem:[%s2569 + $0x2c] sm:$0xf]
      %v2582 = vld [vmem:[%s2569 + $0x30] sm:$0xf]
      %v2583 = vld [vmem:[%s2569 + $0x34] sm:$0xf]
      %v2584 = vld [vmem:[%s2569 + $0x38] sm:$0xf]
      %v2585 = vld [vmem:[%s2569 + $0x3c] sm:$0xf]
      %v2587 = vunpack.c.l.b16 %v2568
      %v2588 = vpack.c.b16 %v1803, %v2587
      %v2589 = vpack.c.b16 %v1805, %v1804
      %v2590 = vpack.c.b16 %v1807, %v1806
      %v2591 = vpack.c.b16 %v1809, %v1808
      %v2592 = vpack.c.b16 %v1811, %v1810
      %v2593 = vpack.c.b16 %v1813, %v1812
      %v2594 = vpack.c.b16 %v1815, %v1814
      %v2595 = vpack.c.b16 %v1817, %v1816
      %v2596 = vpack.c.b16 %v1819, %v1818
      %v2597 = vpack.c.b16 %v1821, %v1820
      %v2598 = vpack.c.b16 %v1823, %v1822
      %v2599 = vpack.c.b16 %v1825, %v1824
      %v2600 = vpack.c.b16 %v1827, %v1826
      %v2601 = vpack.c.b16 %v1829, %v1828
      %v2602 = vpack.c.b16 %v1831, %v1830
      %v2603 = vpack.c.b16 %v1833, %v1832
      %v2604 = vpack.c.b16 %v1834, %v1834
      %v2606 = vshrl.u32 %v2588, 16
      %v2608 = vrot.slane %v2606, 3
      %v2609 = vshll.u32 %v2588, 16
      %v2611 = vrot.slane %v2609, 4
      %v2612 = vor.u32 %v2608, %v2611
      %v2614 = vshrl.u32 %v2589, 16
      %v2616 = vrot.slane %v2614, 3
      %v2617 = vshll.u32 %v2589, 16
      %v2619 = vrot.slane %v2617, 4
      %v2620 = vor.u32 %v2616, %v2619
      %v2621 = vsel %vm2090, %v2612, %v2620
      %v2623 = vshrl.u32 %v2590, 16
      %v2625 = vrot.slane %v2623, 3
      %v2626 = vshll.u32 %v2590, 16
      %v2628 = vrot.slane %v2626, 4
      %v2629 = vor.u32 %v2625, %v2628
      %v2630 = vsel %vm2090, %v2620, %v2629
      %v2632 = vshrl.u32 %v2591, 16
      %v2634 = vrot.slane %v2632, 3
      %v2635 = vshll.u32 %v2591, 16
      %v2637 = vrot.slane %v2635, 4
      %v2638 = vor.u32 %v2634, %v2637
      %v2639 = vsel %vm2090, %v2629, %v2638
      %v2641 = vshrl.u32 %v2592, 16
      %v2643 = vrot.slane %v2641, 3
      %v2644 = vshll.u32 %v2592, 16
      %v2646 = vrot.slane %v2644, 4
      %v2647 = vor.u32 %v2643, %v2646
      %v2648 = vsel %vm2090, %v2638, %v2647
      %v2650 = vshrl.u32 %v2593, 16
      %v2652 = vrot.slane %v2650, 3
      %v2653 = vshll.u32 %v2593, 16
      %v2655 = vrot.slane %v2653, 4
      %v2656 = vor.u32 %v2652, %v2655
      %v2657 = vsel %vm2090, %v2647, %v2656
      %v2659 = vshrl.u32 %v2594, 16
      %v2661 = vrot.slane %v2659, 3
      %v2662 = vshll.u32 %v2594, 16
      %v2664 = vrot.slane %v2662, 4
      %v2665 = vor.u32 %v2661, %v2664
      %v2666 = vsel %vm2090, %v2656, %v2665
      %v2668 = vshrl.u32 %v2595, 16
      %v2670 = vrot.slane %v2668, 3
      %v2671 = vshll.u32 %v2595, 16
      %v2673 = vrot.slane %v2671, 4
      %v2674 = vor.u32 %v2670, %v2673
      %v2675 = vsel %vm2090, %v2665, %v2674
      %v2677 = vshrl.u32 %v2596, 16
      %v2679 = vrot.slane %v2677, 3
      %v2680 = vshll.u32 %v2596, 16
      %v2682 = vrot.slane %v2680, 4
      %v2683 = vor.u32 %v2679, %v2682
      %v2684 = vsel %vm2090, %v2674, %v2683
      %v2686 = vshrl.u32 %v2597, 16
      %v2688 = vrot.slane %v2686, 3
      %v2689 = vshll.u32 %v2597, 16
      %v2691 = vrot.slane %v2689, 4
      %v2692 = vor.u32 %v2688, %v2691
      %v2693 = vsel %vm2090, %v2683, %v2692
      %v2695 = vshrl.u32 %v2598, 16
      %v2697 = vrot.slane %v2695, 3
      %v2698 = vshll.u32 %v2598, 16
      %v2700 = vrot.slane %v2698, 4
      %v2701 = vor.u32 %v2697, %v2700
      %v2702 = vsel %vm2090, %v2692, %v2701
      %v2704 = vshrl.u32 %v2599, 16
      %v2706 = vrot.slane %v2704, 3
      %v2707 = vshll.u32 %v2599, 16
      %v2709 = vrot.slane %v2707, 4
      %v2710 = vor.u32 %v2706, %v2709
      %v2711 = vsel %vm2090, %v2701, %v2710
      %v2713 = vshrl.u32 %v2600, 16
      %v2715 = vrot.slane %v2713, 3
      %v2716 = vshll.u32 %v2600, 16
      %v2718 = vrot.slane %v2716, 4
      %v2719 = vor.u32 %v2715, %v2718
      %v2720 = vsel %vm2090, %v2710, %v2719
      %v2722 = vshrl.u32 %v2601, 16
      %v2724 = vrot.slane %v2722, 3
      %v2725 = vshll.u32 %v2601, 16
      %v2727 = vrot.slane %v2725, 4
      %v2728 = vor.u32 %v2724, %v2727
      %v2729 = vsel %vm2090, %v2719, %v2728
      %v2731 = vshrl.u32 %v2602, 16
      %v2733 = vrot.slane %v2731, 3
      %v2734 = vshll.u32 %v2602, 16
      %v2736 = vrot.slane %v2734, 4
      %v2737 = vor.u32 %v2733, %v2736
      %v2738 = vsel %vm2090, %v2728, %v2737
      %v2740 = vshrl.u32 %v2603, 16
      %v2742 = vrot.slane %v2740, 3
      %v2743 = vshll.u32 %v2603, 16
      %v2745 = vrot.slane %v2743, 4
      %v2746 = vor.u32 %v2742, %v2745
      %v2747 = vsel %vm2090, %v2737, %v2746
      %v2749 = vshrl.u32 %v2604, 16
      %v2751 = vrot.slane %v2749, 3
      %v2752 = vshll.u32 %v2604, 16
      %v2754 = vrot.slane %v2752, 4
      %v2755 = vor.u32 %v2751, %v2754
      %v2756 = vsel %vm2090, %v2746, %v2755
      %v2789 = vunpack.c.l.b16 %v2570
      %v2790 = vunpack.c.l.b16 %v2571
      %v2791 = vunpack.c.l.b16 %v2572
      %v2792 = vunpack.c.l.b16 %v2573
      %v2793 = vunpack.c.l.b16 %v2574
      %v2794 = vunpack.c.l.b16 %v2575
      %v2795 = vunpack.c.l.b16 %v2576
      %v2796 = vunpack.c.l.b16 %v2577
      %v2797 = vunpack.c.l.b16 %v2578
      %v2798 = vunpack.c.l.b16 %v2579
      %v2799 = vunpack.c.l.b16 %v2580
      %v2800 = vunpack.c.l.b16 %v2581
      %v2801 = vunpack.c.l.b16 %v2582
      %v2802 = vunpack.c.l.b16 %v2583
      %v2803 = vunpack.c.l.b16 %v2584
      %v2804 = vunpack.c.l.b16 %v2585
      %v2805 = vpack.c.b16 %v2790, %v2789
      %v2806 = vpack.c.b16 %v2792, %v2791
      %v2807 = vpack.c.b16 %v2794, %v2793
      %v2808 = vpack.c.b16 %v2796, %v2795
      %v2809 = vpack.c.b16 %v2798, %v2797
      %v2810 = vpack.c.b16 %v2800, %v2799
      %v2811 = vpack.c.b16 %v2802, %v2801
      %v2812 = vpack.c.b16 %v2804, %v2803
      %2821 = vmatpush.bf16.msra.mxu0 %v2812
      %2822 = vmatpush.bf16.msra.mxu0 %v2811
      %2823 = vmatpush.bf16.msra.mxu0 %v2810
      %2824 = vmatpush.bf16.msra.mxu0 %v2809
      %2825 = vmatpush.bf16.msra.mxu0 %v2808
      %2826 = vmatpush.bf16.msra.mxu0 %v2807
      %2827 = vmatpush.bf16.msra.mxu0 %v2806
      %2828 = vmatpush.bf16.msra.mxu0 %v2805
      %2829 = vmatmul.bf16.gmra.mxu0 %v2621
      %v2830 = vpop.f32.mrf.mxu0
      %v2831 = vadd.f32 0.0, %v2830
      %v2832 = vpop.f32.mrf.mxu0
      %v2833 = vadd.f32 0.0, %v2832
      %2834 = vmatmul.bf16.gmra.mxu0 %v2630
      %v2835 = vpop.f32.mrf.mxu0
      %v2836 = vadd.f32 0.0, %v2835
      %v2837 = vpop.f32.mrf.mxu0
      %v2838 = vadd.f32 0.0, %v2837
      %2839 = vmatmul.bf16.gmra.mxu0 %v2639
      %v2840 = vpop.f32.mrf.mxu0
      %v2841 = vadd.f32 0.0, %v2840
      %v2842 = vpop.f32.mrf.mxu0
      %v2843 = vadd.f32 0.0, %v2842
      %2844 = vmatmul.bf16.gmra.mxu0 %v2648
      %v2845 = vpop.f32.mrf.mxu0
      %v2846 = vadd.f32 0.0, %v2845
      %v2847 = vpop.f32.mrf.mxu0
      %v2848 = vadd.f32 0.0, %v2847
      %2849 = vmatmul.bf16.gmra.mxu0 %v2657
      %v2850 = vpop.f32.mrf.mxu0
      %v2851 = vadd.f32 0.0, %v2850
      %v2852 = vpop.f32.mrf.mxu0
      %v2853 = vadd.f32 0.0, %v2852
      %2854 = vmatmul.bf16.gmra.mxu0 %v2666
      %v2855 = vpop.f32.mrf.mxu0
      %v2856 = vadd.f32 0.0, %v2855
      %v2857 = vpop.f32.mrf.mxu0
      %v2858 = vadd.f32 0.0, %v2857
      %2859 = vmatmul.bf16.gmra.mxu0 %v2675
      %v2860 = vpop.f32.mrf.mxu0
      %v2861 = vadd.f32 0.0, %v2860
      %v2862 = vpop.f32.mrf.mxu0
      %v2863 = vadd.f32 0.0, %v2862
      %2864 = vmatmul.bf16.gmra.mxu0 %v2684
      %v2865 = vpop.f32.mrf.mxu0
      %v2866 = vadd.f32 0.0, %v2865
      %v2867 = vpop.f32.mrf.mxu0
      %v2868 = vadd.f32 0.0, %v2867
      %2869 = vmatmul.bf16.gmra.mxu0 %v2693
      %v2870 = vpop.f32.mrf.mxu0
      %v2871 = vadd.f32 0.0, %v2870
      %v2872 = vpop.f32.mrf.mxu0
      %v2873 = vadd.f32 0.0, %v2872
      %2874 = vmatmul.bf16.gmra.mxu0 %v2702
      %v2875 = vpop.f32.mrf.mxu0
      %v2876 = vadd.f32 0.0, %v2875
      %v2877 = vpop.f32.mrf.mxu0
      %v2878 = vadd.f32 0.0, %v2877
      %2879 = vmatmul.bf16.gmra.mxu0 %v2711
      %v2880 = vpop.f32.mrf.mxu0
      %v2881 = vadd.f32 0.0, %v2880
      %v2882 = vpop.f32.mrf.mxu0
      %v2883 = vadd.f32 0.0, %v2882
      %2884 = vmatmul.bf16.gmra.mxu0 %v2720
      %v2885 = vpop.f32.mrf.mxu0
      %v2886 = vadd.f32 0.0, %v2885
      %v2887 = vpop.f32.mrf.mxu0
      %v2888 = vadd.f32 0.0, %v2887
      %2889 = vmatmul.bf16.gmra.mxu0 %v2729
      %v2890 = vpop.f32.mrf.mxu0
      %v2891 = vadd.f32 0.0, %v2890
      %v2892 = vpop.f32.mrf.mxu0
      %v2893 = vadd.f32 0.0, %v2892
      %2894 = vmatmul.bf16.gmra.mxu0 %v2738
      %v2895 = vpop.f32.mrf.mxu0
      %v2896 = vadd.f32 0.0, %v2895
      %v2897 = vpop.f32.mrf.mxu0
      %v2898 = vadd.f32 0.0, %v2897
      %2899 = vmatmul.bf16.gmra.mxu0 %v2747
      %v2900 = vpop.f32.mrf.mxu0
      %v2901 = vadd.f32 0.0, %v2900
      %v2902 = vpop.f32.mrf.mxu0
      %v2903 = vadd.f32 0.0, %v2902
      %2904 = vmatmul.bf16.gmra.mxu0 %v2756
      %v2905 = vpop.f32.mrf.mxu0
      %v2906 = vadd.f32 0.0, %v2905
      %v2907 = vpop.f32.mrf.mxu0
      %v2908 = vadd.f32 0.0, %v2907
      %2909 = vdwg.mxu0
      %v2910 = vadd.f32 %v2489, %v2831
      %v2911 = vadd.f32 %v2491, %v2833
      %v2912 = vadd.f32 %v2494, %v2836
      %v2913 = vadd.f32 %v2496, %v2838
      %v2914 = vadd.f32 %v2499, %v2841
      %v2915 = vadd.f32 %v2501, %v2843
      %v2916 = vadd.f32 %v2504, %v2846
      %v2917 = vadd.f32 %v2506, %v2848
      %v2918 = vadd.f32 %v2509, %v2851
      %v2919 = vadd.f32 %v2511, %v2853
      %v2920 = vadd.f32 %v2514, %v2856
      %v2921 = vadd.f32 %v2516, %v2858
      %v2922 = vadd.f32 %v2519, %v2861
      %v2923 = vadd.f32 %v2521, %v2863
      %v2924 = vadd.f32 %v2524, %v2866
      %v2925 = vadd.f32 %v2526, %v2868
      %v2926 = vadd.f32 %v2529, %v2871
      %v2927 = vadd.f32 %v2531, %v2873
      %v2928 = vadd.f32 %v2534, %v2876
      %v2929 = vadd.f32 %v2536, %v2878
      %v2930 = vadd.f32 %v2539, %v2881
      %v2931 = vadd.f32 %v2541, %v2883
      %v2932 = vadd.f32 %v2544, %v2886
      %v2933 = vadd.f32 %v2546, %v2888
      %v2934 = vadd.f32 %v2549, %v2891
      %v2935 = vadd.f32 %v2551, %v2893
      %v2936 = vadd.f32 %v2554, %v2896
      %v2937 = vadd.f32 %v2556, %v2898
      %v2938 = vadd.f32 %v2559, %v2901
      %v2939 = vadd.f32 %v2561, %v2903
      %v2940 = vadd.f32 %v2564, %v2906
      %v2941 = vadd.f32 %v2566, %v2908
      %v2942 = vld [vmem:[#allocation2 + $0x8] sm:$0xf]
      %v2943 = vld [vmem:[#allocation2 + $0xc] sm:$0xf]
      %v2944 = vld [vmem:[#allocation2 + $0x10] sm:$0xf]
      %v2945 = vld [vmem:[#allocation2 + $0x14] sm:$0xf]
      %v2946 = vld [vmem:[#allocation2 + $0x18] sm:$0xf]
      %v2947 = vld [vmem:[#allocation2 + $0x1c] sm:$0xf]
      %v2948 = vld [vmem:[#allocation2 + $0x20] sm:$0xf]
      %v2949 = vld [vmem:[#allocation2 + $0x24] sm:$0xf]
      %v2950 = vld [vmem:[#allocation2 + $0x28] sm:$0xf]
      %v2951 = vld [vmem:[#allocation2 + $0x2c] sm:$0xf]
      %v2952 = vld [vmem:[#allocation2 + $0x30] sm:$0xf]
      %v2953 = vld [vmem:[#allocation2 + $0x34] sm:$0xf]
      %v2954 = vld [vmem:[#allocation2 + $0x38] sm:$0xf]
      %v2955 = vld [vmem:[#allocation2 + $0x3c] sm:$0xf]
      %v2956 = vld [vmem:[#allocation2 + $0x40] sm:$0xf]
      %v2957 = vld [vmem:[#allocation2 + $0x44] sm:$0xf]
      %v2958 = vld [vmem:[#allocation2 + $0x48] sm:$0xf]
      %v2959 = vld [vmem:[#allocation2 + $0x4c] sm:$0xf]
      %v2960 = vld [vmem:[#allocation2 + $0x50] sm:$0xf]
      %v2961 = vld [vmem:[#allocation2 + $0x54] sm:$0xf]
      %v2962 = vld [vmem:[#allocation2 + $0x58] sm:$0xf]
      %v2963 = vld [vmem:[#allocation2 + $0x5c] sm:$0xf]
      %v2964 = vld [vmem:[#allocation2 + $0x60] sm:$0xf]
      %v2965 = vld [vmem:[#allocation2 + $0x64] sm:$0xf]
      %v2966 = vld [vmem:[#allocation2 + $0x68] sm:$0xf]
      %v2967 = vld [vmem:[#allocation2 + $0x6c] sm:$0xf]
      %v2968 = vld [vmem:[#allocation2 + $0x70] sm:$0xf]
      %v2969 = vld [vmem:[#allocation2 + $0x74] sm:$0xf]
      %v2970 = vld [vmem:[#allocation2 + $0x78] sm:$0xf]
      %v2971 = vld [vmem:[#allocation2 + $0x7c] sm:$0xf]
      %v2972 = vld [vmem:[#allocation2 + $0x80] sm:$0xf]
      %v2973 = vld [vmem:[#allocation2 + $0x84] sm:$0xf]
      %v2974 = vld [vmem:[#allocation2 + $0x88] sm:$0x1]
      %s2975 = scalar_lea.vmem %s2, 128
      %v2976 = vld [vmem:[%s2975] sm:$0xf]
      %v2977 = vld [vmem:[%s2975 + $0x4] sm:$0xf]
      %v2978 = vld [vmem:[%s2975 + $0x8] sm:$0xf]
      %v2979 = vld [vmem:[%s2975 + $0xc] sm:$0xf]
      %v2980 = vld [vmem:[%s2975 + $0x10] sm:$0xf]
      %v2981 = vld [vmem:[%s2975 + $0x14] sm:$0xf]
      %v2982 = vld [vmem:[%s2975 + $0x18] sm:$0xf]
      %v2983 = vld [vmem:[%s2975 + $0x1c] sm:$0xf]
      %v2984 = vld [vmem:[%s2975 + $0x20] sm:$0xf]
      %v2985 = vld [vmem:[%s2975 + $0x24] sm:$0xf]
      %v2986 = vld [vmem:[%s2975 + $0x28] sm:$0xf]
      %v2987 = vld [vmem:[%s2975 + $0x2c] sm:$0xf]
      %v2988 = vld [vmem:[%s2975 + $0x30] sm:$0xf]
      %v2989 = vld [vmem:[%s2975 + $0x34] sm:$0xf]
      %v2990 = vld [vmem:[%s2975 + $0x38] sm:$0xf]
      %v2991 = vld [vmem:[%s2975 + $0x3c] sm:$0xf]
      %v2992 = vld [vmem:[#allocation2 + $0x88] sm:$0xf]
      %v2993 = vld [vmem:[#allocation2 + $0x8c] sm:$0xf]
      %v2994 = vld [vmem:[#allocation2 + $0x90] sm:$0x1]
      %s2995 = scalar_lea.vmem %s2, 320
      %v2996 = vld [vmem:[%s2995] sm:$0xf]
      %v2997 = vld [vmem:[%s2995 + $0x4] sm:$0xf]
      %v2998 = vld [vmem:[%s2995 + $0x8] sm:$0xf]
      %v2999 = vld [vmem:[%s2995 + $0xc] sm:$0xf]
      %v3000 = vld [vmem:[%s2995 + $0x10] sm:$0xf]
      %v3001 = vld [vmem:[%s2995 + $0x14] sm:$0xf]
      %v3002 = vld [vmem:[%s2995 + $0x18] sm:$0xf]
      %v3003 = vld [vmem:[%s2995 + $0x1c] sm:$0xf]
      %v3004 = vld [vmem:[%s2995 + $0x20] sm:$0xf]
      %v3005 = vld [vmem:[%s2995 + $0x24] sm:$0xf]
      %v3006 = vld [vmem:[%s2995 + $0x28] sm:$0xf]
      %v3007 = vld [vmem:[%s2995 + $0x2c] sm:$0xf]
      %v3008 = vld [vmem:[%s2995 + $0x30] sm:$0xf]
      %v3009 = vld [vmem:[%s2995 + $0x34] sm:$0xf]
      %v3010 = vld [vmem:[%s2995 + $0x38] sm:$0xf]
      %v3011 = vld [vmem:[%s2995 + $0x3c] sm:$0xf]
      %v3045 = vunpack.c.l.b16 %v2944
      %v3046 = vunpack.c.l.b16 %v2945
      %v3047 = vunpack.c.l.b16 %v2946
      %v3048 = vunpack.c.l.b16 %v2947
      %v3049 = vunpack.c.l.b16 %v2948
      %v3050 = vunpack.c.l.b16 %v2949
      %v3051 = vunpack.c.l.b16 %v2950
      %v3052 = vunpack.c.l.b16 %v2951
      %v3053 = vunpack.c.l.b16 %v2952
      %v3054 = vunpack.c.l.b16 %v2953
      %v3055 = vunpack.c.l.b16 %v2954
      %v3056 = vunpack.c.l.b16 %v2955
      %v3057 = vunpack.c.l.b16 %v2956
      %v3058 = vunpack.c.l.b16 %v2957
      %v3059 = vunpack.c.l.b16 %v2958
      %v3060 = vunpack.c.l.b16 %v2959
      %v3061 = vunpack.c.l.b16 %v2960
      %v3062 = vunpack.c.l.b16 %v2961
      %v3063 = vunpack.c.l.b16 %v2962
      %v3064 = vunpack.c.l.b16 %v2963
      %v3065 = vunpack.c.l.b16 %v2964
      %v3066 = vunpack.c.l.b16 %v2965
      %v3067 = vunpack.c.l.b16 %v2966
      %v3068 = vunpack.c.l.b16 %v2967
      %v3069 = vunpack.c.l.b16 %v2968
      %v3070 = vunpack.c.l.b16 %v2969
      %v3071 = vunpack.c.l.b16 %v2970
      %v3072 = vunpack.c.l.b16 %v2971
      %v3073 = vunpack.c.l.b16 %v2972
      %v3074 = vunpack.c.l.b16 %v2973
      %v3075 = vunpack.c.l.b16 %v2992
      %v3076 = vunpack.c.l.b16 %v2993
      %v3077 = vunpack.c.l.b16 %v2994
      %v3078 = vpack.c.b16 %v3046, %v3045
      %v3079 = vpack.c.b16 %v3048, %v3047
      %v3080 = vpack.c.b16 %v3050, %v3049
      %v3081 = vpack.c.b16 %v3052, %v3051
      %v3082 = vpack.c.b16 %v3054, %v3053
      %v3083 = vpack.c.b16 %v3056, %v3055
      %v3084 = vpack.c.b16 %v3058, %v3057
      %v3085 = vpack.c.b16 %v3060, %v3059
      %v3086 = vpack.c.b16 %v3062, %v3061
      %v3087 = vpack.c.b16 %v3064, %v3063
      %v3088 = vpack.c.b16 %v3066, %v3065
      %v3089 = vpack.c.b16 %v3068, %v3067
      %v3090 = vpack.c.b16 %v3070, %v3069
      %v3091 = vpack.c.b16 %v3072, %v3071
      %v3092 = vpack.c.b16 %v3074, %v3073
      %v3093 = vpack.c.b16 %v3076, %v3075
      %v3094 = vpack.c.b16 %v3077, %v3077
      %vm3095 = vsmask.f32 7424
      %v3097 = vshrl.u32 %v3078, 16
      %v3099 = vshll.u32 %v3078, 16
      %v3101 = vrot.slane %v3099, 1
      %v3102 = vor.u32 %v3097, %v3101
      %v3104 = vshll.u32 %v3079, 16
      %v3106 = vrot.slane %v3104, 1
      %v3107 = vsel %vm3095, %v3102, %v3106
      %v3108 = vshrl.u32 %v3079, 16
      %v3110 = vor.u32 %v3108, %v3106
      %v3112 = vshll.u32 %v3080, 16
      %v3114 = vrot.slane %v3112, 1
      %v3115 = vsel %vm3095, %v3110, %v3114
      %v3116 = vshrl.u32 %v3080, 16
      %v3118 = vor.u32 %v3116, %v3114
      %v3120 = vshll.u32 %v3081, 16
      %v3122 = vrot.slane %v3120, 1
      %v3123 = vsel %vm3095, %v3118, %v3122
      %v3124 = vshrl.u32 %v3081, 16
      %v3126 = vor.u32 %v3124, %v3122
      %v3128 = vshll.u32 %v3082, 16
      %v3130 = vrot.slane %v3128, 1
      %v3131 = vsel %vm3095, %v3126, %v3130
      %v3132 = vshrl.u32 %v3082, 16
      %v3134 = vor.u32 %v3132, %v3130
      %v3136 = vshll.u32 %v3083, 16
      %v3138 = vrot.slane %v3136, 1
      %v3139 = vsel %vm3095, %v3134, %v3138
      %v3140 = vshrl.u32 %v3083, 16
      %v3142 = vor.u32 %v3140, %v3138
      %v3144 = vshll.u32 %v3084, 16
      %v3146 = vrot.slane %v3144, 1
      %v3147 = vsel %vm3095, %v3142, %v3146
      %v3148 = vshrl.u32 %v3084, 16
      %v3150 = vor.u32 %v3148, %v3146
      %v3152 = vshll.u32 %v3085, 16
      %v3154 = vrot.slane %v3152, 1
      %v3155 = vsel %vm3095, %v3150, %v3154
      %v3156 = vshrl.u32 %v3085, 16
      %v3158 = vor.u32 %v3156, %v3154
      %v3160 = vshll.u32 %v3086, 16
      %v3162 = vrot.slane %v3160, 1
      %v3163 = vsel %vm3095, %v3158, %v3162
      %v3164 = vshrl.u32 %v3086, 16
      %v3166 = vor.u32 %v3164, %v3162
      %v3168 = vshll.u32 %v3087, 16
      %v3170 = vrot.slane %v3168, 1
      %v3171 = vsel %vm3095, %v3166, %v3170
      %v3172 = vshrl.u32 %v3087, 16
      %v3174 = vor.u32 %v3172, %v3170
      %v3176 = vshll.u32 %v3088, 16
      %v3178 = vrot.slane %v3176, 1
      %v3179 = vsel %vm3095, %v3174, %v3178
      %v3180 = vshrl.u32 %v3088, 16
      %v3182 = vor.u32 %v3180, %v3178
      %v3184 = vshll.u32 %v3089, 16
      %v3186 = vrot.slane %v3184, 1
      %v3187 = vsel %vm3095, %v3182, %v3186
      %v3188 = vshrl.u32 %v3089, 16
      %v3190 = vor.u32 %v3188, %v3186
      %v3192 = vshll.u32 %v3090, 16
      %v3194 = vrot.slane %v3192, 1
      %v3195 = vsel %vm3095, %v3190, %v3194
      %v3196 = vshrl.u32 %v3090, 16
      %v3198 = vor.u32 %v3196, %v3194
      %v3200 = vshll.u32 %v3091, 16
      %v3202 = vrot.slane %v3200, 1
      %v3203 = vsel %vm3095, %v3198, %v3202
      %v3204 = vshrl.u32 %v3091, 16
      %v3206 = vor.u32 %v3204, %v3202
      %v3208 = vshll.u32 %v3092, 16
      %v3210 = vrot.slane %v3208, 1
      %v3211 = vsel %vm3095, %v3206, %v3210
      %v3212 = vshrl.u32 %v3092, 16
      %v3214 = vor.u32 %v3212, %v3210
      %v3216 = vshll.u32 %v3093, 16
      %v3218 = vrot.slane %v3216, 1
      %v3219 = vsel %vm3095, %v3214, %v3218
      %v3220 = vshrl.u32 %v3093, 16
      %v3222 = vor.u32 %v3220, %v3218
      %v3224 = vshll.u32 %v3094, 16
      %v3226 = vrot.slane %v3224, 1
      %v3227 = vsel %vm3095, %v3222, %v3226
      %v3260 = vunpack.c.l.b16 %v2996
      %v3261 = vunpack.c.l.b16 %v2997
      %v3262 = vunpack.c.l.b16 %v2998
      %v3263 = vunpack.c.l.b16 %v2999
      %v3264 = vunpack.c.l.b16 %v3000
      %v3265 = vunpack.c.l.b16 %v3001
      %v3266 = vunpack.c.l.b16 %v3002
      %v3267 = vunpack.c.l.b16 %v3003
      %v3268 = vunpack.c.l.b16 %v3004
      %v3269 = vunpack.c.l.b16 %v3005
      %v3270 = vunpack.c.l.b16 %v3006
      %v3271 = vunpack.c.l.b16 %v3007
      %v3272 = vunpack.c.l.b16 %v3008
      %v3273 = vunpack.c.l.b16 %v3009
      %v3274 = vunpack.c.l.b16 %v3010
      %v3275 = vunpack.c.l.b16 %v3011
      %v3276 = vpack.c.b16 %v3261, %v3260
      %v3277 = vpack.c.b16 %v3263, %v3262
      %v3278 = vpack.c.b16 %v3265, %v3264
      %v3279 = vpack.c.b16 %v3267, %v3266
      %v3280 = vpack.c.b16 %v3269, %v3268
      %v3281 = vpack.c.b16 %v3271, %v3270
      %v3282 = vpack.c.b16 %v3273, %v3272
      %v3283 = vpack.c.b16 %v3275, %v3274
      %3292 = vmatpush.bf16.msra.mxu0 %v3283
      %3293 = vmatpush.bf16.msra.mxu0 %v3282
      %3294 = vmatpush.bf16.msra.mxu0 %v3281
      %3295 = vmatpush.bf16.msra.mxu0 %v3280
      %3296 = vmatpush.bf16.msra.mxu0 %v3279
      %3297 = vmatpush.bf16.msra.mxu0 %v3278
      %3298 = vmatpush.bf16.msra.mxu0 %v3277
      %3299 = vmatpush.bf16.msra.mxu0 %v3276
      %3300 = vmatmul.bf16.gmra.mxu0 %v3107
      %v3301 = vpop.f32.mrf.mxu0
      %v3302 = vadd.f32 0.0, %v3301
      %v3303 = vpop.f32.mrf.mxu0
      %v3304 = vadd.f32 0.0, %v3303
      %3305 = vmatmul.bf16.gmra.mxu0 %v3115
      %v3306 = vpop.f32.mrf.mxu0
      %v3307 = vadd.f32 0.0, %v3306
      %v3308 = vpop.f32.mrf.mxu0
      %v3309 = vadd.f32 0.0, %v3308
      %3310 = vmatmul.bf16.gmra.mxu0 %v3123
      %v3311 = vpop.f32.mrf.mxu0
      %v3312 = vadd.f32 0.0, %v3311
      %v3313 = vpop.f32.mrf.mxu0
      %v3314 = vadd.f32 0.0, %v3313
      %3315 = vmatmul.bf16.gmra.mxu0 %v3131
      %v3316 = vpop.f32.mrf.mxu0
      %v3317 = vadd.f32 0.0, %v3316
      %v3318 = vpop.f32.mrf.mxu0
      %v3319 = vadd.f32 0.0, %v3318
      %3320 = vmatmul.bf16.gmra.mxu0 %v3139
      %v3321 = vpop.f32.mrf.mxu0
      %v3322 = vadd.f32 0.0, %v3321
      %v3323 = vpop.f32.mrf.mxu0
      %v3324 = vadd.f32 0.0, %v3323
      %3325 = vmatmul.bf16.gmra.mxu0 %v3147
      %v3326 = vpop.f32.mrf.mxu0
      %v3327 = vadd.f32 0.0, %v3326
      %v3328 = vpop.f32.mrf.mxu0
      %v3329 = vadd.f32 0.0, %v3328
      %3330 = vmatmul.bf16.gmra.mxu0 %v3155
      %v3331 = vpop.f32.mrf.mxu0
      %v3332 = vadd.f32 0.0, %v3331
      %v3333 = vpop.f32.mrf.mxu0
      %v3334 = vadd.f32 0.0, %v3333
      %3335 = vmatmul.bf16.gmra.mxu0 %v3163
      %v3336 = vpop.f32.mrf.mxu0
      %v3337 = vadd.f32 0.0, %v3336
      %v3338 = vpop.f32.mrf.mxu0
      %v3339 = vadd.f32 0.0, %v3338
      %3340 = vmatmul.bf16.gmra.mxu0 %v3171
      %v3341 = vpop.f32.mrf.mxu0
      %v3342 = vadd.f32 0.0, %v3341
      %v3343 = vpop.f32.mrf.mxu0
      %v3344 = vadd.f32 0.0, %v3343
      %3345 = vmatmul.bf16.gmra.mxu0 %v3179
      %v3346 = vpop.f32.mrf.mxu0
      %v3347 = vadd.f32 0.0, %v3346
      %v3348 = vpop.f32.mrf.mxu0
      %v3349 = vadd.f32 0.0, %v3348
      %3350 = vmatmul.bf16.gmra.mxu0 %v3187
      %v3351 = vpop.f32.mrf.mxu0
      %v3352 = vadd.f32 0.0, %v3351
      %v3353 = vpop.f32.mrf.mxu0
      %v3354 = vadd.f32 0.0, %v3353
      %3355 = vmatmul.bf16.gmra.mxu0 %v3195
      %v3356 = vpop.f32.mrf.mxu0
      %v3357 = vadd.f32 0.0, %v3356
      %v3358 = vpop.f32.mrf.mxu0
      %v3359 = vadd.f32 0.0, %v3358
      %3360 = vmatmul.bf16.gmra.mxu0 %v3203
      %v3361 = vpop.f32.mrf.mxu0
      %v3362 = vadd.f32 0.0, %v3361
      %v3363 = vpop.f32.mrf.mxu0
      %v3364 = vadd.f32 0.0, %v3363
      %3365 = vmatmul.bf16.gmra.mxu0 %v3211
      %v3366 = vpop.f32.mrf.mxu0
      %v3367 = vadd.f32 0.0, %v3366
      %v3368 = vpop.f32.mrf.mxu0
      %v3369 = vadd.f32 0.0, %v3368
      %3370 = vmatmul.bf16.gmra.mxu0 %v3219
      %v3371 = vpop.f32.mrf.mxu0
      %v3372 = vadd.f32 0.0, %v3371
      %v3373 = vpop.f32.mrf.mxu0
      %v3374 = vadd.f32 0.0, %v3373
      %3375 = vmatmul.bf16.gmra.mxu0 %v3227
      %v3376 = vpop.f32.mrf.mxu0
      %v3377 = vadd.f32 0.0, %v3376
      %v3378 = vpop.f32.mrf.mxu0
      %v3379 = vadd.f32 0.0, %v3378
      %3380 = vdwg.mxu0
      %v3384 = vunpack.c.l.b16 %v2942
      %v3385 = vunpack.c.l.b16 %v2943
      %v3386 = vunpack.c.l.b16 %v2974
      %v3387 = vpack.c.b16 %v3385, %v3384
      %v3388 = vpack.c.b16 %v3386, %v3386
      %v3390 = vshrl.u32 %v3387, 16
      %v3392 = vshll.u32 %v3387, 16
      %v3394 = vrot.slane %v3392, 1
      %v3395 = vor.u32 %v3390, %v3394
      %v3396 = vsel %vm3095, %v3395, %v3101
      %v3398 = vshll.u32 %v3388, 16
      %v3400 = vrot.slane %v3398, 1
      %v3401 = vsel %vm3095, %v3214, %v3400
      %v3420 = vunpack.c.l.b16 %v2976
      %v3421 = vunpack.c.l.b16 %v2977
      %v3422 = vunpack.c.l.b16 %v2978
      %v3423 = vunpack.c.l.b16 %v2979
      %v3424 = vunpack.c.l.b16 %v2980
      %v3425 = vunpack.c.l.b16 %v2981
      %v3426 = vunpack.c.l.b16 %v2982
      %v3427 = vunpack.c.l.b16 %v2983
      %v3428 = vunpack.c.l.b16 %v2984
      %v3429 = vunpack.c.l.b16 %v2985
      %v3430 = vunpack.c.l.b16 %v2986
      %v3431 = vunpack.c.l.b16 %v2987
      %v3432 = vunpack.c.l.b16 %v2988
      %v3433 = vunpack.c.l.b16 %v2989
      %v3434 = vunpack.c.l.b16 %v2990
      %v3435 = vunpack.c.l.b16 %v2991
      %v3436 = vpack.c.b16 %v3421, %v3420
      %v3437 = vpack.c.b16 %v3423, %v3422
      %v3438 = vpack.c.b16 %v3425, %v3424
      %v3439 = vpack.c.b16 %v3427, %v3426
      %v3440 = vpack.c.b16 %v3429, %v3428
      %v3441 = vpack.c.b16 %v3431, %v3430
      %v3442 = vpack.c.b16 %v3433, %v3432
      %v3443 = vpack.c.b16 %v3435, %v3434
      %3452 = vmatpush.bf16.msra.mxu0 %v3443
      %3453 = vmatpush.bf16.msra.mxu0 %v3442
      %3454 = vmatpush.bf16.msra.mxu0 %v3441
      %3455 = vmatpush.bf16.msra.mxu0 %v3440
      %3456 = vmatpush.bf16.msra.mxu0 %v3439
      %3457 = vmatpush.bf16.msra.mxu0 %v3438
      %3458 = vmatpush.bf16.msra.mxu0 %v3437
      %3459 = vmatpush.bf16.msra.mxu0 %v3436
      %3460 = vmatmul.bf16.gmra.mxu0 %v3396
      %v3461 = vpop.f32.mrf.mxu0
      %v3462 = vadd.f32 %v3302, %v3461
      %v3463 = vpop.f32.mrf.mxu0
      %v3464 = vadd.f32 %v3304, %v3463
      %3465 = vmatmul.bf16.gmra.mxu0 %v3107
      %v3466 = vpop.f32.mrf.mxu0
      %v3467 = vadd.f32 %v3307, %v3466
      %v3468 = vpop.f32.mrf.mxu0
      %v3469 = vadd.f32 %v3309, %v3468
      %3470 = vmatmul.bf16.gmra.mxu0 %v3115
      %v3471 = vpop.f32.mrf.mxu0
      %v3472 = vadd.f32 %v3312, %v3471
      %v3473 = vpop.f32.mrf.mxu0
      %v3474 = vadd.f32 %v3314, %v3473
      %3475 = vmatmul.bf16.gmra.mxu0 %v3123
      %v3476 = vpop.f32.mrf.mxu0
      %v3477 = vadd.f32 %v3317, %v3476
      %v3478 = vpop.f32.mrf.mxu0
      %v3479 = vadd.f32 %v3319, %v3478
      %3480 = vmatmul.bf16.gmra.mxu0 %v3131
      %v3481 = vpop.f32.mrf.mxu0
      %v3482 = vadd.f32 %v3322, %v3481
      %v3483 = vpop.f32.mrf.mxu0
      %v3484 = vadd.f32 %v3324, %v3483
      %3485 = vmatmul.bf16.gmra.mxu0 %v3139
      %v3486 = vpop.f32.mrf.mxu0
      %v3487 = vadd.f32 %v3327, %v3486
      %v3488 = vpop.f32.mrf.mxu0
      %v3489 = vadd.f32 %v3329, %v3488
      %3490 = vmatmul.bf16.gmra.mxu0 %v3147
      %v3491 = vpop.f32.mrf.mxu0
      %v3492 = vadd.f32 %v3332, %v3491
      %v3493 = vpop.f32.mrf.mxu0
      %v3494 = vadd.f32 %v3334, %v3493
      %3495 = vmatmul.bf16.gmra.mxu0 %v3155
      %v3496 = vpop.f32.mrf.mxu0
      %v3497 = vadd.f32 %v3337, %v3496
      %v3498 = vpop.f32.mrf.mxu0
      %v3499 = vadd.f32 %v3339, %v3498
      %3500 = vmatmul.bf16.gmra.mxu0 %v3163
      %v3501 = vpop.f32.mrf.mxu0
      %v3502 = vadd.f32 %v3342, %v3501
      %v3503 = vpop.f32.mrf.mxu0
      %v3504 = vadd.f32 %v3344, %v3503
      %3505 = vmatmul.bf16.gmra.mxu0 %v3171
      %v3506 = vpop.f32.mrf.mxu0
      %v3507 = vadd.f32 %v3347, %v3506
      %v3508 = vpop.f32.mrf.mxu0
      %v3509 = vadd.f32 %v3349, %v3508
      %3510 = vmatmul.bf16.gmra.mxu0 %v3179
      %v3511 = vpop.f32.mrf.mxu0
      %v3512 = vadd.f32 %v3352, %v3511
      %v3513 = vpop.f32.mrf.mxu0
      %v3514 = vadd.f32 %v3354, %v3513
      %3515 = vmatmul.bf16.gmra.mxu0 %v3187
      %v3516 = vpop.f32.mrf.mxu0
      %v3517 = vadd.f32 %v3357, %v3516
      %v3518 = vpop.f32.mrf.mxu0
      %v3519 = vadd.f32 %v3359, %v3518
      %3520 = vmatmul.bf16.gmra.mxu0 %v3195
      %v3521 = vpop.f32.mrf.mxu0
      %v3522 = vadd.f32 %v3362, %v3521
      %v3523 = vpop.f32.mrf.mxu0
      %v3524 = vadd.f32 %v3364, %v3523
      %3525 = vmatmul.bf16.gmra.mxu0 %v3203
      %v3526 = vpop.f32.mrf.mxu0
      %v3527 = vadd.f32 %v3367, %v3526
      %v3528 = vpop.f32.mrf.mxu0
      %v3529 = vadd.f32 %v3369, %v3528
      %3530 = vmatmul.bf16.gmra.mxu0 %v3211
      %v3531 = vpop.f32.mrf.mxu0
      %v3532 = vadd.f32 %v3372, %v3531
      %v3533 = vpop.f32.mrf.mxu0
      %v3534 = vadd.f32 %v3374, %v3533
      %3535 = vmatmul.bf16.gmra.mxu0 %v3401
      %v3536 = vpop.f32.mrf.mxu0
      %v3537 = vadd.f32 %v3377, %v3536
      %v3538 = vpop.f32.mrf.mxu0
      %v3539 = vadd.f32 %v3379, %v3538
      %3540 = vdwg.mxu0
      %v3541 = vld [vmem:[#allocation2 + $0x18] sm:$0xf]
      %v3542 = vld [vmem:[#allocation2 + $0x1c] sm:$0xf]
      %v3543 = vld [vmem:[#allocation2 + $0x20] sm:$0xf]
      %v3544 = vld [vmem:[#allocation2 + $0x24] sm:$0xf]
      %v3545 = vld [vmem:[#allocation2 + $0x28] sm:$0xf]
      %v3546 = vld [vmem:[#allocation2 + $0x2c] sm:$0xf]
      %v3547 = vld [vmem:[#allocation2 + $0x30] sm:$0xf]
      %v3548 = vld [vmem:[#allocation2 + $0x34] sm:$0xf]
      %v3549 = vld [vmem:[#allocation2 + $0x38] sm:$0xf]
      %v3550 = vld [vmem:[#allocation2 + $0x3c] sm:$0xf]
      %v3551 = vld [vmem:[#allocation2 + $0x40] sm:$0xf]
      %v3552 = vld [vmem:[#allocation2 + $0x44] sm:$0xf]
      %v3553 = vld [vmem:[#allocation2 + $0x48] sm:$0xf]
      %v3554 = vld [vmem:[#allocation2 + $0x4c] sm:$0xf]
      %v3555 = vld [vmem:[#allocation2 + $0x50] sm:$0xf]
      %v3556 = vld [vmem:[#allocation2 + $0x54] sm:$0xf]
      %v3557 = vld [vmem:[#allocation2 + $0x58] sm:$0xf]
      %v3558 = vld [vmem:[#allocation2 + $0x5c] sm:$0xf]
      %v3559 = vld [vmem:[#allocation2 + $0x60] sm:$0xf]
      %v3560 = vld [vmem:[#allocation2 + $0x64] sm:$0xf]
      %v3561 = vld [vmem:[#allocation2 + $0x68] sm:$0xf]
      %v3562 = vld [vmem:[#allocation2 + $0x6c] sm:$0xf]
      %v3563 = vld [vmem:[#allocation2 + $0x70] sm:$0xf]
      %v3564 = vld [vmem:[#allocation2 + $0x74] sm:$0xf]
      %v3565 = vld [vmem:[#allocation2 + $0x78] sm:$0xf]
      %v3566 = vld [vmem:[#allocation2 + $0x7c] sm:$0xf]
      %v3567 = vld [vmem:[#allocation2 + $0x80] sm:$0xf]
      %v3568 = vld [vmem:[#allocation2 + $0x84] sm:$0xf]
      %v3569 = vld [vmem:[#allocation2 + $0x88] sm:$0xf]
      %v3570 = vld [vmem:[#allocation2 + $0x8c] sm:$0xf]
      %v3571 = vld [vmem:[#allocation2 + $0x90] sm:$0xf]
      %v3572 = vld [vmem:[#allocation2 + $0x94] sm:$0xf]
      %v3573 = vld [vmem:[#allocation2 + $0x98] sm:$0x1]
      %s3574 = scalar_lea.vmem %s2, 512
      %v3575 = vld [vmem:[%s3574] sm:$0xf]
      %v3576 = vld [vmem:[%s3574 + $0x4] sm:$0xf]
      %v3577 = vld [vmem:[%s3574 + $0x8] sm:$0xf]
      %v3578 = vld [vmem:[%s3574 + $0xc] sm:$0xf]
      %v3579 = vld [vmem:[%s3574 + $0x10] sm:$0xf]
      %v3580 = vld [vmem:[%s3574 + $0x14] sm:$0xf]
      %v3581 = vld [vmem:[%s3574 + $0x18] sm:$0xf]
      %v3582 = vld [vmem:[%s3574 + $0x1c] sm:$0xf]
      %v3583 = vld [vmem:[%s3574 + $0x20] sm:$0xf]
      %v3584 = vld [vmem:[%s3574 + $0x24] sm:$0xf]
      %v3585 = vld [vmem:[%s3574 + $0x28] sm:$0xf]
      %v3586 = vld [vmem:[%s3574 + $0x2c] sm:$0xf]
      %v3587 = vld [vmem:[%s3574 + $0x30] sm:$0xf]
      %v3588 = vld [vmem:[%s3574 + $0x34] sm:$0xf]
      %v3589 = vld [vmem:[%s3574 + $0x38] sm:$0xf]
      %v3590 = vld [vmem:[%s3574 + $0x3c] sm:$0xf]
      %v3624 = vunpack.c.l.b16 %v3541
      %v3625 = vunpack.c.l.b16 %v3542
      %v3626 = vunpack.c.l.b16 %v3543
      %v3627 = vunpack.c.l.b16 %v3544
      %v3628 = vunpack.c.l.b16 %v3545
      %v3629 = vunpack.c.l.b16 %v3546
      %v3630 = vunpack.c.l.b16 %v3547
      %v3631 = vunpack.c.l.b16 %v3548
      %v3632 = vunpack.c.l.b16 %v3549
      %v3633 = vunpack.c.l.b16 %v3550
      %v3634 = vunpack.c.l.b16 %v3551
      %v3635 = vunpack.c.l.b16 %v3552
      %v3636 = vunpack.c.l.b16 %v3553
      %v3637 = vunpack.c.l.b16 %v3554
      %v3638 = vunpack.c.l.b16 %v3555
      %v3639 = vunpack.c.l.b16 %v3556
      %v3640 = vunpack.c.l.b16 %v3557
      %v3641 = vunpack.c.l.b16 %v3558
      %v3642 = vunpack.c.l.b16 %v3559
      %v3643 = vunpack.c.l.b16 %v3560
      %v3644 = vunpack.c.l.b16 %v3561
      %v3645 = vunpack.c.l.b16 %v3562
      %v3646 = vunpack.c.l.b16 %v3563
      %v3647 = vunpack.c.l.b16 %v3564
      %v3648 = vunpack.c.l.b16 %v3565
      %v3649 = vunpack.c.l.b16 %v3566
      %v3650 = vunpack.c.l.b16 %v3567
      %v3651 = vunpack.c.l.b16 %v3568
      %v3652 = vunpack.c.l.b16 %v3569
      %v3653 = vunpack.c.l.b16 %v3570
      %v3654 = vunpack.c.l.b16 %v3571
      %v3655 = vunpack.c.l.b16 %v3572
      %v3656 = vunpack.c.l.b16 %v3573
      %v3657 = vpack.c.b16 %v3625, %v3624
      %v3658 = vpack.c.b16 %v3627, %v3626
      %v3659 = vpack.c.b16 %v3629, %v3628
      %v3660 = vpack.c.b16 %v3631, %v3630
      %v3661 = vpack.c.b16 %v3633, %v3632
      %v3662 = vpack.c.b16 %v3635, %v3634
      %v3663 = vpack.c.b16 %v3637, %v3636
      %v3664 = vpack.c.b16 %v3639, %v3638
      %v3665 = vpack.c.b16 %v3641, %v3640
      %v3666 = vpack.c.b16 %v3643, %v3642
      %v3667 = vpack.c.b16 %v3645, %v3644
      %v3668 = vpack.c.b16 %v3647, %v3646
      %v3669 = vpack.c.b16 %v3649, %v3648
      %v3670 = vpack.c.b16 %v3651, %v3650
      %v3671 = vpack.c.b16 %v3653, %v3652
      %v3672 = vpack.c.b16 %v3655, %v3654
      %v3673 = vpack.c.b16 %v3656, %v3656
      %v3675 = vshrl.u32 %v3657, 16
      %v3677 = vshll.u32 %v3657, 16
      %v3679 = vrot.slane %v3677, 1
      %v3680 = vor.u32 %v3675, %v3679
      %v3682 = vshll.u32 %v3658, 16
      %v3684 = vrot.slane %v3682, 1
      %v3685 = vsel %vm3095, %v3680, %v3684
      %v3686 = vshrl.u32 %v3658, 16
      %v3688 = vor.u32 %v3686, %v3684
      %v3690 = vshll.u32 %v3659, 16
      %v3692 = vrot.slane %v3690, 1
      %v3693 = vsel %vm3095, %v3688, %v3692
      %v3694 = vshrl.u32 %v3659, 16
      %v3696 = vor.u32 %v3694, %v3692
      %v3698 = vshll.u32 %v3660, 16
      %v3700 = vrot.slane %v3698, 1
      %v3701 = vsel %vm3095, %v3696, %v3700
      %v3702 = vshrl.u32 %v3660, 16
      %v3704 = vor.u32 %v3702, %v3700
      %v3706 = vshll.u32 %v3661, 16
      %v3708 = vrot.slane %v3706, 1
      %v3709 = vsel %vm3095, %v3704, %v3708
      %v3710 = vshrl.u32 %v3661, 16
      %v3712 = vor.u32 %v3710, %v3708
      %v3714 = vshll.u32 %v3662, 16
      %v3716 = vrot.slane %v3714, 1
      %v3717 = vsel %vm3095, %v3712, %v3716
      %v3718 = vshrl.u32 %v3662, 16
      %v3720 = vor.u32 %v3718, %v3716
      %v3722 = vshll.u32 %v3663, 16
      %v3724 = vrot.slane %v3722, 1
      %v3725 = vsel %vm3095, %v3720, %v3724
      %v3726 = vshrl.u32 %v3663, 16
      %v3728 = vor.u32 %v3726, %v3724
      %v3730 = vshll.u32 %v3664, 16
      %v3732 = vrot.slane %v3730, 1
      %v3733 = vsel %vm3095, %v3728, %v3732
      %v3734 = vshrl.u32 %v3664, 16
      %v3736 = vor.u32 %v3734, %v3732
      %v3738 = vshll.u32 %v3665, 16
      %v3740 = vrot.slane %v3738, 1
      %v3741 = vsel %vm3095, %v3736, %v3740
      %v3742 = vshrl.u32 %v3665, 16
      %v3744 = vor.u32 %v3742, %v3740
      %v3746 = vshll.u32 %v3666, 16
      %v3748 = vrot.slane %v3746, 1
      %v3749 = vsel %vm3095, %v3744, %v3748
      %v3750 = vshrl.u32 %v3666, 16
      %v3752 = vor.u32 %v3750, %v3748
      %v3754 = vshll.u32 %v3667, 16
      %v3756 = vrot.slane %v3754, 1
      %v3757 = vsel %vm3095, %v3752, %v3756
      %v3758 = vshrl.u32 %v3667, 16
      %v3760 = vor.u32 %v3758, %v3756
      %v3762 = vshll.u32 %v3668, 16
      %v3764 = vrot.slane %v3762, 1
      %v3765 = vsel %vm3095, %v3760, %v3764
      %v3766 = vshrl.u32 %v3668, 16
      %v3768 = vor.u32 %v3766, %v3764
      %v3770 = vshll.u32 %v3669, 16
      %v3772 = vrot.slane %v3770, 1
      %v3773 = vsel %vm3095, %v3768, %v3772
      %v3774 = vshrl.u32 %v3669, 16
      %v3776 = vor.u32 %v3774, %v3772
      %v3778 = vshll.u32 %v3670, 16
      %v3780 = vrot.slane %v3778, 1
      %v3781 = vsel %vm3095, %v3776, %v3780
      %v3782 = vshrl.u32 %v3670, 16
      %v3784 = vor.u32 %v3782, %v3780
      %v3786 = vshll.u32 %v3671, 16
      %v3788 = vrot.slane %v3786, 1
      %v3789 = vsel %vm3095, %v3784, %v3788
      %v3790 = vshrl.u32 %v3671, 16
      %v3792 = vor.u32 %v3790, %v3788
      %v3794 = vshll.u32 %v3672, 16
      %v3796 = vrot.slane %v3794, 1
      %v3797 = vsel %vm3095, %v3792, %v3796
      %v3798 = vshrl.u32 %v3672, 16
      %v3800 = vor.u32 %v3798, %v3796
      %v3802 = vshll.u32 %v3673, 16
      %v3804 = vrot.slane %v3802, 1
      %v3805 = vsel %vm3095, %v3800, %v3804
      %v3838 = vunpack.c.l.b16 %v3575
      %v3839 = vunpack.c.l.b16 %v3576
      %v3840 = vunpack.c.l.b16 %v3577
      %v3841 = vunpack.c.l.b16 %v3578
      %v3842 = vunpack.c.l.b16 %v3579
      %v3843 = vunpack.c.l.b16 %v3580
      %v3844 = vunpack.c.l.b16 %v3581
      %v3845 = vunpack.c.l.b16 %v3582
      %v3846 = vunpack.c.l.b16 %v3583
      %v3847 = vunpack.c.l.b16 %v3584
      %v3848 = vunpack.c.l.b16 %v3585
      %v3849 = vunpack.c.l.b16 %v3586
      %v3850 = vunpack.c.l.b16 %v3587
      %v3851 = vunpack.c.l.b16 %v3588
      %v3852 = vunpack.c.l.b16 %v3589
      %v3853 = vunpack.c.l.b16 %v3590
      %v3854 = vpack.c.b16 %v3839, %v3838
      %v3855 = vpack.c.b16 %v3841, %v3840
      %v3856 = vpack.c.b16 %v3843, %v3842
      %v3857 = vpack.c.b16 %v3845, %v3844
      %v3858 = vpack.c.b16 %v3847, %v3846
      %v3859 = vpack.c.b16 %v3849, %v3848
      %v3860 = vpack.c.b16 %v3851, %v3850
      %v3861 = vpack.c.b16 %v3853, %v3852
      %3870 = vmatpush.bf16.msra.mxu0 %v3861
      %3871 = vmatpush.bf16.msra.mxu0 %v3860
      %3872 = vmatpush.bf16.msra.mxu0 %v3859
      %3873 = vmatpush.bf16.msra.mxu0 %v3858
      %3874 = vmatpush.bf16.msra.mxu0 %v3857
      %3875 = vmatpush.bf16.msra.mxu0 %v3856
      %3876 = vmatpush.bf16.msra.mxu0 %v3855
      %3877 = vmatpush.bf16.msra.mxu0 %v3854
      %3878 = vmatmul.bf16.gmra.mxu0 %v3685
      %v3879 = vpop.f32.mrf.mxu0
      %v3880 = vadd.f32 0.0, %v3879
      %v3881 = vpop.f32.mrf.mxu0
      %v3882 = vadd.f32 0.0, %v3881
      %3883 = vmatmul.bf16.gmra.mxu0 %v3693
      %v3884 = vpop.f32.mrf.mxu0
      %v3885 = vadd.f32 0.0, %v3884
      %v3886 = vpop.f32.mrf.mxu0
      %v3887 = vadd.f32 0.0, %v3886
      %3888 = vmatmul.bf16.gmra.mxu0 %v3701
      %v3889 = vpop.f32.mrf.mxu0
      %v3890 = vadd.f32 0.0, %v3889
      %v3891 = vpop.f32.mrf.mxu0
      %v3892 = vadd.f32 0.0, %v3891
      %3893 = vmatmul.bf16.gmra.mxu0 %v3709
      %v3894 = vpop.f32.mrf.mxu0
      %v3895 = vadd.f32 0.0, %v3894
      %v3896 = vpop.f32.mrf.mxu0
      %v3897 = vadd.f32 0.0, %v3896
      %3898 = vmatmul.bf16.gmra.mxu0 %v3717
      %v3899 = vpop.f32.mrf.mxu0
      %v3900 = vadd.f32 0.0, %v3899
      %v3901 = vpop.f32.mrf.mxu0
      %v3902 = vadd.f32 0.0, %v3901
      %3903 = vmatmul.bf16.gmra.mxu0 %v3725
      %v3904 = vpop.f32.mrf.mxu0
      %v3905 = vadd.f32 0.0, %v3904
      %v3906 = vpop.f32.mrf.mxu0
      %v3907 = vadd.f32 0.0, %v3906
      %3908 = vmatmul.bf16.gmra.mxu0 %v3733
      %v3909 = vpop.f32.mrf.mxu0
      %v3910 = vadd.f32 0.0, %v3909
      %v3911 = vpop.f32.mrf.mxu0
      %v3912 = vadd.f32 0.0, %v3911
      %3913 = vmatmul.bf16.gmra.mxu0 %v3741
      %v3914 = vpop.f32.mrf.mxu0
      %v3915 = vadd.f32 0.0, %v3914
      %v3916 = vpop.f32.mrf.mxu0
      %v3917 = vadd.f32 0.0, %v3916
      %3918 = vmatmul.bf16.gmra.mxu0 %v3749
      %v3919 = vpop.f32.mrf.mxu0
      %v3920 = vadd.f32 0.0, %v3919
      %v3921 = vpop.f32.mrf.mxu0
      %v3922 = vadd.f32 0.0, %v3921
      %3923 = vmatmul.bf16.gmra.mxu0 %v3757
      %v3924 = vpop.f32.mrf.mxu0
      %v3925 = vadd.f32 0.0, %v3924
      %v3926 = vpop.f32.mrf.mxu0
      %v3927 = vadd.f32 0.0, %v3926
      %3928 = vmatmul.bf16.gmra.mxu0 %v3765
      %v3929 = vpop.f32.mrf.mxu0
      %v3930 = vadd.f32 0.0, %v3929
      %v3931 = vpop.f32.mrf.mxu0
      %v3932 = vadd.f32 0.0, %v3931
      %3933 = vmatmul.bf16.gmra.mxu0 %v3773
      %v3934 = vpop.f32.mrf.mxu0
      %v3935 = vadd.f32 0.0, %v3934
      %v3936 = vpop.f32.mrf.mxu0
      %v3937 = vadd.f32 0.0, %v3936
      %3938 = vmatmul.bf16.gmra.mxu0 %v3781
      %v3939 = vpop.f32.mrf.mxu0
      %v3940 = vadd.f32 0.0, %v3939
      %v3941 = vpop.f32.mrf.mxu0
      %v3942 = vadd.f32 0.0, %v3941
      %3943 = vmatmul.bf16.gmra.mxu0 %v3789
      %v3944 = vpop.f32.mrf.mxu0
      %v3945 = vadd.f32 0.0, %v3944
      %v3946 = vpop.f32.mrf.mxu0
      %v3947 = vadd.f32 0.0, %v3946
      %3948 = vmatmul.bf16.gmra.mxu0 %v3797
      %v3949 = vpop.f32.mrf.mxu0
      %v3950 = vadd.f32 0.0, %v3949
      %v3951 = vpop.f32.mrf.mxu0
      %v3952 = vadd.f32 0.0, %v3951
      %3953 = vmatmul.bf16.gmra.mxu0 %v3805
      %v3954 = vpop.f32.mrf.mxu0
      %v3955 = vadd.f32 0.0, %v3954
      %v3956 = vpop.f32.mrf.mxu0
      %v3957 = vadd.f32 0.0, %v3956
      %3958 = vdwg.mxu0
      %v3959 = vadd.f32 %v3462, %v3880
      %v3960 = vadd.f32 %v3464, %v3882
      %v3961 = vadd.f32 %v3467, %v3885
      %v3962 = vadd.f32 %v3469, %v3887
      %v3963 = vadd.f32 %v3472, %v3890
      %v3964 = vadd.f32 %v3474, %v3892
      %v3965 = vadd.f32 %v3477, %v3895
      %v3966 = vadd.f32 %v3479, %v3897
      %v3967 = vadd.f32 %v3482, %v3900
      %v3968 = vadd.f32 %v3484, %v3902
      %v3969 = vadd.f32 %v3487, %v3905
      %v3970 = vadd.f32 %v3489, %v3907
      %v3971 = vadd.f32 %v3492, %v3910
      %v3972 = vadd.f32 %v3494, %v3912
      %v3973 = vadd.f32 %v3497, %v3915
      %v3974 = vadd.f32 %v3499, %v3917
      %v3975 = vadd.f32 %v3502, %v3920
      %v3976 = vadd.f32 %v3504, %v3922
      %v3977 = vadd.f32 %v3507, %v3925
      %v3978 = vadd.f32 %v3509, %v3927
      %v3979 = vadd.f32 %v3512, %v3930
      %v3980 = vadd.f32 %v3514, %v3932
      %v3981 = vadd.f32 %v3517, %v3935
      %v3982 = vadd.f32 %v3519, %v3937
      %v3983 = vadd.f32 %v3522, %v3940
      %v3984 = vadd.f32 %v3524, %v3942
      %v3985 = vadd.f32 %v3527, %v3945
      %v3986 = vadd.f32 %v3529, %v3947
      %v3987 = vadd.f32 %v3532, %v3950
      %v3988 = vadd.f32 %v3534, %v3952
      %v3989 = vadd.f32 %v3537, %v3955
      %v3990 = vadd.f32 %v3539, %v3957
      %v3991 = vmul.f32 %v2910, %v1150
      %v3992 = vmul.f32 %v2911, %v1151
      %v3993 = vmul.f32 %v2912, %v1152
      %v3994 = vmul.f32 %v2913, %v1153
      %v3995 = vmul.f32 %v2914, %v1154
      %v3996 = vmul.f32 %v2915, %v1155
      %v3997 = vmul.f32 %v2916, %v1156
      %v3998 = vmul.f32 %v2917, %v1157
      %v3999 = vmul.f32 %v2918, %v1158
      %v4000 = vmul.f32 %v2919, %v1159
      %v4001 = vmul.f32 %v2920, %v1160
      %v4002 = vmul.f32 %v2921, %v1161
      %v4003 = vmul.f32 %v2922, %v1162
      %v4004 = vmul.f32 %v2923, %v1163
      %v4005 = vmul.f32 %v2924, %v1164
      %v4006 = vmul.f32 %v2925, %v1165
      %v4007 = vmul.f32 %v2926, %v1166
      %v4008 = vmul.f32 %v2927, %v1167
      %v4009 = vmul.f32 %v2928, %v1168
      %v4010 = vmul.f32 %v2929, %v1169
      %v4011 = vmul.f32 %v2930, %v1170
      %v4012 = vmul.f32 %v2931, %v1171
      %v4013 = vmul.f32 %v2932, %v1172
      %v4014 = vmul.f32 %v2933, %v1173
      %v4015 = vmul.f32 %v2934, %v1174
      %v4016 = vmul.f32 %v2935, %v1175
      %v4017 = vmul.f32 %v2936, %v1176
      %v4018 = vmul.f32 %v2937, %v1177
      %v4019 = vmul.f32 %v2938, %v1178
      %v4020 = vmul.f32 %v2939, %v1179
      %v4021 = vmul.f32 %v2940, %v1180
      %v4022 = vmul.f32 %v2941, %v1181
      %v4023 = vadd.f32 %v2004, %v3991
      %v4024 = vadd.f32 %v2005, %v3992
      %v4025 = vadd.f32 %v2006, %v3993
      %v4026 = vadd.f32 %v2007, %v3994
      %v4027 = vadd.f32 %v2008, %v3995
      %v4028 = vadd.f32 %v2009, %v3996
      %v4029 = vadd.f32 %v2010, %v3997
      %v4030 = vadd.f32 %v2011, %v3998
      %v4031 = vadd.f32 %v2012, %v3999
      %v4032 = vadd.f32 %v2013, %v4000
      %v4033 = vadd.f32 %v2014, %v4001
      %v4034 = vadd.f32 %v2015, %v4002
      %v4035 = vadd.f32 %v2016, %v4003
      %v4036 = vadd.f32 %v2017, %v4004
      %v4037 = vadd.f32 %v2018, %v4005
      %v4038 = vadd.f32 %v2019, %v4006
      %v4039 = vadd.f32 %v2020, %v4007
      %v4040 = vadd.f32 %v2021, %v4008
      %v4041 = vadd.f32 %v2022, %v4009
      %v4042 = vadd.f32 %v2023, %v4010
      %v4043 = vadd.f32 %v2024, %v4011
      %v4044 = vadd.f32 %v2025, %v4012
      %v4045 = vadd.f32 %v2026, %v4013
      %v4046 = vadd.f32 %v2027, %v4014
      %v4047 = vadd.f32 %v2028, %v4015
      %v4048 = vadd.f32 %v2029, %v4016
      %v4049 = vadd.f32 %v2030, %v4017
      %v4050 = vadd.f32 %v2031, %v4018
      %v4051 = vadd.f32 %v2032, %v4019
      %v4052 = vadd.f32 %v2033, %v4020
      %v4053 = vadd.f32 %v2034, %v4021
      %v4054 = vadd.f32 %v2035, %v4022
      %v4055 = vmul.f32 %v3959, %v1246
      %v4056 = vmul.f32 %v3960, %v1247
      %v4057 = vmul.f32 %v3961, %v1248
      %v4058 = vmul.f32 %v3962, %v1249
      %v4059 = vmul.f32 %v3963, %v1250
      %v4060 = vmul.f32 %v3964, %v1251
      %v4061 = vmul.f32 %v3965, %v1252
      %v4062 = vmul.f32 %v3966, %v1253
      %v4063 = vmul.f32 %v3967, %v1254
      %v4064 = vmul.f32 %v3968, %v1255
      %v4065 = vmul.f32 %v3969, %v1256
      %v4066 = vmul.f32 %v3970, %v1257
      %v4067 = vmul.f32 %v3971, %v1258
      %v4068 = vmul.f32 %v3972, %v1259
      %v4069 = vmul.f32 %v3973, %v1260
      %v4070 = vmul.f32 %v3974, %v1261
      %v4071 = vmul.f32 %v3975, %v1262
      %v4072 = vmul.f32 %v3976, %v1263
      %v4073 = vmul.f32 %v3977, %v1264
      %v4074 = vmul.f32 %v3978, %v1265
      %v4075 = vmul.f32 %v3979, %v1266
      %v4076 = vmul.f32 %v3980, %v1267
      %v4077 = vmul.f32 %v3981, %v1268
      %v4078 = vmul.f32 %v3982, %v1269
      %v4079 = vmul.f32 %v3983, %v1270
      %v4080 = vmul.f32 %v3984, %v1271
      %v4081 = vmul.f32 %v3985, %v1272
      %v4082 = vmul.f32 %v3986, %v1273
      %v4083 = vmul.f32 %v3987, %v1274
      %v4084 = vmul.f32 %v3988, %v1275
      %v4085 = vmul.f32 %v3989, %v1276
      %v4086 = vmul.f32 %v3990, %v1277
      %v4087 = vadd.f32 %v4023, %v4055
      %v4088 = vadd.f32 %v4024, %v4056
      %v4089 = vadd.f32 %v4025, %v4057
      %v4090 = vadd.f32 %v4026, %v4058
      %v4091 = vadd.f32 %v4027, %v4059
      %v4092 = vadd.f32 %v4028, %v4060
      %v4093 = vadd.f32 %v4029, %v4061
      %v4094 = vadd.f32 %v4030, %v4062
      %v4095 = vadd.f32 %v4031, %v4063
      %v4096 = vadd.f32 %v4032, %v4064
      %v4097 = vadd.f32 %v4033, %v4065
      %v4098 = vadd.f32 %v4034, %v4066
      %v4099 = vadd.f32 %v4035, %v4067
      %v4100 = vadd.f32 %v4036, %v4068
      %v4101 = vadd.f32 %v4037, %v4069
      %v4102 = vadd.f32 %v4038, %v4070
      %v4103 = vadd.f32 %v4039, %v4071
      %v4104 = vadd.f32 %v4040, %v4072
      %v4105 = vadd.f32 %v4041, %v4073
      %v4106 = vadd.f32 %v4042, %v4074
      %v4107 = vadd.f32 %v4043, %v4075
      %v4108 = vadd.f32 %v4044, %v4076
      %v4109 = vadd.f32 %v4045, %v4077
      %v4110 = vadd.f32 %v4046, %v4078
      %v4111 = vadd.f32 %v4047, %v4079
      %v4112 = vadd.f32 %v4048, %v4080
      %v4113 = vadd.f32 %v4049, %v4081
      %v4114 = vadd.f32 %v4050, %v4082
      %v4115 = vadd.f32 %v4051, %v4083
      %v4116 = vadd.f32 %v4052, %v4084
      %v4117 = vadd.f32 %v4053, %v4085
      %v4118 = vadd.f32 %v4054, %v4086
      %v4119 = vld [vmem:[%s5] sm:$0x1]
      %v4121 = vperm.slane %v4119, 0
      %v4123 = vadd.f32 %v4087, %v4121
      %v4124 = vadd.f32 %v4088, %v4121
      %v4125 = vadd.f32 %v4089, %v4121
      %v4126 = vadd.f32 %v4090, %v4121
      %v4127 = vadd.f32 %v4091, %v4121
      %v4128 = vadd.f32 %v4092, %v4121
      %v4129 = vadd.f32 %v4093, %v4121
      %v4130 = vadd.f32 %v4094, %v4121
      %v4131 = vadd.f32 %v4095, %v4121
      %v4132 = vadd.f32 %v4096, %v4121
      %v4133 = vadd.f32 %v4097, %v4121
      %v4134 = vadd.f32 %v4098, %v4121
      %v4135 = vadd.f32 %v4099, %v4121
      %v4136 = vadd.f32 %v4100, %v4121
      %v4137 = vadd.f32 %v4101, %v4121
      %v4138 = vadd.f32 %v4102, %v4121
      %v4139 = vadd.f32 %v4103, %v4121
      %v4140 = vadd.f32 %v4104, %v4121
      %v4141 = vadd.f32 %v4105, %v4121
      %v4142 = vadd.f32 %v4106, %v4121
      %v4143 = vadd.f32 %v4107, %v4121
      %v4144 = vadd.f32 %v4108, %v4121
      %v4145 = vadd.f32 %v4109, %v4121
      %v4146 = vadd.f32 %v4110, %v4121
      %v4147 = vadd.f32 %v4111, %v4121
      %v4148 = vadd.f32 %v4112, %v4121
      %v4149 = vadd.f32 %v4113, %v4121
      %v4150 = vadd.f32 %v4114, %v4121
      %v4151 = vadd.f32 %v4115, %v4121
      %v4152 = vadd.f32 %v4116, %v4121
      %v4153 = vadd.f32 %v4117, %v4121
      %v4154 = vadd.f32 %v4118, %v4121
      %v4155 = vmax.f32 %v4123, 0.0
      %v4156 = vmax.f32 %v4124, 0.0
      %v4157 = vmax.f32 %v4125, 0.0
      %v4158 = vmax.f32 %v4126, 0.0
      %v4159 = vmax.f32 %v4127, 0.0
      %v4160 = vmax.f32 %v4128, 0.0
      %v4161 = vmax.f32 %v4129, 0.0
      %v4162 = vmax.f32 %v4130, 0.0
      %v4163 = vmax.f32 %v4131, 0.0
      %v4164 = vmax.f32 %v4132, 0.0
      %v4165 = vmax.f32 %v4133, 0.0
      %v4166 = vmax.f32 %v4134, 0.0
      %v4167 = vmax.f32 %v4135, 0.0
      %v4168 = vmax.f32 %v4136, 0.0
      %v4169 = vmax.f32 %v4137, 0.0
      %v4170 = vmax.f32 %v4138, 0.0
      %v4171 = vmax.f32 %v4139, 0.0
      %v4172 = vmax.f32 %v4140, 0.0
      %v4173 = vmax.f32 %v4141, 0.0
      %v4174 = vmax.f32 %v4142, 0.0
      %v4175 = vmax.f32 %v4143, 0.0
      %v4176 = vmax.f32 %v4144, 0.0
      %v4177 = vmax.f32 %v4145, 0.0
      %v4178 = vmax.f32 %v4146, 0.0
      %v4179 = vmax.f32 %v4147, 0.0
      %v4180 = vmax.f32 %v4148, 0.0
      %v4181 = vmax.f32 %v4149, 0.0
      %v4182 = vmax.f32 %v4150, 0.0
      %v4183 = vmax.f32 %v4151, 0.0
      %v4184 = vmax.f32 %v4152, 0.0
      %v4185 = vmax.f32 %v4153, 0.0
      %v4186 = vmax.f32 %v4154, 0.0
      %v4187 = vpack.c.bf16 %v4156, %v4155
      %v4188 = vpack.c.bf16 %v4158, %v4157
      %v4189 = vpack.c.bf16 %v4160, %v4159
      %v4190 = vpack.c.bf16 %v4162, %v4161
      %v4191 = vpack.c.bf16 %v4164, %v4163
      %v4192 = vpack.c.bf16 %v4166, %v4165
      %v4193 = vpack.c.bf16 %v4168, %v4167
      %v4194 = vpack.c.bf16 %v4170, %v4169
      %v4195 = vpack.c.bf16 %v4172, %v4171
      %v4196 = vpack.c.bf16 %v4174, %v4173
      %v4197 = vpack.c.bf16 %v4176, %v4175
      %v4198 = vpack.c.bf16 %v4178, %v4177
      %v4199 = vpack.c.bf16 %v4180, %v4179
      %v4200 = vpack.c.bf16 %v4182, %v4181
      %v4201 = vpack.c.bf16 %v4184, %v4183
      %v4202 = vpack.c.bf16 %v4186, %v4185
      %v4203 = vld [vmem:[%s3] sm:$0xf]
      %v4204 = vld [vmem:[%s3 + $0x4] sm:$0xf]
      %v4205 = vld [vmem:[%s3 + $0x8] sm:$0xf]
      %v4206 = vld [vmem:[%s3 + $0xc] sm:$0xf]
      %v4207 = vld [vmem:[%s3 + $0x10] sm:$0xf]
      %v4208 = vld [vmem:[%s3 + $0x14] sm:$0xf]
      %v4209 = vld [vmem:[%s3 + $0x18] sm:$0xf]
      %v4210 = vld [vmem:[%s3 + $0x1c] sm:$0xf]
      %v4211 = vld [vmem:[%s3 + $0x20] sm:$0xf]
      %v4212 = vld [vmem:[%s3 + $0x24] sm:$0xf]
      %v4213 = vld [vmem:[%s3 + $0x28] sm:$0xf]
      %v4214 = vld [vmem:[%s3 + $0x2c] sm:$0xf]
      %v4215 = vld [vmem:[%s3 + $0x30] sm:$0xf]
      %v4216 = vld [vmem:[%s3 + $0x34] sm:$0xf]
      %v4217 = vld [vmem:[%s3 + $0x38] sm:$0xf]
      %v4218 = vld [vmem:[%s3 + $0x3c] sm:$0xf]
      %v4219 = vld [vmem:[%s6] sm:$0x1]
      %v4221 = vperm.slane %v4219, 0
      %v4239 = vunpack.c.l.b16 %v4203
      %v4240 = vunpack.c.l.b16 %v4204
      %v4241 = vunpack.c.l.b16 %v4205
      %v4242 = vunpack.c.l.b16 %v4206
      %v4243 = vunpack.c.l.b16 %v4207
      %v4244 = vunpack.c.l.b16 %v4208
      %v4245 = vunpack.c.l.b16 %v4209
      %v4246 = vunpack.c.l.b16 %v4210
      %v4247 = vunpack.c.l.b16 %v4211
      %v4248 = vunpack.c.l.b16 %v4212
      %v4249 = vunpack.c.l.b16 %v4213
      %v4250 = vunpack.c.l.b16 %v4214
      %v4251 = vunpack.c.l.b16 %v4215
      %v4252 = vunpack.c.l.b16 %v4216
      %v4253 = vunpack.c.l.b16 %v4217
      %v4254 = vunpack.c.l.b16 %v4218
      %v4255 = vpack.c.b16 %v4240, %v4239
      %v4256 = vpack.c.b16 %v4242, %v4241
      %v4257 = vpack.c.b16 %v4244, %v4243
      %v4258 = vpack.c.b16 %v4246, %v4245
      %v4259 = vpack.c.b16 %v4248, %v4247
      %v4260 = vpack.c.b16 %v4250, %v4249
      %v4261 = vpack.c.b16 %v4252, %v4251
      %v4262 = vpack.c.b16 %v4254, %v4253
      %4271 = vmatpush.bf16.msra.mxu0 %v4262
      %4272 = vmatpush.bf16.msra.mxu0 %v4261
      %4273 = vmatpush.bf16.msra.mxu0 %v4260
      %4274 = vmatpush.bf16.msra.mxu0 %v4259
      %4275 = vmatpush.bf16.msra.mxu0 %v4258
      %4276 = vmatpush.bf16.msra.mxu0 %v4257
      %4277 = vmatpush.bf16.msra.mxu0 %v4256
      %4278 = vmatpush.bf16.msra.mxu0 %v4255
      %4279 = vmatmul.bf16.gmra.mxu0 %v4187
      %v4280 = vpop.f32.mrf.mxu0
      %v4281 = vadd.f32 %v4221, %v4280
      %v4282 = vpop.f32.mrf.mxu0
      %v4283 = vadd.f32 %v4221, %v4282
      %4284 = vmatmul.bf16.gmra.mxu0 %v4188
      %v4285 = vpop.f32.mrf.mxu0
      %v4286 = vadd.f32 %v4221, %v4285
      %v4287 = vpop.f32.mrf.mxu0
      %v4288 = vadd.f32 %v4221, %v4287
      %4289 = vmatmul.bf16.gmra.mxu0 %v4189
      %v4290 = vpop.f32.mrf.mxu0
      %v4291 = vadd.f32 %v4221, %v4290
      %v4292 = vpop.f32.mrf.mxu0
      %v4293 = vadd.f32 %v4221, %v4292
      %4294 = vmatmul.bf16.gmra.mxu0 %v4190
      %v4295 = vpop.f32.mrf.mxu0
      %v4296 = vadd.f32 %v4221, %v4295
      %v4297 = vpop.f32.mrf.mxu0
      %v4298 = vadd.f32 %v4221, %v4297
      %4299 = vmatmul.bf16.gmra.mxu0 %v4191
      %v4300 = vpop.f32.mrf.mxu0
      %v4301 = vadd.f32 %v4221, %v4300
      %v4302 = vpop.f32.mrf.mxu0
      %v4303 = vadd.f32 %v4221, %v4302
      %4304 = vmatmul.bf16.gmra.mxu0 %v4192
      %v4305 = vpop.f32.mrf.mxu0
      %v4306 = vadd.f32 %v4221, %v4305
      %v4307 = vpop.f32.mrf.mxu0
      %v4308 = vadd.f32 %v4221, %v4307
      %4309 = vmatmul.bf16.gmra.mxu0 %v4193
      %v4310 = vpop.f32.mrf.mxu0
      %v4311 = vadd.f32 %v4221, %v4310
      %v4312 = vpop.f32.mrf.mxu0
      %v4313 = vadd.f32 %v4221, %v4312
      %4314 = vmatmul.bf16.gmra.mxu0 %v4194
      %v4315 = vpop.f32.mrf.mxu0
      %v4316 = vadd.f32 %v4221, %v4315
      %v4317 = vpop.f32.mrf.mxu0
      %v4318 = vadd.f32 %v4221, %v4317
      %4319 = vmatmul.bf16.gmra.mxu0 %v4195
      %v4320 = vpop.f32.mrf.mxu0
      %v4321 = vadd.f32 %v4221, %v4320
      %v4322 = vpop.f32.mrf.mxu0
      %v4323 = vadd.f32 %v4221, %v4322
      %4324 = vmatmul.bf16.gmra.mxu0 %v4196
      %v4325 = vpop.f32.mrf.mxu0
      %v4326 = vadd.f32 %v4221, %v4325
      %v4327 = vpop.f32.mrf.mxu0
      %v4328 = vadd.f32 %v4221, %v4327
      %4329 = vmatmul.bf16.gmra.mxu0 %v4197
      %v4330 = vpop.f32.mrf.mxu0
      %v4331 = vadd.f32 %v4221, %v4330
      %v4332 = vpop.f32.mrf.mxu0
      %v4333 = vadd.f32 %v4221, %v4332
      %4334 = vmatmul.bf16.gmra.mxu0 %v4198
      %v4335 = vpop.f32.mrf.mxu0
      %v4336 = vadd.f32 %v4221, %v4335
      %v4337 = vpop.f32.mrf.mxu0
      %v4338 = vadd.f32 %v4221, %v4337
      %4339 = vmatmul.bf16.gmra.mxu0 %v4199
      %v4340 = vpop.f32.mrf.mxu0
      %v4341 = vadd.f32 %v4221, %v4340
      %v4342 = vpop.f32.mrf.mxu0
      %v4343 = vadd.f32 %v4221, %v4342
      %4344 = vmatmul.bf16.gmra.mxu0 %v4200
      %v4345 = vpop.f32.mrf.mxu0
      %v4346 = vadd.f32 %v4221, %v4345
      %v4347 = vpop.f32.mrf.mxu0
      %v4348 = vadd.f32 %v4221, %v4347
      %4349 = vmatmul.bf16.gmra.mxu0 %v4201
      %v4350 = vpop.f32.mrf.mxu0
      %v4351 = vadd.f32 %v4221, %v4350
      %v4352 = vpop.f32.mrf.mxu0
      %v4353 = vadd.f32 %v4221, %v4352
      %4354 = vmatmul.bf16.gmra.mxu0 %v4202
      %v4355 = vpop.f32.mrf.mxu0
      %v4356 = vadd.f32 %v4221, %v4355
      %v4357 = vpop.f32.mrf.mxu0
      %v4358 = vadd.f32 %v4221, %v4357
      %4359 = vdwg.mxu0
      %v4360 = vunpack.c.l.bf16 %v288
      %v4361 = vunpack.c.l.bf16 %v289
      %v4362 = vunpack.c.l.bf16 %v290
      %v4363 = vunpack.c.l.bf16 %v291
      %v4364 = vunpack.c.l.bf16 %v292
      %v4365 = vunpack.c.l.bf16 %v293
      %v4366 = vunpack.c.l.bf16 %v294
      %v4367 = vunpack.c.l.bf16 %v295
      %v4368 = vunpack.c.l.bf16 %v296
      %v4369 = vunpack.c.l.bf16 %v297
      %v4370 = vunpack.c.l.bf16 %v298
      %v4371 = vunpack.c.l.bf16 %v299
      %v4372 = vunpack.c.l.bf16 %v300
      %v4373 = vunpack.c.l.bf16 %v301
      %v4374 = vunpack.c.l.bf16 %v302
      %v4375 = vunpack.c.l.bf16 %v303
      %v4376 = vunpack.c.l.bf16 %v304
      %v4377 = vunpack.c.l.bf16 %v305
      %v4378 = vunpack.c.l.bf16 %v306
      %v4379 = vunpack.c.l.bf16 %v307
      %v4380 = vunpack.c.l.bf16 %v308
      %v4381 = vunpack.c.l.bf16 %v309
      %v4382 = vunpack.c.l.bf16 %v310
      %v4383 = vunpack.c.l.bf16 %v311
      %v4384 = vunpack.c.l.bf16 %v312
      %v4385 = vunpack.c.l.bf16 %v313
      %v4386 = vunpack.c.l.bf16 %v314
      %v4387 = vunpack.c.l.bf16 %v315
      %v4388 = vunpack.c.l.bf16 %v316
      %v4389 = vunpack.c.l.bf16 %v317
      %v4390 = vunpack.c.l.bf16 %v318
      %v4391 = vunpack.c.l.bf16 %v319
      %v4392 = vadd.f32 %v4281, %v4360
      %v4393 = vadd.f32 %v4283, %v4361
      %v4394 = vadd.f32 %v4286, %v4362
      %v4395 = vadd.f32 %v4288, %v4363
      %v4396 = vadd.f32 %v4291, %v4364
      %v4397 = vadd.f32 %v4293, %v4365
      %v4398 = vadd.f32 %v4296, %v4366
      %v4399 = vadd.f32 %v4298, %v4367
      %v4400 = vadd.f32 %v4301, %v4368
      %v4401 = vadd.f32 %v4303, %v4369
      %v4402 = vadd.f32 %v4306, %v4370
      %v4403 = vadd.f32 %v4308, %v4371
      %v4404 = vadd.f32 %v4311, %v4372
      %v4405 = vadd.f32 %v4313, %v4373
      %v4406 = vadd.f32 %v4316, %v4374
      %v4407 = vadd.f32 %v4318, %v4375
      %v4408 = vadd.f32 %v4321, %v4376
      %v4409 = vadd.f32 %v4323, %v4377
      %v4410 = vadd.f32 %v4326, %v4378
      %v4411 = vadd.f32 %v4328, %v4379
      %v4412 = vadd.f32 %v4331, %v4380
      %v4413 = vadd.f32 %v4333, %v4381
      %v4414 = vadd.f32 %v4336, %v4382
      %v4415 = vadd.f32 %v4338, %v4383
      %v4416 = vadd.f32 %v4341, %v4384
      %v4417 = vadd.f32 %v4343, %v4385
      %v4418 = vadd.f32 %v4346, %v4386
      %v4419 = vadd.f32 %v4348, %v4387
      %v4420 = vadd.f32 %v4351, %v4388
      %v4421 = vadd.f32 %v4353, %v4389
      %v4422 = vadd.f32 %v4356, %v4390
      %v4423 = vadd.f32 %v4358, %v4391
      %v4424 = vmax.f32 %v4392, 0.0
      %v4425 = vmax.f32 %v4393, 0.0
      %v4426 = vmax.f32 %v4394, 0.0
      %v4427 = vmax.f32 %v4395, 0.0
      %v4428 = vmax.f32 %v4396, 0.0
      %v4429 = vmax.f32 %v4397, 0.0
      %v4430 = vmax.f32 %v4398, 0.0
      %v4431 = vmax.f32 %v4399, 0.0
      %v4432 = vmax.f32 %v4400, 0.0
      %v4433 = vmax.f32 %v4401, 0.0
      %v4434 = vmax.f32 %v4402, 0.0
      %v4435 = vmax.f32 %v4403, 0.0
      %v4436 = vmax.f32 %v4404, 0.0
      %v4437 = vmax.f32 %v4405, 0.0
      %v4438 = vmax.f32 %v4406, 0.0
      %v4439 = vmax.f32 %v4407, 0.0
      %v4440 = vmax.f32 %v4408, 0.0
      %v4441 = vmax.f32 %v4409, 0.0
      %v4442 = vmax.f32 %v4410, 0.0
      %v4443 = vmax.f32 %v4411, 0.0
      %v4444 = vmax.f32 %v4412, 0.0
      %v4445 = vmax.f32 %v4413, 0.0
      %v4446 = vmax.f32 %v4414, 0.0
      %v4447 = vmax.f32 %v4415, 0.0
      %v4448 = vmax.f32 %v4416, 0.0
      %v4449 = vmax.f32 %v4417, 0.0
      %v4450 = vmax.f32 %v4418, 0.0
      %v4451 = vmax.f32 %v4419, 0.0
      %v4452 = vmax.f32 %v4420, 0.0
      %v4453 = vmax.f32 %v4421, 0.0
      %v4454 = vmax.f32 %v4422, 0.0
      %v4455 = vmax.f32 %v4423, 0.0
      %v4456 = vpack.c.bf16 %v4424, %v4424
      %v4457 = vpack.c.bf16 %v4425, %v4425
      %v4458 = vpack.c.bf16 %v4426, %v4426
      %v4459 = vpack.c.bf16 %v4427, %v4427
      %v4460 = vpack.c.bf16 %v4428, %v4428
      %v4461 = vpack.c.bf16 %v4429, %v4429
      %v4462 = vpack.c.bf16 %v4430, %v4430
      %v4463 = vpack.c.bf16 %v4431, %v4431
      %v4464 = vpack.c.bf16 %v4432, %v4432
      %v4465 = vpack.c.bf16 %v4433, %v4433
      %v4466 = vpack.c.bf16 %v4434, %v4434
      %v4467 = vpack.c.bf16 %v4435, %v4435
      %v4468 = vpack.c.bf16 %v4436, %v4436
      %v4469 = vpack.c.bf16 %v4437, %v4437
      %v4470 = vpack.c.bf16 %v4438, %v4438
      %v4471 = vpack.c.bf16 %v4439, %v4439
      %v4472 = vpack.c.bf16 %v4440, %v4440
      %v4473 = vpack.c.bf16 %v4441, %v4441
      %v4474 = vpack.c.bf16 %v4442, %v4442
      %v4475 = vpack.c.bf16 %v4443, %v4443
      %v4476 = vpack.c.bf16 %v4444, %v4444
      %v4477 = vpack.c.bf16 %v4445, %v4445
      %v4478 = vpack.c.bf16 %v4446, %v4446
      %v4479 = vpack.c.bf16 %v4447, %v4447
      %v4480 = vpack.c.bf16 %v4448, %v4448
      %v4481 = vpack.c.bf16 %v4449, %v4449
      %v4482 = vpack.c.bf16 %v4450, %v4450
      %v4483 = vpack.c.bf16 %v4451, %v4451
      %v4484 = vpack.c.bf16 %v4452, %v4452
      %v4485 = vpack.c.bf16 %v4453, %v4453
      %v4486 = vpack.c.bf16 %v4454, %v4454
      %v4487 = vpack.c.bf16 %v4455, %v4455
      %4488 = vst [vmem:[%s278] sm:$0xf] %v4456
      %4489 = vst [vmem:[%s278 + $0x4] sm:$0xf] %v4457
      %4490 = vst [vmem:[%s278 + $0x8] sm:$0xf] %v4458
      %4491 = vst [vmem:[%s278 + $0xc] sm:$0xf] %v4459
      %4492 = vst [vmem:[%s278 + $0x10] sm:$0xf] %v4460
      %4493 = vst [vmem:[%s278 + $0x14] sm:$0xf] %v4461
      %4494 = vst [vmem:[%s278 + $0x18] sm:$0xf] %v4462
      %4495 = vst [vmem:[%s278 + $0x1c] sm:$0xf] %v4463
      %4496 = vst [vmem:[%s278 + $0x20] sm:$0xf] %v4464
      %4497 = vst [vmem:[%s278 + $0x24] sm:$0xf] %v4465
      %4498 = vst [vmem:[%s278 + $0x28] sm:$0xf] %v4466
      %4499 = vst [vmem:[%s278 + $0x2c] sm:$0xf] %v4467
      %4500 = vst [vmem:[%s278 + $0x30] sm:$0xf] %v4468
      %4501 = vst [vmem:[%s278 + $0x34] sm:$0xf] %v4469
      %4502 = vst [vmem:[%s278 + $0x38] sm:$0xf] %v4470
      %4503 = vst [vmem:[%s278 + $0x3c] sm:$0xf] %v4471
      %4504 = vst [vmem:[%s278 + $0x40] sm:$0xf] %v4472
      %4505 = vst [vmem:[%s278 + $0x44] sm:$0xf] %v4473
      %4506 = vst [vmem:[%s278 + $0x48] sm:$0xf] %v4474
      %4507 = vst [vmem:[%s278 + $0x4c] sm:$0xf] %v4475
      %4508 = vst [vmem:[%s278 + $0x50] sm:$0xf] %v4476
      %4509 = vst [vmem:[%s278 + $0x54] sm:$0xf] %v4477
      %4510 = vst [vmem:[%s278 + $0x58] sm:$0xf] %v4478
      %4511 = vst [vmem:[%s278 + $0x5c] sm:$0xf] %v4479
      %4512 = vst [vmem:[%s278 + $0x60] sm:$0xf] %v4480
      %4513 = vst [vmem:[%s278 + $0x64] sm:$0xf] %v4481
      %4514 = vst [vmem:[%s278 + $0x68] sm:$0xf] %v4482
      %4515 = vst [vmem:[%s278 + $0x6c] sm:$0xf] %v4483
      %4516 = vst [vmem:[%s278 + $0x70] sm:$0xf] %v4484
      %4517 = vst [vmem:[%s278 + $0x74] sm:$0xf] %v4485
      %4518 = vst [vmem:[%s278 + $0x78] sm:$0xf] %v4486
      %4519 = vst [vmem:[%s278 + $0x7c] sm:$0xf] %v4487
      %p4520 = scmp.lt.s32.totalorder %s18, 1
      %s4521 = scalar_select %p4520, %s18, 1
      %s4522 = smul.addr %s4521, 32
      %s4523 = smul.addr %s4522, 4
      %s4524 = scalar_lea.vmem %s7, %s4523
      // Predicated region
      $region49: #{bottleneck_forward.1} parent=47 // pred_check
        %p4525 = pneg %p188
      $region50: #{bottleneck_forward.1} parent=47 // pred_check_branch
        %4527 = sbr.rel (%p4525) target = $region52
      $region51: #{bottleneck_forward.1} parent=47 // pred_region
        _
      $region52: #{bottleneck_forward.1} parent=47 // pred_fallthru
        _
    $region48: #{bottleneck_forward.1} parent=5 // pred_fallthru
      _
    %p4528 = scmp.le.s32.totalorder 2, %s13
    // Predicated region
    $region53: #{bottleneck_forward.1} parent=5 // pred_check
      %p4529 = pneg %p4528
    $region54: #{bottleneck_forward.1} parent=5 // pred_check_branch
      %4531 = sbr.rel (%p4529) target = $region56
    $region55: #{bottleneck_forward.1} parent=5 // pred_region
      %s4532 = ssub.s32 %s13, 2
      // Predicated region
      $region57: #{bottleneck_forward.1} parent=55 // pred_check
        %p4533 = pneg %p194
      $region58: #{bottleneck_forward.1} parent=55 // pred_check_branch
        %4535 = sbr.rel (%p4533) target = $region60
      $region59: #{bottleneck_forward.1} parent=55 // pred_region
        %p4536 = scmp.lt.s32.totalorder %s19, 1
        %s4537 = scalar_select %p4536, %s19, 1
        %s4538 = smul.addr %s4537, 32
        %s4539 = smul.addr %s4538, 4
        %s4540 = scalar_lea.vmem %s7, %s4539
      $region60: #{bottleneck_forward.1} parent=55 // pred_fallthru
        _
    $region56: #{bottleneck_forward.1} parent=5 // pred_fallthru
      _
  $region6: #{bottleneck_forward.1} parent=0 // loop_footer
    %s17 = sadd.s32 1, %s13
  $region7: #{bottleneck_forward.1} parent=0 // loop_footer_branch
    %12 = sbr.rel target = $region3
  $region8: #{bottleneck_forward.1} parent=0 // loop_exit
    _

</llo_original>
